<compile_context>
chip_gen: v7x
topology: tpu7x:2x2x1
jax: 0.10.0
libtpu: 0.0.40
codegen_flags: <defaults>
</compile_context>

<pallas_src>
import numpy as np
import jax
import jax.numpy as jnp
from jax import lax
from jax.experimental import pallas as pl
from jax.experimental.pallas import tpu as pltpu


# --------------------- kernel: FiLM ResBlock chain ---------------------------
def film_resblock_kernel(feat_ref, cb_ref, w1x_ref, w2g_ref, bn_s_ref,
                         bn_b_ref, film_ref, out_ref, shift_ref):
    i = pl.program_id(1)                                 # res-block index
    bN, H, W, C = out_ref.shape
    M = bN * H * W
    HW = H * W

    @pl.when(i == 0)
    def _():
        # Residual stream lives in the resident output block; seed it with the
        # backbone features.  Zero the H-halo rows of the shift scratch here
        # too: interior writes never touch them, so once per batch block.
        out_ref[...] = feat_ref[...]
        zrow = jnp.zeros((bN, 1, W, 3 * C), jnp.bfloat16)
        shift_ref[:, 0:1, :, :] = zrow
        shift_ref[:, H + 1:H + 2, :, :] = zrow

    x = out_ref[...]                                     # (bN, H, W, C) f32

    # conv1: 1x1 conv over concat([x, coords]) + b1  ==  x @ w1x + coord_bias.
    y = jnp.dot(x.reshape(M, C).astype(jnp.bfloat16), w1x_ref[i],
                preferred_element_type=jnp.float32)      # (M, C) f32 acc
    y = y.reshape(bN, HW, C) + cb_ref[i]                 # coords @ w1c + b1
    identity = jnp.maximum(y, 0.0).reshape(bN, H, W, C)  # f32, kept for skip

    # Stage the three W-shifted copies of identity (bf16, channel-concatenated)
    # in an H-halo-padded scratch: channel block 0 = x[.., w-1], 1 = x[.., w],
    # 2 = x[.., w+1].  Every conv2 tap group below is then a plain window read.
    id_bf = identity.astype(jnp.bfloat16)                # single f32->bf16 cast
    zcol = jnp.zeros((bN, H, 1, C), jnp.bfloat16)
    xl = jnp.concatenate([zcol, id_bf[:, :, :W - 1, :]], axis=2)   # source w-1
    xr = jnp.concatenate([id_bf[:, :, 1:, :], zcol], axis=2)       # source w+1
    shift_ref[:, 1:H + 1, :, :] = jnp.concatenate([xl, id_bf, xr], axis=3)

    # conv2: 3x3 / stride 1 / pad 1 as 3 MXU matmuls with K = 3*C (grouped
    # over the W taps; the H taps come from halo-padded window reads).
    acc = None
    for oy in range(3):                                  # source row h + oy - 1
        lhs = shift_ref[:, oy:oy + H, :, :].reshape(M, 3 * C)
        part = jnp.dot(lhs, w2g_ref[i * 3 + oy],
                       preferred_element_type=jnp.float32)
        acc = part if acc is None else acc + part

    # BatchNorm2d (eval mode; conv2 bias pre-folded into bn_b in the wrapper).
    z = acc * bn_s_ref[i] + bn_b_ref[i]                  # (M, C) * (1, C)

    # FiLM: ResBlock calls film(x, beta, gamma) but FiLMBlock's signature is
    # (x, gamma, beta)  =>  z = film_vector[:, i, 0] * z + film_vector[:, i, 1].
    z = z.reshape(bN, HW, C)
    z = film_ref[:, 0:1, :] * z + film_ref[:, 1:2, :]

    out_ref[...] = jnp.maximum(z, 0.0).reshape(bN, H, W, C) + identity


def film_resblock_stack(feat, coord_bias, w1x_bf, w2g_bf, bn_s, bn_b, film_vec,
                        *, batch_block=4):
    BT, H, W, C = feat.shape
    n_res = w1x_bf.shape[0]
    HW = H * W
    bn = batch_block
    assert BT % bn == 0, "batch*time must be divisible by batch_block"
    # Keep BT // bn >= 2 where possible so the "parallel" batch axis can be
    # split across both v7x TensorCores; on v5e/v6e (single TC) bn can grow
    # as far as VMEM allows.
    return pl.pallas_call(
        film_resblock_kernel,
        out_shape=jax.ShapeDtypeStruct((BT, H, W, C), jnp.float32),
        grid_spec=pltpu.PrefetchScalarGridSpec(
            num_scalar_prefetch=0,
            grid=(BT // bn, n_res),
            in_specs=[
                # streamed per batch block
                pl.BlockSpec((bn, H, W, C), lambda n, i: (n, 0, 0, 0)),       # feat
                # VMEM-resident parameter stacks (constant index map -> 1 DMA)
                pl.BlockSpec((n_res, HW, C), lambda n, i: (0, 0, 0)),         # coord bias (+b1)
                pl.BlockSpec((n_res, C, C), lambda n, i: (0, 0, 0)),          # w1 (x part, bf16)
                pl.BlockSpec((3 * n_res, 3 * C, C), lambda n, i: (0, 0, 0)),  # w2 grouped (bf16)
                pl.BlockSpec((n_res, 1, C), lambda n, i: (0, 0, 0)),          # bn scale
                pl.BlockSpec((n_res, 1, C), lambda n, i: (0, 0, 0)),          # bn bias (+b2)
                # per-(batch block, res block) FiLM vector
                pl.BlockSpec((bn, None, 2, C), lambda n, i: (n, i, 0, 0)),    # film vec
            ],
            out_specs=pl.BlockSpec((bn, H, W, C), lambda n, i: (n, 0, 0, 0)),
            scratch_shapes=[pltpu.VMEM((bn, H + 2, W, 3 * C), jnp.bfloat16)],
        ),
        compiler_params=pltpu.CompilerParams(
            dimension_semantics=("parallel", "arbitrary"),
            vmem_limit_bytes=48 * 1024 * 1024),
    )(feat, coord_bias, w1x_bf, w2g_bf, bn_s, bn_b, film_vec)


# ------------------------------ pure-JAX reference ----------------------------
def reference_forward(feat, coords, params, film_vec):
    C = feat.shape[-1]
    n_res = params["w1x"].shape[0]
    x = feat
    coords_b = jnp.broadcast_to(coords, (feat.shape[0],) + coords.shape)
    for i in range(n_res):
        xin = jnp.concatenate([x, coords_b], axis=-1)
        w1 = jnp.concatenate([params["w1x"][i], params["w1c"][i]], axis=0)
        y = jnp.einsum("bhwi,io->bhwo", xin, w1,
                       precision=lax.Precision.HIGHEST) + params["b1"][i, 0]
        identity = jnp.maximum(y, 0.0)
        k = params["w2"][i].reshape(3, 3, C, C)
        z = lax.conv_general_dilated(
            identity, k, (1, 1), "SAME",
            dimension_numbers=("NHWC", "HWIO", "NHWC"),
            precision=lax.Precision.HIGHEST)
        z = z + params["b2"][i, 0]
        z = z * params["bn_s"][i, 0] + params["bn_b"][i, 0]
        f0 = film_vec[:, i, 0, :][:, None, None, :]
        f1 = film_vec[:, i, 1, :][:, None, None, :]
        z = f0 * z + f1
        x = jnp.maximum(z, 0.0) + identity
    return x


if __name__ == "__main__":
    key = jax.random.PRNGKey(0)
    B, T = 2, 4
    C_IN, H_IMG, W_IMG = 3, 32, 32
    PATCH = 4
    N_RES = 4          # n_res_blocks (module default is 18; small for the demo)
    C = 128            # n_channels
    D_EMB = 128        # task_embedding_dim
    H, W = H_IMG // PATCH, W_IMG // PATCH
    BT = B * T
    BN = 4             # batch elements per grid step: M = BN*H*W = 256,
                       # and BT // BN = 2 batch blocks (keeps both v7x TCs busy)

    ks = jax.random.split(key, 16)
    agent_obs = jax.random.normal(ks[0], (B, T, C_IN, H_IMG, W_IMG), jnp.float32)
    task_emb = jax.random.normal(ks[1], (B, D_EMB), jnp.float32)

    # film_generator: Linear(task_embedding_dim, 2 * n_res_blocks * n_channels)
    w_gen = jax.random.normal(ks[2], (D_EMB, 2 * N_RES * C), jnp.float32) * 0.02
    b_gen = jax.random.normal(ks[3], (1, 2 * N_RES * C), jnp.float32) * 0.02

    # TODO(synk): ResNetFeats/resnet18 backbone from get_backbone() is not defined
    # in the provided snippet; substitute a deterministic patchify+projection
    # feature extractor producing (B*T, n_channels, h, w)-shaped features (NHWC here).
    w_proj = jax.random.normal(ks[4], (C_IN * PATCH * PATCH, C), jnp.float32) * 0.1

    # ResBlock parameters, stacked over res blocks.
    w1_full = jax.random.normal(ks[5], (N_RES, C + 2, C), jnp.float32) * 0.05
    w1x, w1c = w1_full[:, :C, :], w1_full[:, C:, :]
    b1 = jax.random.normal(ks[6], (N_RES, 1, C), jnp.float32) * 0.05
    w2 = jax.random.normal(ks[7], (N_RES, 9, C, C), jnp.float32) * 0.02
    b2 = jax.random.normal(ks[8], (N_RES, 1, C), jnp.float32) * 0.05
    bn_w = 1.0 + jax.random.normal(ks[9], (N_RES, 1, C), jnp.float32) * 0.1
    bn_bias = jax.random.normal(ks[10], (N_RES, 1, C), jnp.float32) * 0.1
    bn_mean = jax.random.normal(ks[11], (N_RES, 1, C), jnp.float32) * 0.1
    bn_var = jnp.abs(jax.random.normal(ks[12], (N_RES, 1, C), jnp.float32)) * 0.5 + 0.5
    eps = 1e-5
    bn_s = bn_w / jnp.sqrt(bn_var + eps)          # folded eval-mode BatchNorm
    bn_b = bn_bias - bn_mean * bn_s

    # coord_map: channel 0 = x (varies along W), channel 1 = y (varies along H).
    xs = jnp.linspace(-1.0, 1.0, W)
    ys = jnp.linspace(-1.0, 1.0, H)
    coords = jnp.stack([jnp.broadcast_to(xs[None, :], (H, W)),
                        jnp.broadcast_to(ys[:, None], (H, W))], axis=-1)  # (H, W, 2)

    # ---- kernel-side parameter folding ----
    # conv1 coord channels + bias -> per-resblock additive bias (f32, exact).
    coord_bias = jnp.einsum("pk,nkc->npc", coords.reshape(H * W, 2), w1c,
                            precision=lax.Precision.HIGHEST) + b1   # (N_RES, HW, C)
    # conv2 bias folded into the BatchNorm affine:  (conv + b2)*s + b = conv*s + (b2*s + b)
    bn_b_eff = b2 * bn_s + bn_b
    # bf16 weights for the MXU path (f32 accumulation in-kernel).
    w1x_bf = w1x.astype(jnp.bfloat16)
    # conv2 weights grouped by the H tap:  (N_RES, 9, C, C) -> (N_RES*3, 3*C, C)
    # row ordering within a group is [ox=-1 | ox=0 | ox=+1] x C input channels,
    # matching the channel-concatenated W-shift staging in the kernel.
    w2g_bf = w2.reshape(N_RES * 3, 3 * C, C).astype(jnp.bfloat16)

    # ---- forward ----
    # rearrange 'B T C H W -> (B T) C H W', then feature-extractor stand-in (NHWC).
    obs = agent_obs.reshape(BT, C_IN, H_IMG, W_IMG)
    patches = obs.reshape(BT, C_IN, H, PATCH, W, PATCH)
    patches = patches.transpose(0, 2, 4, 1, 3, 5).reshape(BT, H, W, C_IN * PATCH * PATCH)
    feat = jnp.tanh(patches @ w_proj)                                   # (BT, H, W, C)

    # film_generator: tiny (B, D) x (D, 2*n_res*C) GEMM -- left to XLA per the
    # perf review (pallas_call launch overhead exceeded the work).
    film_flat = jnp.dot(task_emb, w_gen, precision=lax.Precision.HIGHEST) + b_gen
    film_vec = jnp.repeat(film_flat.reshape(B, N_RES, 2, C), T, axis=0)  # (BT, N_RES, 2, C)

    out_nhwc = film_resblock_stack(feat, coord_bias, w1x_bf, w2g_bf,
                                   bn_s, bn_b_eff, film_vec, batch_block=BN)
    cond_feature = jnp.transpose(out_nhwc, (0, 3, 1, 2))                # NCHW like PyTorch
    jax.block_until_ready(cond_feature)

    # ---- verify against a pure-JAX f32 reference ----
    params = {"w1x": w1x, "w1c": w1c, "b1": b1, "w2": w2, "b2": b2,
              "bn_s": bn_s, "bn_b": bn_b}
    ref_nhwc = reference_forward(feat, coords, params, film_vec)
    # Tolerance absorbs the bf16 MXU operands in the Pallas path (the residual
    # skip connection itself stays f32 in-kernel).
    np.testing.assert_allclose(np.asarray(out_nhwc), np.asarray(ref_nhwc),
                               rtol=2e-2, atol=2e-2)

    print("KERNEL_OK")
</pallas_src>

<mosaic_0001>
module attributes {stable_mosaic.version = 11 : i64} {
  func.func @film_resblock_kernel(%arg0: i32, %arg1: i32, %arg2: memref<4x8x8x128xf32, #tpu.memory_space<vmem>>, %arg3: memref<4x64x128xf32, #tpu.memory_space<vmem>>, %arg4: memref<4x128x128xbf16, #tpu.memory_space<vmem>>, %arg5: memref<12x384x128xbf16, #tpu.memory_space<vmem>>, %arg6: memref<4x1x128xf32, #tpu.memory_space<vmem>>, %arg7: memref<4x1x128xf32, #tpu.memory_space<vmem>>, %arg8: memref<4x1x2x128xf32, #tpu.memory_space<vmem>>, %arg9: memref<4x8x8x128xf32, #tpu.memory_space<vmem>>, %arg10: memref<4x10x8x384xbf16, #tpu.memory_space<vmem>>) attributes {dimension_semantics = [#tpu.dimension_semantics<parallel>, #tpu.dimension_semantics<arbitrary>], iteration_bounds = array<i64: 2, 4>, scalar_prefetch = 0 : i64, scratch_operands = 1 : i64, tpu.core_type = #tpu.core_type<tc>, window_params = [{transform_indices = @transform_0, window_bounds = array<i64: 4, 8, 8, 128>}, {pipeline_mode = #tpu.pipeline_mode<synchronous>, transform_indices = @transform_1, window_bounds = array<i64: 4, 64, 128>}, {pipeline_mode = #tpu.pipeline_mode<synchronous>, transform_indices = @transform_2, window_bounds = array<i64: 4, 128, 128>}, {pipeline_mode = #tpu.pipeline_mode<synchronous>, transform_indices = @transform_3, window_bounds = array<i64: 12, 384, 128>}, {pipeline_mode = #tpu.pipeline_mode<synchronous>, transform_indices = @transform_4, window_bounds = array<i64: 4, 1, 128>}, {pipeline_mode = #tpu.pipeline_mode<synchronous>, transform_indices = @transform_5, window_bounds = array<i64: 4, 1, 128>}, {transform_indices = @transform_6, window_bounds = array<i64: 4, 1, 2, 128>}, {transform_indices = @transform_7, window_bounds = array<i64: 4, 8, 8, 128>}]} {
    %c0_i32 = arith.constant 0 : i32
    %0 = arith.cmpi eq, %arg1, %c0_i32 : i32
    %1 = arith.extui %0 : i1 to i32
    %c0_i32_0 = arith.constant 0 : i32
    %2 = arith.cmpi ne, %1, %c0_i32_0 : i32
    scf.if %2 {
      %c0_53 = arith.constant 0 : index
      %c0_54 = arith.constant 0 : index
      %c0_55 = arith.constant 0 : index
      %c0_56 = arith.constant 0 : index
      %78 = vector.load %arg2[%c0_53, %c0_54, %c0_55, %c0_56] : memref<4x8x8x128xf32, #tpu.memory_space<vmem>>, vector<4x8x8x128xf32>
      %c0_57 = arith.constant 0 : index
      %c0_58 = arith.constant 0 : index
      %c0_59 = arith.constant 0 : index
      %c0_60 = arith.constant 0 : index
      %79 = vector.load %arg9[%c0_57, %c0_58, %c0_59, %c0_60] : memref<4x8x8x128xf32, #tpu.memory_space<vmem>>, vector<4x8x8x128xf32>
      tpu.vector_store %arg9[%c0_57, %c0_58, %c0_59, %c0_60], %78 {strides = array<i32>} : memref<4x8x8x128xf32, #tpu.memory_space<vmem>>, vector<4x8x8x128xf32>,
      %cst_61 = arith.constant 0.000000e+00 : bf16
      %80 = vector.broadcast %cst_61 : bf16 to vector<4x1x8x384xbf16>
      %c0_62 = arith.constant 0 : index
      %c0_63 = arith.constant 0 : index
      %c0_64 = arith.constant 0 : index
      %c0_65 = arith.constant 0 : index
      %81 = vector.load %arg10[%c0_62, %c0_63, %c0_64, %c0_65] : memref<4x10x8x384xbf16, #tpu.memory_space<vmem>>, vector<4x1x8x384xbf16>
      tpu.vector_store %arg10[%c0_62, %c0_63, %c0_64, %c0_65], %80 {strides = array<i32>} : memref<4x10x8x384xbf16, #tpu.memory_space<vmem>>, vector<4x1x8x384xbf16>,
      %c0_66 = arith.constant 0 : index
      %c9 = arith.constant 9 : index
      %c0_67 = arith.constant 0 : index
      %c0_68 = arith.constant 0 : index
      %82 = vector.load %arg10[%c0_66, %c9, %c0_67, %c0_68] : memref<4x10x8x384xbf16, #tpu.memory_space<vmem>>, vector<4x1x8x384xbf16>
      tpu.vector_store %arg10[%c0_66, %c9, %c0_67, %c0_68], %80 {strides = array<i32>} : memref<4x10x8x384xbf16, #tpu.memory_space<vmem>>, vector<4x1x8x384xbf16>,
    } else {
    }
    %c0 = arith.constant 0 : index
    %c0_1 = arith.constant 0 : index
    %c0_2 = arith.constant 0 : index
    %c0_3 = arith.constant 0 : index
    %3 = vector.load %arg9[%c0, %c0_1, %c0_2, %c0_3] : memref<4x8x8x128xf32, #tpu.memory_space<vmem>>, vector<4x8x8x128xf32>
    %4 = vector.shape_cast %3 : vector<4x8x8x128xf32> to vector<256x128xf32>
    %5 = arith.truncf %4 : vector<256x128xf32> to vector<256x128xbf16>
    %6 = arith.index_cast %arg1 : i32 to index
    %c0_4 = arith.constant 0 : index
    %c0_5 = arith.constant 0 : index
    %7 = vector.load %arg4[%6, %c0_4, %c0_5] : memref<4x128x128xbf16, #tpu.memory_space<vmem>>, vector<1x128x128xbf16>
    %8 = vector.shape_cast %7 : vector<1x128x128xbf16> to vector<128x128xbf16>
    %cst = arith.constant dense<0.000000e+00> : vector<256x128xf32>
    %9 = tpu.matmul %5, %8, %cst {dimension_numbers = #tpu.dot_dimension_numbers<[1], [0], [0], [1], [0, 0, 1, 1], [], []>} : vector<256x128xbf16>, vector<128x128xbf16>, vector<256x128xf32> -> vector<256x128xf32>
    %10 = vector.shape_cast %9 : vector<256x128xf32> to vector<4x64x128xf32>
    %11 = arith.index_cast %arg1 : i32 to index
    %c0_6 = arith.constant 0 : index
    %c0_7 = arith.constant 0 : index
    %12 = vector.load %arg3[%11, %c0_6, %c0_7] : memref<4x64x128xf32, #tpu.memory_space<vmem>>, vector<1x64x128xf32>
    %13 = vector.shape_cast %12 : vector<1x64x128xf32> to vector<64x128xf32>
    %14 = vector.shape_cast %13 : vector<64x128xf32> to vector<1x64x128xf32>
    %15 = vector.broadcast %14 : vector<1x64x128xf32> to vector<4x64x128xf32>
    %16 = arith.addf %10, %15 : vector<4x64x128xf32>
    %cst_8 = arith.constant 0.000000e+00 : f32
    %17 = vector.broadcast %cst_8 : f32 to vector<4x64x128xf32>
    %18 = arith.maximumf %16, %17 : vector<4x64x128xf32>
    %19 = vector.shape_cast %18 : vector<4x64x128xf32> to vector<4x8x8x128xf32>
    %20 = arith.truncf %19 : vector<4x8x8x128xf32> to vector<4x8x8x128xbf16>
    %cst_9 = arith.constant 0.000000e+00 : bf16
    %21 = vector.broadcast %cst_9 : bf16 to vector<4x8x1x128xbf16>
    %22 = vector.extract_strided_slice %20 {offsets = [0, 0, 0, 0], sizes = [4, 8, 7, 128], strides = [1, 1, 1, 1]} : vector<4x8x8x128xbf16> to vector<4x8x7x128xbf16>
    %23 = tpu.concatenate %21, %22 in 2 : vector<4x8x1x128xbf16>, vector<4x8x7x128xbf16> -> vector<4x8x8x128xbf16>
    %24 = vector.extract_strided_slice %20 {offsets = [0, 0, 1, 0], sizes = [4, 8, 7, 128], strides = [1, 1, 1, 1]} : vector<4x8x8x128xbf16> to vector<4x8x7x128xbf16>
    %25 = tpu.concatenate %24, %21 in 2 : vector<4x8x7x128xbf16>, vector<4x8x1x128xbf16> -> vector<4x8x8x128xbf16>
    %26 = tpu.concatenate %23, %20, %25 in 3 : vector<4x8x8x128xbf16>, vector<4x8x8x128xbf16>, vector<4x8x8x128xbf16> -> vector<4x8x8x384xbf16>
    %c0_10 = arith.constant 0 : index
    %c1 = arith.constant 1 : index
    %c0_11 = arith.constant 0 : index
    %c0_12 = arith.constant 0 : index
    %27 = vector.load %arg10[%c0_10, %c1, %c0_11, %c0_12] : memref<4x10x8x384xbf16, #tpu.memory_space<vmem>>, vector<4x8x8x384xbf16>
    tpu.vector_store %arg10[%c0_10, %c1, %c0_11, %c0_12], %26 {strides = array<i32>} : memref<4x10x8x384xbf16, #tpu.memory_space<vmem>>, vector<4x8x8x384xbf16>,
    %c0_13 = arith.constant 0 : index
    %c0_14 = arith.constant 0 : index
    %c0_15 = arith.constant 0 : index
    %c0_16 = arith.constant 0 : index
    %28 = vector.load %arg10[%c0_13, %c0_14, %c0_15, %c0_16] : memref<4x10x8x384xbf16, #tpu.memory_space<vmem>>, vector<4x8x8x384xbf16>
    %29 = vector.shape_cast %28 : vector<4x8x8x384xbf16> to vector<256x384xbf16>
    %c3_i32 = arith.constant 3 : i32
    %30 = arith.muli %arg1, %c3_i32 : i32
    %c0_i32_17 = arith.constant 0 : i32
    %31 = arith.addi %30, %c0_i32_17 : i32
    %32 = arith.index_cast %31 : i32 to index
    %c0_18 = arith.constant 0 : index
    %c0_19 = arith.constant 0 : index
    %33 = vector.load %arg5[%32, %c0_18, %c0_19] : memref<12x384x128xbf16, #tpu.memory_space<vmem>>, vector<1x384x128xbf16>
    %34 = vector.shape_cast %33 : vector<1x384x128xbf16> to vector<384x128xbf16>
    %cst_20 = arith.constant dense<0.000000e+00> : vector<256x128xf32>
    %35 = tpu.matmul %29, %34, %cst_20 {dimension_numbers = #tpu.dot_dimension_numbers<[1], [0], [0], [1], [0, 0, 1, 1], [], []>} : vector<256x384xbf16>, vector<384x128xbf16>, vector<256x128xf32> -> vector<256x128xf32>
    %c0_21 = arith.constant 0 : index
    %c1_22 = arith.constant 1 : index
    %c0_23 = arith.constant 0 : index
    %c0_24 = arith.constant 0 : index
    %36 = vector.load %arg10[%c0_21, %c1_22, %c0_23, %c0_24] : memref<4x10x8x384xbf16, #tpu.memory_space<vmem>>, vector<4x8x8x384xbf16>
    %37 = vector.shape_cast %36 : vector<4x8x8x384xbf16> to vector<256x384xbf16>
    %c3_i32_25 = arith.constant 3 : i32
    %38 = arith.muli %arg1, %c3_i32_25 : i32
    %c1_i32 = arith.constant 1 : i32
    %39 = arith.addi %38, %c1_i32 : i32
    %40 = arith.index_cast %39 : i32 to index
    %c0_26 = arith.constant 0 : index
    %c0_27 = arith.constant 0 : index
    %41 = vector.load %arg5[%40, %c0_26, %c0_27] : memref<12x384x128xbf16, #tpu.memory_space<vmem>>, vector<1x384x128xbf16>
    %42 = vector.shape_cast %41 : vector<1x384x128xbf16> to vector<384x128xbf16>
    %cst_28 = arith.constant dense<0.000000e+00> : vector<256x128xf32>
    %43 = tpu.matmul %37, %42, %cst_28 {dimension_numbers = #tpu.dot_dimension_numbers<[1], [0], [0], [1], [0, 0, 1, 1], [], []>} : vector<256x384xbf16>, vector<384x128xbf16>, vector<256x128xf32> -> vector<256x128xf32>
    %44 = arith.addf %35, %43 : vector<256x128xf32>
    %c0_29 = arith.constant 0 : index
    %c2 = arith.constant 2 : index
    %c0_30 = arith.constant 0 : index
    %c0_31 = arith.constant 0 : index
    %45 = vector.load %arg10[%c0_29, %c2, %c0_30, %c0_31] : memref<4x10x8x384xbf16, #tpu.memory_space<vmem>>, vector<4x8x8x384xbf16>
    %46 = vector.shape_cast %45 : vector<4x8x8x384xbf16> to vector<256x384xbf16>
    %c3_i32_32 = arith.constant 3 : i32
    %47 = arith.muli %arg1, %c3_i32_32 : i32
    %c2_i32 = arith.constant 2 : i32
    %48 = arith.addi %47, %c2_i32 : i32
    %49 = arith.index_cast %48 : i32 to index
    %c0_33 = arith.constant 0 : index
    %c0_34 = arith.constant 0 : index
    %50 = vector.load %arg5[%49, %c0_33, %c0_34] : memref<12x384x128xbf16, #tpu.memory_space<vmem>>, vector<1x384x128xbf16>
    %51 = vector.shape_cast %50 : vector<1x384x128xbf16> to vector<384x128xbf16>
    %cst_35 = arith.constant dense<0.000000e+00> : vector<256x128xf32>
    %52 = tpu.matmul %46, %51, %cst_35 {dimension_numbers = #tpu.dot_dimension_numbers<[1], [0], [0], [1], [0, 0, 1, 1], [], []>} : vector<256x384xbf16>, vector<384x128xbf16>, vector<256x128xf32> -> vector<256x128xf32>
    %53 = arith.addf %44, %52 : vector<256x128xf32>
    %54 = arith.index_cast %arg1 : i32 to index
    %c0_36 = arith.constant 0 : index
    %c0_37 = arith.constant 0 : index
    %55 = vector.load %arg6[%54, %c0_36, %c0_37] : memref<4x1x128xf32, #tpu.memory_space<vmem>>, vector<1x1x128xf32>
    %56 = vector.shape_cast %55 : vector<1x1x128xf32> to vector<1x128xf32>
    %57 = vector.broadcast %56 : vector<1x128xf32> to vector<256x128xf32>
    %58 = arith.mulf %53, %57 : vector<256x128xf32>
    %59 = arith.index_cast %arg1 : i32 to index
    %c0_38 = arith.constant 0 : index
    %c0_39 = arith.constant 0 : index
    %60 = vector.load %arg7[%59, %c0_38, %c0_39] : memref<4x1x128xf32, #tpu.memory_space<vmem>>, vector<1x1x128xf32>
    %61 = vector.shape_cast %60 : vector<1x1x128xf32> to vector<1x128xf32>
    %62 = vector.broadcast %61 : vector<1x128xf32> to vector<256x128xf32>
    %63 = arith.addf %58, %62 : vector<256x128xf32>
    %64 = vector.shape_cast %63 : vector<256x128xf32> to vector<4x64x128xf32>
    %c0_40 = arith.constant 0 : index
    %c0_41 = arith.constant 0 : index
    %c0_42 = arith.constant 0 : index
    %c0_43 = arith.constant 0 : index
    %65 = vector.load %arg8[%c0_40, %c0_41, %c0_42, %c0_43] : memref<4x1x2x128xf32, #tpu.memory_space<vmem>>, vector<4x1x1x128xf32>
    %66 = vector.shape_cast %65 : vector<4x1x1x128xf32> to vector<4x1x128xf32>
    %67 = vector.broadcast %66 : vector<4x1x128xf32> to vector<4x64x128xf32>
    %68 = arith.mulf %67, %64 : vector<4x64x128xf32>
    %c0_44 = arith.constant 0 : index
    %c0_45 = arith.constant 0 : index
    %c1_46 = arith.constant 1 : index
    %c0_47 = arith.constant 0 : index
    %69 = vector.load %arg8[%c0_44, %c0_45, %c1_46, %c0_47] : memref<4x1x2x128xf32, #tpu.memory_space<vmem>>, vector<4x1x1x128xf32>
    %70 = vector.shape_cast %69 : vector<4x1x1x128xf32> to vector<4x1x128xf32>
    %71 = vector.broadcast %70 : vector<4x1x128xf32> to vector<4x64x128xf32>
    %72 = arith.addf %68, %71 : vector<4x64x128xf32>
    %cst_48 = arith.constant 0.000000e+00 : f32
    %73 = vector.broadcast %cst_48 : f32 to vector<4x64x128xf32>
    %74 = arith.maximumf %72, %73 : vector<4x64x128xf32>
    %75 = vector.shape_cast %74 : vector<4x64x128xf32> to vector<4x8x8x128xf32>
    %76 = arith.addf %75, %19 : vector<4x8x8x128xf32>
    %c0_49 = arith.constant 0 : index
    %c0_50 = arith.constant 0 : index
    %c0_51 = arith.constant 0 : index
    %c0_52 = arith.constant 0 : index
    %77 = vector.load %arg9[%c0_49, %c0_50, %c0_51, %c0_52] : memref<4x8x8x128xf32, #tpu.memory_space<vmem>>, vector<4x8x8x128xf32>
    tpu.vector_store %arg9[%c0_49, %c0_50, %c0_51, %c0_52], %76 {strides = array<i32>} : memref<4x8x8x128xf32, #tpu.memory_space<vmem>>, vector<4x8x8x128xf32>,
    return
  }
  func.func @transform_0(%arg0: i32, %arg1: i32) -> (i32, i32, i32, i32) {
    %c0_i32 = arith.constant 0 : i32
    %c0_i32_0 = arith.constant 0 : i32
    %c0_i32_1 = arith.constant 0 : i32
    %c0_i32_2 = arith.constant 0 : i32
    return %arg0, %c0_i32, %c0_i32_0, %c0_i32_1 : i32, i32, i32, i32
  }
  func.func @transform_1(%arg0: i32, %arg1: i32) -> (i32, i32, i32) {
    %c0_i32 = arith.constant 0 : i32
    %c0_i32_0 = arith.constant 0 : i32
    %c0_i32_1 = arith.constant 0 : i32
    %c0_i32_2 = arith.constant 0 : i32
    return %c0_i32, %c0_i32_0, %c0_i32_1 : i32, i32, i32
  }
  func.func @transform_2(%arg0: i32, %arg1: i32) -> (i32, i32, i32) {
    %c0_i32 = arith.constant 0 : i32
    %c0_i32_0 = arith.constant 0 : i32
    %c0_i32_1 = arith.constant 0 : i32
    %c0_i32_2 = arith.constant 0 : i32
    return %c0_i32, %c0_i32_0, %c0_i32_1 : i32, i32, i32
  }
  func.func @transform_3(%arg0: i32, %arg1: i32) -> (i32, i32, i32) {
    %c0_i32 = arith.constant 0 : i32
    %c0_i32_0 = arith.constant 0 : i32
    %c0_i32_1 = arith.constant 0 : i32
    %c0_i32_2 = arith.constant 0 : i32
    return %c0_i32, %c0_i32_0, %c0_i32_1 : i32, i32, i32
  }
  func.func @transform_4(%arg0: i32, %arg1: i32) -> (i32, i32, i32) {
    %c0_i32 = arith.constant 0 : i32
    %c0_i32_0 = arith.constant 0 : i32
    %c0_i32_1 = arith.constant 0 : i32
    %c0_i32_2 = arith.constant 0 : i32
    return %c0_i32, %c0_i32_0, %c0_i32_1 : i32, i32, i32
  }
  func.func @transform_5(%arg0: i32, %arg1: i32) -> (i32, i32, i32) {
    %c0_i32 = arith.constant 0 : i32
    %c0_i32_0 = arith.constant 0 : i32
    %c0_i32_1 = arith.constant 0 : i32
    %c0_i32_2 = arith.constant 0 : i32
    return %c0_i32, %c0_i32_0, %c0_i32_1 : i32, i32, i32
  }
  func.func @transform_6(%arg0: i32, %arg1: i32) -> (i32, i32, i32, i32) {
    %c0_i32 = arith.constant 0 : i32
    %c0_i32_0 = arith.constant 0 : i32
    %c0_i32_1 = arith.constant 0 : i32
    return %arg0, %arg1, %c0_i32, %c0_i32_0 : i32, i32, i32, i32
  }
  func.func @transform_7(%arg0: i32, %arg1: i32) -> (i32, i32, i32, i32) {
    %c0_i32 = arith.constant 0 : i32
    %c0_i32_0 = arith.constant 0 : i32
    %c0_i32_1 = arith.constant 0 : i32
    %c0_i32_2 = arith.constant 0 : i32
    return %arg0, %c0_i32, %c0_i32_0, %c0_i32_1 : i32, i32, i32, i32
  }
}

</mosaic_0001>

<llo_original>
// kernel: tpu_custom_call.1
$region0: #{tpu_custom_call.1}
  #allocation0 [shape = 'u32[]', space=smem, size = 0x4, offset = 0x4, fixed_abs, tag = 'smem constant byte address 0x4 - core index']
  #allocation1 [shape = 'u32[144,128]{1,0:T(1,128)}', space=vmem, size = 0x12000, scoped, tag = 'internal scratch']
  #allocation2 [shape = 'bf16[4,10,8,384]{3,2,1,0:T(8,128)(2,1)}', space=vmem, size = 0x3c000, scoped, tag = 'scratch operand']
  %s0 = inlined_call_operand.hbm [shape: f32[8,8,8,128], index: 0, kind: input, shape index: {}]
  %s1 = inlined_call_operand.hbm [shape: f32[4,64,128], index: 1, kind: input, shape index: {}]
  %s2 = inlined_call_operand.hbm [shape: bf16[4,128,128], index: 2, kind: input, shape index: {}]
  %s3 = inlined_call_operand.hbm [shape: bf16[12,384,128], index: 3, kind: input, shape index: {}]
  %s4 = inlined_call_operand.hbm [shape: f32[4,1,128], index: 4, kind: input, shape index: {}]
  %s5 = inlined_call_operand.hbm [shape: f32[4,1,128], index: 5, kind: input, shape index: {}]
  %s6 = inlined_call_operand.hbm [shape: f32[8,4,2,128], index: 6, kind: input, shape index: {}]
  %s7 = inlined_call_operand.hbm [shape: f32[8,8,8,128], index: 7, kind: output, shape index: {}]
  %s8 = sld [smem:[#allocation0]]
  $region93: #{tpu_custom_call.1} parent=0
    _
  %s10 = ssub.s32 1, %s8
  %s11 = scalar_select 0, %s10, %s8
  $region1: #{tpu_custom_call.1} parent=0
    #allocation3 [shape = 'u8[262144]{0}', space=vmem, size = 0x40000, scoped, tag = 'input window, operand 0']
    #allocation4 [shape = 's32[2]{0}', space=sflag, size = 0x8, scoped, tag = 'scoped memory for tpu_custom_call.1']
    #allocation5 [shape = 's32[2]{0}', space=sflag, size = 0x8, scoped, tag = 'scoped memory for tpu_custom_call.1']
    #allocation6 [shape = 'u8[131072]{0}', space=vmem, size = 0x20000, scoped, tag = 'input window, operand 1, single buffered']
    #allocation7 [shape = 's32[1]{0}', space=sflag, size = 0x4, scoped, tag = 'scoped memory for tpu_custom_call.1']
    #allocation8 [shape = 'u8[131072]{0}', space=vmem, size = 0x20000, scoped, tag = 'input window, operand 2, single buffered']
    #allocation9 [shape = 'u8[1179648]{0}', space=vmem, size = 0x120000, scoped, tag = 'input window, operand 3, single buffered']
    #allocation10 [shape = 's32[1]{0}', space=sflag, size = 0x4, scoped, tag = 'scoped memory for tpu_custom_call.1']
    #allocation11 [shape = 'u8[2048]{0}', space=vmem, size = 0x800, scoped, tag = 'input window, operand 4, single buffered']
    #allocation12 [shape = 'u8[2048]{0}', space=vmem, size = 0x800, scoped, tag = 'input window, operand 5, single buffered']
    #allocation13 [shape = 's32[1]{0}', space=sflag, size = 0x4, scoped, tag = 'scoped memory for tpu_custom_call.1']
    #allocation14 [shape = 'u8[8192]{0}', space=vmem, size = 0x2000, scoped, tag = 'input window, operand 6']
    #allocation15 [shape = 'u8[262144]{0}', space=vmem, size = 0x40000, scoped, tag = 'output window, operand 0']
    %12 = vsyncpa [#allocation4], 0
    %s13 = scalar_lea.sflag [#allocation4], 1
    %14 = vsyncpa %s13, 0
    %15 = vsyncpa [#allocation7], 0
    %16 = vsyncpa [#allocation10], 0
    %17 = vsyncpa [#allocation13], 0
    %18 = vsyncpa [#allocation5], 0
    %s19 = scalar_lea.sflag [#allocation5], 1
    %20 = vsyncpa %s19, 0
    loop: start=0, step=1, limit=10
    $region2: #{tpu_custom_call.1} parent=1 // loop_pre_header
      _
    $region3: #{tpu_custom_call.1} parent=1 // loop_header
      %s22 = sphi 0, %s26
      %p23 = scmp.ge.s32.totalorder %s22, 10
      %s29 = sphi 0, %s41
      %s30 = sphi 0, %s37
      %s31 = sphi 0, %s29
      %s32 = sphi 0, %s30
      %s33 = sphi 0, %s31
      %s34 = sphi 0, %s32
      %s44 = sphi 0, %s46
      %s47 = sphi 0, %s44
      %s48 = sphi 0, %s47
      %s64 = sphi 0, %s48
      %s68 = sphi 0, %s68
      %s70 = sphi 0, %s68
      %s71 = sphi 0, %s70
      %s85 = sphi 0, %s71
      %s89 = sphi 0, %s89
      %s91 = sphi 0, %s89
      %s92 = sphi 0, %s91
      %s106 = sphi 0, %s92
      %s110 = sphi 0, %s110
      %s112 = sphi 0, %s110
      %s113 = sphi 0, %s112
      %s127 = sphi 0, %s113
      %s131 = sphi 0, %s131
      %s133 = sphi 0, %s131
      %s134 = sphi 0, %s133
      %s148 = sphi 0, %s134
      %s152 = sphi 0, %s152
      %s154 = sphi 0, %s152
      %s155 = sphi 0, %s154
      %s169 = sphi 0, %s155
      %s177 = sphi 0, %s179
      %s180 = sphi 0, %s177
      %s181 = sphi 0, %s180
      %s197 = sphi 0, %s181
      %s203 = sphi 0, %s205
      %s206 = sphi 0, %s203
      %s207 = sphi 0, %s206
      %s223 = sphi 0, %s207
    $region4: #{tpu_custom_call.1} parent=1 // loop_header_branch
      %25 = sbr.rel (%p23) target = $region8
    $region5: #{tpu_custom_call.1} parent=1 // loop_body
      %s27 = ssub.s32 %s22, 1
      %s28 = ssub.s32 %s22, 2
      %s35 = sadd.s32 1, %s30
      %p36 = scmp.ge.s32.totalorder %s35, 4
      %s37 = scalar_select %p36, 0, %s35
      %s38 = sadd.s32 1, %s29
      %s39 = scalar_select %p36, %s38, %s29
      %p40 = scmp.ge.s32.totalorder %s39, 2
      %s41 = scalar_select %p40, 0, %s39
      %s42 = ssub.s32 %s29, %s41
      %p43 = scmp.eq.s32.totalorder %s42, 0
      %s45 = sadd.s32 %s44, 1
      %s46 = scalar_select %p43, %s44, %s45
      %p49 = pneg %p43
      %p50 = scmp.eq.s32.totalorder %s22, 7
      %p51 = por %p49, %p50
      %p52 = scmp.ne.s32.totalorder %s44, %s47
      %p53 = scmp.eq.s32.totalorder %s22, 0
      %p54 = por %p52, %p53
      %p55 = scmp.ne.s32.totalorder %s44, %s47
      %p56 = scmp.eq.s32.totalorder %s27, 7
      %p57 = por %p55, %p56
      %p58 = scmp.ne.s32.totalorder %s47, %s48
      %p59 = scmp.eq.s32.totalorder %s27, 0
      %p60 = por %p58, %p59
      %p61 = scmp.ne.s32.totalorder %s47, %s48
      %p62 = scmp.eq.s32.totalorder %s28, 7
      %p63 = por %p61, %p62
      %p65 = scmp.ne.s32.totalorder %s48, %s64
      %p66 = scmp.eq.s32.totalorder %s28, 0
      %p67 = por %p65, %p66
      %s69 = sadd.s32 %s68, 1
      %p72 = scmp.eq.s32.totalorder %s22, 7
      %p73 = scmp.ne.s32.totalorder %s68, %s70
      %p74 = scmp.eq.s32.totalorder %s22, 0
      %p75 = por %p73, %p74
      %p76 = scmp.ne.s32.totalorder %s68, %s70
      %p77 = scmp.eq.s32.totalorder %s27, 7
      %p78 = por %p76, %p77
      %p79 = scmp.ne.s32.totalorder %s70, %s71
      %p80 = scmp.eq.s32.totalorder %s27, 0
      %p81 = por %p79, %p80
      %p82 = scmp.ne.s32.totalorder %s70, %s71
      %p83 = scmp.eq.s32.totalorder %s28, 7
      %p84 = por %p82, %p83
      %p86 = scmp.ne.s32.totalorder %s71, %s85
      %p87 = scmp.eq.s32.totalorder %s28, 0
      %p88 = por %p86, %p87
      %s90 = sadd.s32 %s89, 1
      %p93 = scmp.eq.s32.totalorder %s22, 7
      %p94 = scmp.ne.s32.totalorder %s89, %s91
      %p95 = scmp.eq.s32.totalorder %s22, 0
      %p96 = por %p94, %p95
      %p97 = scmp.ne.s32.totalorder %s89, %s91
      %p98 = scmp.eq.s32.totalorder %s27, 7
      %p99 = por %p97, %p98
      %p100 = scmp.ne.s32.totalorder %s91, %s92
      %p101 = scmp.eq.s32.totalorder %s27, 0
      %p102 = por %p100, %p101
      %p103 = scmp.ne.s32.totalorder %s91, %s92
      %p104 = scmp.eq.s32.totalorder %s28, 7
      %p105 = por %p103, %p104
      %p107 = scmp.ne.s32.totalorder %s92, %s106
      %p108 = scmp.eq.s32.totalorder %s28, 0
      %p109 = por %p107, %p108
      %s111 = sadd.s32 %s110, 1
      %p114 = scmp.eq.s32.totalorder %s22, 7
      %p115 = scmp.ne.s32.totalorder %s110, %s112
      %p116 = scmp.eq.s32.totalorder %s22, 0
      %p117 = por %p115, %p116
      %p118 = scmp.ne.s32.totalorder %s110, %s112
      %p119 = scmp.eq.s32.totalorder %s27, 7
      %p120 = por %p118, %p119
      %p121 = scmp.ne.s32.totalorder %s112, %s113
      %p122 = scmp.eq.s32.totalorder %s27, 0
      %p123 = por %p121, %p122
      %p124 = scmp.ne.s32.totalorder %s112, %s113
      %p125 = scmp.eq.s32.totalorder %s28, 7
      %p126 = por %p124, %p125
      %p128 = scmp.ne.s32.totalorder %s113, %s127
      %p129 = scmp.eq.s32.totalorder %s28, 0
      %p130 = por %p128, %p129
      %s132 = sadd.s32 %s131, 1
      %p135 = scmp.eq.s32.totalorder %s22, 7
      %p136 = scmp.ne.s32.totalorder %s131, %s133
      %p137 = scmp.eq.s32.totalorder %s22, 0
      %p138 = por %p136, %p137
      %p139 = scmp.ne.s32.totalorder %s131, %s133
      %p140 = scmp.eq.s32.totalorder %s27, 7
      %p141 = por %p139, %p140
      %p142 = scmp.ne.s32.totalorder %s133, %s134
      %p143 = scmp.eq.s32.totalorder %s27, 0
      %p144 = por %p142, %p143
      %p145 = scmp.ne.s32.totalorder %s133, %s134
      %p146 = scmp.eq.s32.totalorder %s28, 7
      %p147 = por %p145, %p146
      %p149 = scmp.ne.s32.totalorder %s134, %s148
      %p150 = scmp.eq.s32.totalorder %s28, 0
      %p151 = por %p149, %p150
      %s153 = sadd.s32 %s152, 1
      %p156 = scmp.eq.s32.totalorder %s22, 7
      %p157 = scmp.ne.s32.totalorder %s152, %s154
      %p158 = scmp.eq.s32.totalorder %s22, 0
      %p159 = por %p157, %p158
      %p160 = scmp.ne.s32.totalorder %s152, %s154
      %p161 = scmp.eq.s32.totalorder %s27, 7
      %p162 = por %p160, %p161
      %p163 = scmp.ne.s32.totalorder %s154, %s155
      %p164 = scmp.eq.s32.totalorder %s27, 0
      %p165 = por %p163, %p164
      %p166 = scmp.ne.s32.totalorder %s154, %s155
      %p167 = scmp.eq.s32.totalorder %s28, 7
      %p168 = por %p166, %p167
      %p170 = scmp.ne.s32.totalorder %s155, %s169
      %p171 = scmp.eq.s32.totalorder %s28, 0
      %p172 = por %p170, %p171
      %s173 = ssub.s32 %s29, %s41
      %s174 = ssub.s32 %s30, %s37
      %s175 = sor.u32 %s173, %s174
      %p176 = scmp.eq.s32.totalorder %s175, 0
      %s178 = sadd.s32 %s177, 1
      %s179 = scalar_select %p176, %s177, %s178
      %p182 = pneg %p176
      %p183 = scmp.eq.s32.totalorder %s22, 7
      %p184 = por %p182, %p183
      %p185 = scmp.ne.s32.totalorder %s177, %s180
      %p186 = scmp.eq.s32.totalorder %s22, 0
      %p187 = por %p185, %p186
      %p188 = scmp.ne.s32.totalorder %s177, %s180
      %p189 = scmp.eq.s32.totalorder %s27, 7
      %p190 = por %p188, %p189
      %p191 = scmp.ne.s32.totalorder %s180, %s181
      %p192 = scmp.eq.s32.totalorder %s27, 0
      %p193 = por %p191, %p192
      %p194 = scmp.ne.s32.totalorder %s180, %s181
      %p195 = scmp.eq.s32.totalorder %s28, 7
      %p196 = por %p194, %p195
      %p198 = scmp.ne.s32.totalorder %s181, %s197
      %p199 = scmp.eq.s32.totalorder %s28, 0
      %p200 = por %p198, %p199
      %s201 = ssub.s32 %s29, %s41
      %p202 = scmp.eq.s32.totalorder %s201, 0
      %s204 = sadd.s32 %s203, 1
      %s205 = scalar_select %p202, %s203, %s204
      %p208 = pneg %p202
      %p209 = scmp.eq.s32.totalorder %s22, 7
      %p210 = por %p208, %p209
      %p211 = scmp.ne.s32.totalorder %s203, %s206
      %p212 = scmp.eq.s32.totalorder %s22, 0
      %p213 = por %p211, %p212
      %p214 = scmp.ne.s32.totalorder %s203, %s206
      %p215 = scmp.eq.s32.totalorder %s27, 7
      %p216 = por %p214, %p215
      %p217 = scmp.ne.s32.totalorder %s206, %s207
      %p218 = scmp.eq.s32.totalorder %s27, 0
      %p219 = por %p217, %p218
      %p220 = scmp.ne.s32.totalorder %s206, %s207
      %p221 = scmp.eq.s32.totalorder %s28, 7
      %p222 = por %p220, %p221
      %p224 = scmp.ne.s32.totalorder %s207, %s223
      %p225 = scmp.eq.s32.totalorder %s28, 0
      %p226 = por %p224, %p225
      %p227 = scmp.le.s32.totalorder 1, %s22
      %p228 = scmp.lt.s32.totalorder %s22, 9
      %p229 = pnand %p227, %p228
      %p230 = pneg %p229
      // Predicated region
      $region9: #{tpu_custom_call.1} parent=5 // pred_check
        _
      $region10: #{tpu_custom_call.1} parent=5 // pred_check_branch
        %232 = sbr.rel (%p229) target = $region12
      $region11: #{tpu_custom_call.1} parent=5 // pred_region
        %s233 = ssub.s32 %s22, 1
        // Predicated region
        $region13: #{tpu_custom_call.1} parent=11 // pred_check
          %p234 = pneg %p81
        $region14: #{tpu_custom_call.1} parent=11 // pred_check_branch
          %236 = sbr.rel (%p234) target = $region16
        $region15: #{tpu_custom_call.1} parent=11 // pred_region
          %s238 = ssub.s32 4096, 4096
          %239 = vsyncadd [#allocation7], %s238
          %s240 = sshll.u32 [#allocation6], 4
          %s241 = int_to_ptr.vmem [resolvable:$true] %s240
          %246 = dma.hbm_to_vmem [thread:$0]  %s1, 4096, %s241, [#allocation7], 128, 128, 8
        $region16: #{tpu_custom_call.1} parent=11 // pred_fallthru
          _
        // Predicated region
        $region17: #{tpu_custom_call.1} parent=11 // pred_check
          %p247 = pneg %p102
        $region18: #{tpu_custom_call.1} parent=11 // pred_check_branch
          %249 = sbr.rel (%p247) target = $region20
        $region19: #{tpu_custom_call.1} parent=11 // pred_region
          %s251 = ssub.s32 4096, 4096
          %252 = vsyncadd [#allocation7], %s251
          %s253 = sshll.u32 [#allocation8], 4
          %s254 = int_to_ptr.vmem [resolvable:$true] %s253
          %259 = dma.hbm_to_vmem [thread:$0]  %s2, 4096, %s254, [#allocation7], 64, 64, 4
        $region20: #{tpu_custom_call.1} parent=11 // pred_fallthru
          _
        // Predicated region
        $region21: #{tpu_custom_call.1} parent=11 // pred_check
          %p260 = pneg %p123
        $region22: #{tpu_custom_call.1} parent=11 // pred_check_branch
          %262 = sbr.rel (%p260) target = $region24
        $region23: #{tpu_custom_call.1} parent=11 // pred_region
          %s264 = ssub.s32 36864, 36864
          %265 = vsyncadd [#allocation10], %s264
          %s266 = sshll.u32 [#allocation9], 4
          %s267 = int_to_ptr.vmem [resolvable:$true] %s266
          %272 = dma.hbm_to_vmem [thread:$0]  %s3, 36864, %s267, [#allocation10], 64, 64, 4
        $region24: #{tpu_custom_call.1} parent=11 // pred_fallthru
          _
        // Predicated region
        $region25: #{tpu_custom_call.1} parent=11 // pred_check
          %p273 = pneg %p144
        $region26: #{tpu_custom_call.1} parent=11 // pred_check_branch
          %275 = sbr.rel (%p273) target = $region28
        $region27: #{tpu_custom_call.1} parent=11 // pred_region
          %s277 = ssub.s32 64, 64
          %278 = vsyncadd [#allocation10], %s277
          %s279 = sshll.u32 [#allocation11], 4
          %s280 = int_to_ptr.vmem [resolvable:$true] %s279
          %285 = dma.hbm_to_vmem [thread:$0]  %s4, 64, %s280, [#allocation10], 16, 16, 1
        $region28: #{tpu_custom_call.1} parent=11 // pred_fallthru
          _
        // Predicated region
        $region29: #{tpu_custom_call.1} parent=11 // pred_check
          %p286 = pneg %p165
        $region30: #{tpu_custom_call.1} parent=11 // pred_check_branch
          %288 = sbr.rel (%p286) target = $region32
        $region31: #{tpu_custom_call.1} parent=11 // pred_region
          %s290 = ssub.s32 64, 64
          %291 = vsyncadd [#allocation13], %s290
          %s292 = sshll.u32 [#allocation12], 4
          %s293 = int_to_ptr.vmem [resolvable:$true] %s292
          %298 = dma.hbm_to_vmem [thread:$0]  %s5, 64, %s293, [#allocation13], 16, 16, 1
        $region32: #{tpu_custom_call.1} parent=11 // pred_fallthru
          _
      $region12: #{tpu_custom_call.1} parent=5 // pred_fallthru
        _
      %p299 = scmp.lt.s32.totalorder %s22, 8
      // Predicated region
      $region33: #{tpu_custom_call.1} parent=5 // pred_check
        %p300 = pneg %p299
      $region34: #{tpu_custom_call.1} parent=5 // pred_check_branch
        %302 = sbr.rel (%p300) target = $region36
      $region35: #{tpu_custom_call.1} parent=5 // pred_region
        // Predicated region
        $region37: #{tpu_custom_call.1} parent=35 // pred_check
          %p303 = pneg %p54
        $region38: #{tpu_custom_call.1} parent=35 // pred_check_branch
          %305 = sbr.rel (%p303) target = $region40
        $region39: #{tpu_custom_call.1} parent=35 // pred_region
          %s306 = sand.u32 %s22, 1
          %s307 = scalar_lea.sflag [#allocation4], %s306
          %s308 = sand.u32 %s44, 1
          %s309 = smul.addr %s308, 256
          %s310 = scalar_lea.vmem [#allocation3], %s309
          %s311 = smul.u32 4, %s29
          %s313 = ssub.s32 4096, 4096
          %314 = vsyncadd %s307, %s313
          %s315 = smul.addr %s311, 8
          %s316 = smul.addr %s315, 128
          %s317 = scalar_lea.hbm %s0, %s316
          %s318 = sshll.u32 %s310, 4
          %s319 = int_to_ptr.vmem [resolvable:$true] %s318
          %324 = dma.hbm_to_vmem [thread:$0]  %s317, 4096, %s319, %s307, 128, 128, 8
        $region40: #{tpu_custom_call.1} parent=35 // pred_fallthru
          _
        // Predicated region
        $region41: #{tpu_custom_call.1} parent=35 // pred_check
          %p325 = pneg %p187
        $region42: #{tpu_custom_call.1} parent=35 // pred_check_branch
          %327 = sbr.rel (%p325) target = $region44
        $region43: #{tpu_custom_call.1} parent=35 // pred_region
          %s328 = sand.u32 %s22, 1
          %s329 = scalar_lea.sflag [#allocation4], %s328
          %s330 = sand.u32 %s177, 1
          %s331 = smul.addr %s330, 8
          %s332 = scalar_lea.vmem [#allocation14], %s331
          %s333 = smul.u32 4, %s29
          %s335 = ssub.s32 128, 128
          %336 = vsyncadd %s329, %s335
          %s337 = smul.addr %s333, 4
          %s338 = sadd.s32 %s30, %s337
          %s339 = smul.addr %s338, 32
          %s340 = scalar_lea.hbm %s6, %s339
          %s341 = sshll.u32 %s332, 4
          %s342 = int_to_ptr.vmem [resolvable:$true] %s341
          %347 = dma.hbm_to_vmem [thread:$0]  %s340, 128, %s342, %s329, 128, 32, 2
        $region44: #{tpu_custom_call.1} parent=35 // pred_fallthru
          _
      $region36: #{tpu_custom_call.1} parent=5 // pred_fallthru
        _
      %p348 = scmp.le.s32.totalorder 1, %s22
      %p349 = scmp.lt.s32.totalorder %s22, 9
      %p350 = pnand %p348, %p349
      %p351 = pneg %p350
      // Predicated region
      $region45: #{tpu_custom_call.1} parent=5 // pred_check
        _
      $region46: #{tpu_custom_call.1} parent=5 // pred_check_branch
        %353 = sbr.rel (%p350) target = $region48
      $region47: #{tpu_custom_call.1} parent=5 // pred_region
        %s354 = ssub.s32 %s22, 1
        %s355 = sand.u32 %s27, 1
        %s356 = scalar_lea.sflag [#allocation4], %s355
        %s357 = sand.u32 %s47, 1
        %s358 = smul.addr %s357, 256
        %s359 = scalar_lea.vmem [#allocation3], %s358
        // Predicated region
        $region49: #{tpu_custom_call.1} parent=47 // pred_check
          %p360 = pneg %p60
        $region50: #{tpu_custom_call.1} parent=47 // pred_check_branch
          %362 = sbr.rel (%p360) target = $region52
        $region51: #{tpu_custom_call.1} parent=47 // pred_region
          %363 = dma.done %s356, 4096
        $region52: #{tpu_custom_call.1} parent=47 // pred_fallthru
          _
        // Predicated region
        $region53: #{tpu_custom_call.1} parent=47 // pred_check
          %p364 = pneg %p81
        $region54: #{tpu_custom_call.1} parent=47 // pred_check_branch
          %366 = sbr.rel (%p364) target = $region56
        $region55: #{tpu_custom_call.1} parent=47 // pred_region
          %367 = dma.done [#allocation7], 4096
        $region56: #{tpu_custom_call.1} parent=47 // pred_fallthru
          _
        // Predicated region
        $region57: #{tpu_custom_call.1} parent=47 // pred_check
          %p368 = pneg %p102
        $region58: #{tpu_custom_call.1} parent=47 // pred_check_branch
          %370 = sbr.rel (%p368) target = $region60
        $region59: #{tpu_custom_call.1} parent=47 // pred_region
          %371 = dma.done [#allocation7], 4096
        $region60: #{tpu_custom_call.1} parent=47 // pred_fallthru
          _
        // Predicated region
        $region61: #{tpu_custom_call.1} parent=47 // pred_check
          %p372 = pneg %p123
        $region62: #{tpu_custom_call.1} parent=47 // pred_check_branch
          %374 = sbr.rel (%p372) target = $region64
        $region63: #{tpu_custom_call.1} parent=47 // pred_region
          %375 = dma.done [#allocation10], 36864
        $region64: #{tpu_custom_call.1} parent=47 // pred_fallthru
          _
        // Predicated region
        $region65: #{tpu_custom_call.1} parent=47 // pred_check
          %p376 = pneg %p144
        $region66: #{tpu_custom_call.1} parent=47 // pred_check_branch
          %378 = sbr.rel (%p376) target = $region68
        $region67: #{tpu_custom_call.1} parent=47 // pred_region
          %379 = dma.done [#allocation10], 64
        $region68: #{tpu_custom_call.1} parent=47 // pred_fallthru
          _
        // Predicated region
        $region69: #{tpu_custom_call.1} parent=47 // pred_check
          %p380 = pneg %p165
        $region70: #{tpu_custom_call.1} parent=47 // pred_check_branch
          %382 = sbr.rel (%p380) target = $region72
        $region71: #{tpu_custom_call.1} parent=47 // pred_region
          %383 = dma.done [#allocation13], 64
        $region72: #{tpu_custom_call.1} parent=47 // pred_fallthru
          _
        %s384 = sand.u32 %s27, 1
        %s385 = scalar_lea.sflag [#allocation4], %s384
        %s386 = sand.u32 %s180, 1
        %s387 = smul.addr %s386, 8
        %s388 = scalar_lea.vmem [#allocation14], %s387
        // Predicated region
        $region73: #{tpu_custom_call.1} parent=47 // pred_check
          %p389 = pneg %p193
        $region74: #{tpu_custom_call.1} parent=47 // pred_check_branch
          %391 = sbr.rel (%p389) target = $region76
        $region75: #{tpu_custom_call.1} parent=47 // pred_region
          %392 = dma.done %s385, 128
        $region76: #{tpu_custom_call.1} parent=47 // pred_fallthru
          _
        %s393 = sand.u32 %s27, 1
        %s394 = scalar_lea.sflag [#allocation4], %s393
        %s395 = sand.u32 %s47, 1
        %s396 = smul.addr %s395, 256
        %s397 = scalar_lea.vmem [#allocation3], %s396
        %p398 = pneg %p60
        %p399 = pneg %p57
        %p400 = pneg %p81
        %p401 = pneg %p78
        %p402 = pneg %p102
        %p403 = pneg %p99
        %p404 = pneg %p123
        %p405 = pneg %p120
        %p406 = pneg %p144
        %p407 = pneg %p141
        %p408 = pneg %p165
        %p409 = pneg %p162
        %s410 = sand.u32 %s27, 1
        %s411 = scalar_lea.sflag [#allocation4], %s410
        %s412 = sand.u32 %s180, 1
        %s413 = smul.addr %s412, 8
        %s414 = scalar_lea.vmem [#allocation14], %s413
        %p415 = pneg %p193
        %p416 = pneg %p190
        %p417 = pneg %p219
        %p418 = pneg %p216
        %s419 = sand.u32 %s206, 1
        %s420 = scalar_lea.sflag [#allocation5], %s419
        %s421 = sand.u32 %s206, 1
        %s422 = smul.addr %s421, 256
        %s423 = scalar_lea.vmem [#allocation15], %s422
        %s424 = smul.u32 4, %s31
        %s425 = smul.u32 4, %s31
        %s426 = smul.u32 4, %s31
        %p428 = scmp.eq.s32.totalorder %s32, 0
        // Predicated region
        $region77: #{tpu_custom_call.1} parent=47 // pred_check
          %p429 = pneg %p428
        $region78: #{tpu_custom_call.1} parent=47 // pred_check_branch
          %431 = sbr.rel (%p429) target = $region80
        $region79: #{tpu_custom_call.1} parent=47 // pred_region
          %v432 = vld [vmem:[%s359] sm:$0xff]
          %v433 = vld [vmem:[%s359 + $0x8] sm:$0xff]
          %v434 = vld [vmem:[%s359 + $0x10] sm:$0xff]
          %v435 = vld [vmem:[%s359 + $0x18] sm:$0xff]
          %v436 = vld [vmem:[%s359 + $0x20] sm:$0xff]
          %v437 = vld [vmem:[%s359 + $0x28] sm:$0xff]
          %v438 = vld [vmem:[%s359 + $0x30] sm:$0xff]
          %v439 = vld [vmem:[%s359 + $0x38] sm:$0xff]
          %v440 = vld [vmem:[%s359 + $0x40] sm:$0xff]
          %v441 = vld [vmem:[%s359 + $0x48] sm:$0xff]
          %v442 = vld [vmem:[%s359 + $0x50] sm:$0xff]
          %v443 = vld [vmem:[%s359 + $0x58] sm:$0xff]
          %v444 = vld [vmem:[%s359 + $0x60] sm:$0xff]
          %v445 = vld [vmem:[%s359 + $0x68] sm:$0xff]
          %v446 = vld [vmem:[%s359 + $0x70] sm:$0xff]
          %v447 = vld [vmem:[%s359 + $0x78] sm:$0xff]
          %v448 = vld [vmem:[%s359 + $0x80] sm:$0xff]
          %v449 = vld [vmem:[%s359 + $0x88] sm:$0xff]
          %v450 = vld [vmem:[%s359 + $0x90] sm:$0xff]
          %v451 = vld [vmem:[%s359 + $0x98] sm:$0xff]
          %v452 = vld [vmem:[%s359 + $0xa0] sm:$0xff]
          %v453 = vld [vmem:[%s359 + $0xa8] sm:$0xff]
          %v454 = vld [vmem:[%s359 + $0xb0] sm:$0xff]
          %v455 = vld [vmem:[%s359 + $0xb8] sm:$0xff]
          %v456 = vld [vmem:[%s359 + $0xc0] sm:$0xff]
          %v457 = vld [vmem:[%s359 + $0xc8] sm:$0xff]
          %v458 = vld [vmem:[%s359 + $0xd0] sm:$0xff]
          %v459 = vld [vmem:[%s359 + $0xd8] sm:$0xff]
          %v460 = vld [vmem:[%s359 + $0xe0] sm:$0xff]
          %v461 = vld [vmem:[%s359 + $0xe8] sm:$0xff]
          %v462 = vld [vmem:[%s359 + $0xf0] sm:$0xff]
          %v463 = vld [vmem:[%s359 + $0xf8] sm:$0xff]
          %464 = vst [vmem:[%s423] sm:$0xff] %v432
          %465 = vst [vmem:[%s423 + $0x8] sm:$0xff] %v433
          %466 = vst [vmem:[%s423 + $0x10] sm:$0xff] %v434
          %467 = vst [vmem:[%s423 + $0x18] sm:$0xff] %v435
          %468 = vst [vmem:[%s423 + $0x20] sm:$0xff] %v436
          %469 = vst [vmem:[%s423 + $0x28] sm:$0xff] %v437
          %470 = vst [vmem:[%s423 + $0x30] sm:$0xff] %v438
          %471 = vst [vmem:[%s423 + $0x38] sm:$0xff] %v439
          %472 = vst [vmem:[%s423 + $0x40] sm:$0xff] %v440
          %473 = vst [vmem:[%s423 + $0x48] sm:$0xff] %v441
          %474 = vst [vmem:[%s423 + $0x50] sm:$0xff] %v442
          %475 = vst [vmem:[%s423 + $0x58] sm:$0xff] %v443
          %476 = vst [vmem:[%s423 + $0x60] sm:$0xff] %v444
          %477 = vst [vmem:[%s423 + $0x68] sm:$0xff] %v445
          %478 = vst [vmem:[%s423 + $0x70] sm:$0xff] %v446
          %479 = vst [vmem:[%s423 + $0x78] sm:$0xff] %v447
          %480 = vst [vmem:[%s423 + $0x80] sm:$0xff] %v448
          %481 = vst [vmem:[%s423 + $0x88] sm:$0xff] %v449
          %482 = vst [vmem:[%s423 + $0x90] sm:$0xff] %v450
          %483 = vst [vmem:[%s423 + $0x98] sm:$0xff] %v451
          %484 = vst [vmem:[%s423 + $0xa0] sm:$0xff] %v452
          %485 = vst [vmem:[%s423 + $0xa8] sm:$0xff] %v453
          %486 = vst [vmem:[%s423 + $0xb0] sm:$0xff] %v454
          %487 = vst [vmem:[%s423 + $0xb8] sm:$0xff] %v455
          %488 = vst [vmem:[%s423 + $0xc0] sm:$0xff] %v456
          %489 = vst [vmem:[%s423 + $0xc8] sm:$0xff] %v457
          %490 = vst [vmem:[%s423 + $0xd0] sm:$0xff] %v458
          %491 = vst [vmem:[%s423 + $0xd8] sm:$0xff] %v459
          %492 = vst [vmem:[%s423 + $0xe0] sm:$0xff] %v460
          %493 = vst [vmem:[%s423 + $0xe8] sm:$0xff] %v461
          %494 = vst [vmem:[%s423 + $0xf0] sm:$0xff] %v462
          %495 = vst [vmem:[%s423 + $0xf8] sm:$0xff] %v463
          %496 = vst [vmem:[#allocation2] sm:$0xff] 0
          %497 = vst [vmem:[#allocation2 + $0x8] sm:$0xf] 0
          %498 = vst [vmem:[#allocation2 + $0x78] sm:$0xff] 0
          %499 = vst [vmem:[#allocation2 + $0x80] sm:$0xf] 0
          %500 = vst [vmem:[#allocation2 + $0xf0] sm:$0xff] 0
          %501 = vst [vmem:[#allocation2 + $0xf8] sm:$0xf] 0
          %502 = vst [vmem:[#allocation2 + $0x168] sm:$0xff] 0
          %503 = vst [vmem:[#allocation2 + $0x170] sm:$0xf] 0
          %s504 = scalar_lea.vmem [#allocation2], 108
          %505 = vst [vmem:[%s504] sm:$0xff] 0
          %506 = vst [vmem:[%s504 + $0x8] sm:$0xf] 0
          %507 = vst [vmem:[%s504 + $0x78] sm:$0xff] 0
          %508 = vst [vmem:[%s504 + $0x80] sm:$0xf] 0
          %509 = vst [vmem:[%s504 + $0xf0] sm:$0xff] 0
          %510 = vst [vmem:[%s504 + $0xf8] sm:$0xf] 0
          %511 = vst [vmem:[%s504 + $0x168] sm:$0xff] 0
          %512 = vst [vmem:[%s504 + $0x170] sm:$0xf] 0
        $region80: #{tpu_custom_call.1} parent=47 // pred_fallthru
          _
        %v513 = vld [vmem:[%s423] sm:$0xff]
        %v514 = vld [vmem:[%s423 + $0x8] sm:$0xff]
        %v515 = vld [vmem:[%s423 + $0x10] sm:$0xff]
        %v516 = vld [vmem:[%s423 + $0x18] sm:$0xff]
        %v517 = vld [vmem:[%s423 + $0x20] sm:$0xff]
        %v518 = vld [vmem:[%s423 + $0x28] sm:$0xff]
        %v519 = vld [vmem:[%s423 + $0x30] sm:$0xff]
        %v520 = vld [vmem:[%s423 + $0x38] sm:$0xff]
        %v521 = vld [vmem:[%s423 + $0x40] sm:$0xff]
        %v522 = vld [vmem:[%s423 + $0x48] sm:$0xff]
        %v523 = vld [vmem:[%s423 + $0x50] sm:$0xff]
        %v524 = vld [vmem:[%s423 + $0x58] sm:$0xff]
        %v525 = vld [vmem:[%s423 + $0x60] sm:$0xff]
        %v526 = vld [vmem:[%s423 + $0x68] sm:$0xff]
        %v527 = vld [vmem:[%s423 + $0x70] sm:$0xff]
        %v528 = vld [vmem:[%s423 + $0x78] sm:$0xff]
        %v529 = vld [vmem:[%s423 + $0x80] sm:$0xff]
        %v530 = vld [vmem:[%s423 + $0x88] sm:$0xff]
        %v531 = vld [vmem:[%s423 + $0x90] sm:$0xff]
        %v532 = vld [vmem:[%s423 + $0x98] sm:$0xff]
        %v533 = vld [vmem:[%s423 + $0xa0] sm:$0xff]
        %v534 = vld [vmem:[%s423 + $0xa8] sm:$0xff]
        %v535 = vld [vmem:[%s423 + $0xb0] sm:$0xff]
        %v536 = vld [vmem:[%s423 + $0xb8] sm:$0xff]
        %v537 = vld [vmem:[%s423 + $0xc0] sm:$0xff]
        %v538 = vld [vmem:[%s423 + $0xc8] sm:$0xff]
        %v539 = vld [vmem:[%s423 + $0xd0] sm:$0xff]
        %v540 = vld [vmem:[%s423 + $0xd8] sm:$0xff]
        %v541 = vld [vmem:[%s423 + $0xe0] sm:$0xff]
        %v542 = vld [vmem:[%s423 + $0xe8] sm:$0xff]
        %v543 = vld [vmem:[%s423 + $0xf0] sm:$0xff]
        %v544 = vld [vmem:[%s423 + $0xf8] sm:$0xff]
        %v545 = vpack.c.bf16 %v514, %v513
        %v546 = vpack.c.bf16 %v516, %v515
        %v547 = vpack.c.bf16 %v518, %v517
        %v548 = vpack.c.bf16 %v520, %v519
        %v549 = vpack.c.bf16 %v522, %v521
        %v550 = vpack.c.bf16 %v524, %v523
        %v551 = vpack.c.bf16 %v526, %v525
        %v552 = vpack.c.bf16 %v528, %v527
        %v553 = vpack.c.bf16 %v530, %v529
        %v554 = vpack.c.bf16 %v532, %v531
        %v555 = vpack.c.bf16 %v534, %v533
        %v556 = vpack.c.bf16 %v536, %v535
        %v557 = vpack.c.bf16 %v538, %v537
        %v558 = vpack.c.bf16 %v540, %v539
        %v559 = vpack.c.bf16 %v542, %v541
        %v560 = vpack.c.bf16 %v544, %v543
        %s561 = smul.u32 %s32, 16
        %s562 = smul.addr %s561, 4
        %s563 = scalar_lea.vmem [#allocation8], %s562
        %v564 = vld [vmem:[%s563] sm:$0xf]
        %v565 = vld [vmem:[%s563 + $0x4] sm:$0xf]
        %v566 = vld [vmem:[%s563 + $0x8] sm:$0xf]
        %v567 = vld [vmem:[%s563 + $0xc] sm:$0xf]
        %v568 = vld [vmem:[%s563 + $0x10] sm:$0xf]
        %v569 = vld [vmem:[%s563 + $0x14] sm:$0xf]
        %v570 = vld [vmem:[%s563 + $0x18] sm:$0xf]
        %v571 = vld [vmem:[%s563 + $0x1c] sm:$0xf]
        %v572 = vld [vmem:[%s563 + $0x20] sm:$0xf]
        %v573 = vld [vmem:[%s563 + $0x24] sm:$0xf]
        %v574 = vld [vmem:[%s563 + $0x28] sm:$0xf]
        %v575 = vld [vmem:[%s563 + $0x2c] sm:$0xf]
        %v576 = vld [vmem:[%s563 + $0x30] sm:$0xf]
        %v577 = vld [vmem:[%s563 + $0x34] sm:$0xf]
        %v578 = vld [vmem:[%s563 + $0x38] sm:$0xf]
        %v579 = vld [vmem:[%s563 + $0x3c] sm:$0xf]
        %v596 = vunpack.c.l.b16 %v564
        %v597 = vunpack.c.l.b16 %v565
        %v598 = vunpack.c.l.b16 %v566
        %v599 = vunpack.c.l.b16 %v567
        %v600 = vunpack.c.l.b16 %v568
        %v601 = vunpack.c.l.b16 %v569
        %v602 = vunpack.c.l.b16 %v570
        %v603 = vunpack.c.l.b16 %v571
        %v604 = vunpack.c.l.b16 %v572
        %v605 = vunpack.c.l.b16 %v573
        %v606 = vunpack.c.l.b16 %v574
        %v607 = vunpack.c.l.b16 %v575
        %v608 = vunpack.c.l.b16 %v576
        %v609 = vunpack.c.l.b16 %v577
        %v610 = vunpack.c.l.b16 %v578
        %v611 = vunpack.c.l.b16 %v579
        %v612 = vpack.c.b16 %v597, %v596
        %v613 = vpack.c.b16 %v599, %v598
        %v614 = vpack.c.b16 %v601, %v600
        %v615 = vpack.c.b16 %v603, %v602
        %v616 = vpack.c.b16 %v605, %v604
        %v617 = vpack.c.b16 %v607, %v606
        %v618 = vpack.c.b16 %v609, %v608
        %v619 = vpack.c.b16 %v611, %v610
        %628 = vmatprep.subr.bf16.mxu0 0
        %629 = vmatpush1.bf16.msra.mxu0 %v612
        %630 = vmatprep.subr.bf16.mxu0 0
        %631 = vmatpush1.bf16.msra.mxu0 %v613
        %632 = vmatprep.subr.bf16.mxu0 0
        %633 = vmatpush1.bf16.msra.mxu0 %v614
        %634 = vmatprep.subr.bf16.mxu0 0
        %635 = vmatpush1.bf16.msra.mxu0 %v615
        %636 = vmatprep.subr.bf16.mxu0 0
        %637 = vmatpush1.bf16.msra.mxu0 %v616
        %638 = vmatprep.subr.bf16.mxu0 0
        %639 = vmatpush1.bf16.msra.mxu0 %v617
        %640 = vmatprep.subr.bf16.mxu0 0
        %641 = vmatpush1.bf16.msra.mxu0 %v618
        %642 = vmatprep.subr.bf16.mxu0 0
        %643 = vmatpush1.bf16.msra.mxu0 %v619
        %644 = vmatprep.subr.bf16.mxu0 0
        %645 = vmatpush1.bf16.msra.mxu0 0
        %646 = vmatprep.subr.bf16.mxu0 0
        %647 = vmatpush1.bf16.msra.mxu0 0
        %648 = vmatprep.subr.bf16.mxu0 0
        %649 = vmatpush1.bf16.msra.mxu0 0
        %650 = vmatprep.subr.bf16.mxu0 0
        %651 = vmatpush1.bf16.msra.mxu0 0
        %652 = vmatprep.subr.bf16.mxu0 0
        %653 = vmatpush1.bf16.msra.mxu0 0
        %654 = vmatprep.subr.bf16.mxu0 0
        %655 = vmatpush1.bf16.msra.mxu0 0
        %656 = vmatprep.subr.bf16.mxu0 0
        %657 = vmatpush1.bf16.msra.mxu0 0
        %658 = vmatprep.subr.bf16.mxu0 0
        %659 = vmatpush1.bf16.msra.mxu0 0
        %660 = vmatprep.mubr.bf16.mxu0 0
        %661 = vmatmul.mubr.bf16.gmra.mrb[0].mxu0 %v545
        %v662 = vpop.f32.mrb[0].mxu0
        %v663 = vadd.f32 0.0, %v662
        %v664 = vpop.f32.mrb[0].mxu0
        %v665 = vpop.f32.mrb[0].mxu0
        %v666 = vadd.f32 0.0, %v665
        %v667 = vpop.f32.mrb[0].mxu0
        %668 = vmatprep.mubr.bf16.mxu0 0
        %669 = vmatmul.mubr.bf16.gmra.mrb[0].mxu0 %v546
        %v670 = vpop.f32.mrb[0].mxu0
        %v671 = vadd.f32 0.0, %v670
        %v672 = vpop.f32.mrb[0].mxu0
        %v673 = vpop.f32.mrb[0].mxu0
        %v674 = vadd.f32 0.0, %v673
        %v675 = vpop.f32.mrb[0].mxu0
        %676 = vmatprep.mubr.bf16.mxu0 0
        %677 = vmatmul.mubr.bf16.gmra.mrb[0].mxu0 %v547
        %v678 = vpop.f32.mrb[0].mxu0
        %v679 = vadd.f32 0.0, %v678
        %v680 = vpop.f32.mrb[0].mxu0
        %v681 = vpop.f32.mrb[0].mxu0
        %v682 = vadd.f32 0.0, %v681
        %v683 = vpop.f32.mrb[0].mxu0
        %684 = vmatprep.mubr.bf16.mxu0 0
        %685 = vmatmul.mubr.bf16.gmra.mrb[0].mxu0 %v548
        %v686 = vpop.f32.mrb[0].mxu0
        %v687 = vadd.f32 0.0, %v686
        %v688 = vpop.f32.mrb[0].mxu0
        %v689 = vpop.f32.mrb[0].mxu0
        %v690 = vadd.f32 0.0, %v689
        %v691 = vpop.f32.mrb[0].mxu0
        %692 = vmatprep.mubr.bf16.mxu0 0
        %693 = vmatmul.mubr.bf16.gmra.mrb[0].mxu0 %v549
        %v694 = vpop.f32.mrb[0].mxu0
        %v695 = vadd.f32 0.0, %v694
        %v696 = vpop.f32.mrb[0].mxu0
        %v697 = vpop.f32.mrb[0].mxu0
        %v698 = vadd.f32 0.0, %v697
        %v699 = vpop.f32.mrb[0].mxu0
        %700 = vmatprep.mubr.bf16.mxu0 0
        %701 = vmatmul.mubr.bf16.gmra.mrb[0].mxu0 %v550
        %v702 = vpop.f32.mrb[0].mxu0
        %v703 = vadd.f32 0.0, %v702
        %v704 = vpop.f32.mrb[0].mxu0
        %v705 = vpop.f32.mrb[0].mxu0
        %v706 = vadd.f32 0.0, %v705
        %v707 = vpop.f32.mrb[0].mxu0
        %708 = vmatprep.mubr.bf16.mxu0 0
        %709 = vmatmul.mubr.bf16.gmra.mrb[0].mxu0 %v551
        %v710 = vpop.f32.mrb[0].mxu0
        %v711 = vadd.f32 0.0, %v710
        %v712 = vpop.f32.mrb[0].mxu0
        %v713 = vpop.f32.mrb[0].mxu0
        %v714 = vadd.f32 0.0, %v713
        %v715 = vpop.f32.mrb[0].mxu0
        %716 = vmatprep.mubr.bf16.mxu0 0
        %717 = vmatmul.mubr.bf16.gmra.mrb[0].mxu0 %v552
        %v718 = vpop.f32.mrb[0].mxu0
        %v719 = vadd.f32 0.0, %v718
        %v720 = vpop.f32.mrb[0].mxu0
        %v721 = vpop.f32.mrb[0].mxu0
        %v722 = vadd.f32 0.0, %v721
        %v723 = vpop.f32.mrb[0].mxu0
        %724 = vmatprep.mubr.bf16.mxu0 0
        %725 = vmatmul.mubr.bf16.gmra.mrb[0].mxu0 %v553
        %v726 = vpop.f32.mrb[0].mxu0
        %v727 = vadd.f32 0.0, %v726
        %v728 = vpop.f32.mrb[0].mxu0
        %v729 = vpop.f32.mrb[0].mxu0
        %v730 = vadd.f32 0.0, %v729
        %v731 = vpop.f32.mrb[0].mxu0
        %732 = vmatprep.mubr.bf16.mxu0 0
        %733 = vmatmul.mubr.bf16.gmra.mrb[0].mxu0 %v554
        %v734 = vpop.f32.mrb[0].mxu0
        %v735 = vadd.f32 0.0, %v734
        %v736 = vpop.f32.mrb[0].mxu0
        %v737 = vpop.f32.mrb[0].mxu0
        %v738 = vadd.f32 0.0, %v737
        %v739 = vpop.f32.mrb[0].mxu0
        %740 = vmatprep.mubr.bf16.mxu0 0
        %741 = vmatmul.mubr.bf16.gmra.mrb[0].mxu0 %v555
        %v742 = vpop.f32.mrb[0].mxu0
        %v743 = vadd.f32 0.0, %v742
        %v744 = vpop.f32.mrb[0].mxu0
        %v745 = vpop.f32.mrb[0].mxu0
        %v746 = vadd.f32 0.0, %v745
        %v747 = vpop.f32.mrb[0].mxu0
        %748 = vmatprep.mubr.bf16.mxu0 0
        %749 = vmatmul.mubr.bf16.gmra.mrb[0].mxu0 %v556
        %v750 = vpop.f32.mrb[0].mxu0
        %v751 = vadd.f32 0.0, %v750
        %v752 = vpop.f32.mrb[0].mxu0
        %v753 = vpop.f32.mrb[0].mxu0
        %v754 = vadd.f32 0.0, %v753
        %v755 = vpop.f32.mrb[0].mxu0
        %756 = vmatprep.mubr.bf16.mxu0 0
        %757 = vmatmul.mubr.bf16.gmra.mrb[0].mxu0 %v557
        %v758 = vpop.f32.mrb[0].mxu0
        %v759 = vadd.f32 0.0, %v758
        %v760 = vpop.f32.mrb[0].mxu0
        %v761 = vpop.f32.mrb[0].mxu0
        %v762 = vadd.f32 0.0, %v761
        %v763 = vpop.f32.mrb[0].mxu0
        %764 = vmatprep.mubr.bf16.mxu0 0
        %765 = vmatmul.mubr.bf16.gmra.mrb[0].mxu0 %v558
        %v766 = vpop.f32.mrb[0].mxu0
        %v767 = vadd.f32 0.0, %v766
        %v768 = vpop.f32.mrb[0].mxu0
        %v769 = vpop.f32.mrb[0].mxu0
        %v770 = vadd.f32 0.0, %v769
        %v771 = vpop.f32.mrb[0].mxu0
        %772 = vmatprep.mubr.bf16.mxu0 0
        %773 = vmatmul.mubr.bf16.gmra.mrb[0].mxu0 %v559
        %v774 = vpop.f32.mrb[0].mxu0
        %v775 = vadd.f32 0.0, %v774
        %v776 = vpop.f32.mrb[0].mxu0
        %v777 = vpop.f32.mrb[0].mxu0
        %v778 = vadd.f32 0.0, %v777
        %v779 = vpop.f32.mrb[0].mxu0
        %780 = vmatprep.mubr.bf16.mxu0 0
        %781 = vmatmul.mubr.bf16.gmra.mrb[0].mxu0 %v560
        %v782 = vpop.f32.mrb[0].mxu0
        %v783 = vadd.f32 0.0, %v782
        %v784 = vpop.f32.mrb[0].mxu0
        %v785 = vpop.f32.mrb[0].mxu0
        %v786 = vadd.f32 0.0, %v785
        %v787 = vpop.f32.mrb[0].mxu0
        %788 = vdwg.mxu0
        %s789 = smul.u32 %s32, 64
        %s790 = scalar_lea.vmem [#allocation6], %s789
        %v791 = vld [vmem:[%s790] sm:$0xff]
        %v792 = vld [vmem:[%s790 + $0x8] sm:$0xff]
        %v793 = vld [vmem:[%s790 + $0x10] sm:$0xff]
        %v794 = vld [vmem:[%s790 + $0x18] sm:$0xff]
        %v795 = vld [vmem:[%s790 + $0x20] sm:$0xff]
        %v796 = vld [vmem:[%s790 + $0x28] sm:$0xff]
        %v797 = vld [vmem:[%s790 + $0x30] sm:$0xff]
        %v798 = vld [vmem:[%s790 + $0x38] sm:$0xff]
        %v799 = vadd.f32 %v663, %v791
        %v800 = vadd.f32 %v666, %v792
        %v801 = vadd.f32 %v671, %v793
        %v802 = vadd.f32 %v674, %v794
        %v803 = vadd.f32 %v679, %v795
        %v804 = vadd.f32 %v682, %v796
        %v805 = vadd.f32 %v687, %v797
        %v806 = vadd.f32 %v690, %v798
        %v807 = vadd.f32 %v695, %v791
        %v808 = vadd.f32 %v698, %v792
        %v809 = vadd.f32 %v703, %v793
        %v810 = vadd.f32 %v706, %v794
        %v811 = vadd.f32 %v711, %v795
        %v812 = vadd.f32 %v714, %v796
        %v813 = vadd.f32 %v719, %v797
        %v814 = vadd.f32 %v722, %v798
        %v815 = vadd.f32 %v727, %v791
        %v816 = vadd.f32 %v730, %v792
        %v817 = vadd.f32 %v735, %v793
        %v818 = vadd.f32 %v738, %v794
        %v819 = vadd.f32 %v743, %v795
        %v820 = vadd.f32 %v746, %v796
        %v821 = vadd.f32 %v751, %v797
        %v822 = vadd.f32 %v754, %v798
        %v823 = vadd.f32 %v759, %v791
        %v824 = vadd.f32 %v762, %v792
        %v825 = vadd.f32 %v767, %v793
        %v826 = vadd.f32 %v770, %v794
        %v827 = vadd.f32 %v775, %v795
        %v828 = vadd.f32 %v778, %v796
        %v829 = vadd.f32 %v783, %v797
        %v830 = vadd.f32 %v786, %v798
        %v831 = vmax.f32 %v799, 0.0
        %v832 = vmax.f32 %v800, 0.0
        %v833 = vmax.f32 %v801, 0.0
        %v834 = vmax.f32 %v802, 0.0
        %v835 = vmax.f32 %v803, 0.0
        %v836 = vmax.f32 %v804, 0.0
        %v837 = vmax.f32 %v805, 0.0
        %v838 = vmax.f32 %v806, 0.0
        %v839 = vmax.f32 %v807, 0.0
        %v840 = vmax.f32 %v808, 0.0
        %v841 = vmax.f32 %v809, 0.0
        %v842 = vmax.f32 %v810, 0.0
        %v843 = vmax.f32 %v811, 0.0
        %v844 = vmax.f32 %v812, 0.0
        %v845 = vmax.f32 %v813, 0.0
        %v846 = vmax.f32 %v814, 0.0
        %v847 = vmax.f32 %v815, 0.0
        %v848 = vmax.f32 %v816, 0.0
        %v849 = vmax.f32 %v817, 0.0
        %v850 = vmax.f32 %v818, 0.0
        %v851 = vmax.f32 %v819, 0.0
        %v852 = vmax.f32 %v820, 0.0
        %v853 = vmax.f32 %v821, 0.0
        %v854 = vmax.f32 %v822, 0.0
        %v855 = vmax.f32 %v823, 0.0
        %v856 = vmax.f32 %v824, 0.0
        %v857 = vmax.f32 %v825, 0.0
        %v858 = vmax.f32 %v826, 0.0
        %v859 = vmax.f32 %v827, 0.0
        %v860 = vmax.f32 %v828, 0.0
        %v861 = vmax.f32 %v829, 0.0
        %v862 = vmax.f32 %v830, 0.0
        %v863 = vpack.c.bf16 %v831, %v831
        %v864 = vpack.c.bf16 %v832, %v832
        %v865 = vpack.c.bf16 %v833, %v833
        %v866 = vpack.c.bf16 %v834, %v834
        %v867 = vpack.c.bf16 %v835, %v835
        %v868 = vpack.c.bf16 %v836, %v836
        %v869 = vpack.c.bf16 %v837, %v837
        %v870 = vpack.c.bf16 %v838, %v838
        %v871 = vpack.c.bf16 %v839, %v839
        %v872 = vpack.c.bf16 %v840, %v840
        %v873 = vpack.c.bf16 %v841, %v841
        %v874 = vpack.c.bf16 %v842, %v842
        %v875 = vpack.c.bf16 %v843, %v843
        %v876 = vpack.c.bf16 %v844, %v844
        %v877 = vpack.c.bf16 %v845, %v845
        %v878 = vpack.c.bf16 %v846, %v846
        %v879 = vpack.c.bf16 %v847, %v847
        %v880 = vpack.c.bf16 %v848, %v848
        %v881 = vpack.c.bf16 %v849, %v849
        %v882 = vpack.c.bf16 %v850, %v850
        %v883 = vpack.c.bf16 %v851, %v851
        %v884 = vpack.c.bf16 %v852, %v852
        %v885 = vpack.c.bf16 %v853, %v853
        %v886 = vpack.c.bf16 %v854, %v854
        %v887 = vpack.c.bf16 %v855, %v855
        %v888 = vpack.c.bf16 %v856, %v856
        %v889 = vpack.c.bf16 %v857, %v857
        %v890 = vpack.c.bf16 %v858, %v858
        %v891 = vpack.c.bf16 %v859, %v859
        %v892 = vpack.c.bf16 %v860, %v860
        %v893 = vpack.c.bf16 %v861, %v861
        %v894 = vpack.c.bf16 %v862, %v862
        %v896 = vshrl.u32 %v863, 16
        %v898 = vrot.slane %v896, 7
        %v899 = vshll.u32 %v863, 16
        %v901 = vor.u32 %v898, %v899
        %v903 = vshrl.u32 %v864, 16
        %v905 = vrot.slane %v903, 7
        %v906 = vshll.u32 %v864, 16
        %v908 = vor.u32 %v905, %v906
        %v910 = vshrl.u32 %v865, 16
        %v912 = vrot.slane %v910, 7
        %v913 = vshll.u32 %v865, 16
        %v915 = vor.u32 %v912, %v913
        %v917 = vshrl.u32 %v866, 16
        %v919 = vrot.slane %v917, 7
        %v920 = vshll.u32 %v866, 16
        %v922 = vor.u32 %v919, %v920
        %v924 = vshrl.u32 %v867, 16
        %v926 = vrot.slane %v924, 7
        %v927 = vshll.u32 %v867, 16
        %v929 = vor.u32 %v926, %v927
        %v931 = vshrl.u32 %v868, 16
        %v933 = vrot.slane %v931, 7
        %v934 = vshll.u32 %v868, 16
        %v936 = vor.u32 %v933, %v934
        %v938 = vshrl.u32 %v869, 16
        %v940 = vrot.slane %v938, 7
        %v941 = vshll.u32 %v869, 16
        %v943 = vor.u32 %v940, %v941
        %v945 = vshrl.u32 %v870, 16
        %v947 = vrot.slane %v945, 7
        %v948 = vshll.u32 %v870, 16
        %v950 = vor.u32 %v947, %v948
        %v952 = vshrl.u32 %v871, 16
        %v954 = vrot.slane %v952, 7
        %v955 = vshll.u32 %v871, 16
        %v957 = vor.u32 %v954, %v955
        %v959 = vshrl.u32 %v872, 16
        %v961 = vrot.slane %v959, 7
        %v962 = vshll.u32 %v872, 16
        %v964 = vor.u32 %v961, %v962
        %v966 = vshrl.u32 %v873, 16
        %v968 = vrot.slane %v966, 7
        %v969 = vshll.u32 %v873, 16
        %v971 = vor.u32 %v968, %v969
        %v973 = vshrl.u32 %v874, 16
        %v975 = vrot.slane %v973, 7
        %v976 = vshll.u32 %v874, 16
        %v978 = vor.u32 %v975, %v976
        %v980 = vshrl.u32 %v875, 16
        %v982 = vrot.slane %v980, 7
        %v983 = vshll.u32 %v875, 16
        %v985 = vor.u32 %v982, %v983
        %v987 = vshrl.u32 %v876, 16
        %v989 = vrot.slane %v987, 7
        %v990 = vshll.u32 %v876, 16
        %v992 = vor.u32 %v989, %v990
        %v994 = vshrl.u32 %v877, 16
        %v996 = vrot.slane %v994, 7
        %v997 = vshll.u32 %v877, 16
        %v999 = vor.u32 %v996, %v997
        %v1001 = vshrl.u32 %v878, 16
        %v1003 = vrot.slane %v1001, 7
        %v1004 = vshll.u32 %v878, 16
        %v1006 = vor.u32 %v1003, %v1004
        %v1008 = vshrl.u32 %v879, 16
        %v1010 = vrot.slane %v1008, 7
        %v1011 = vshll.u32 %v879, 16
        %v1013 = vor.u32 %v1010, %v1011
        %v1015 = vshrl.u32 %v880, 16
        %v1017 = vrot.slane %v1015, 7
        %v1018 = vshll.u32 %v880, 16
        %v1020 = vor.u32 %v1017, %v1018
        %v1022 = vshrl.u32 %v881, 16
        %v1024 = vrot.slane %v1022, 7
        %v1025 = vshll.u32 %v881, 16
        %v1027 = vor.u32 %v1024, %v1025
        %v1029 = vshrl.u32 %v882, 16
        %v1031 = vrot.slane %v1029, 7
        %v1032 = vshll.u32 %v882, 16
        %v1034 = vor.u32 %v1031, %v1032
        %v1036 = vshrl.u32 %v883, 16
        %v1038 = vrot.slane %v1036, 7
        %v1039 = vshll.u32 %v883, 16
        %v1041 = vor.u32 %v1038, %v1039
        %v1043 = vshrl.u32 %v884, 16
        %v1045 = vrot.slane %v1043, 7
        %v1046 = vshll.u32 %v884, 16
        %v1048 = vor.u32 %v1045, %v1046
        %v1050 = vshrl.u32 %v885, 16
        %v1052 = vrot.slane %v1050, 7
        %v1053 = vshll.u32 %v885, 16
        %v1055 = vor.u32 %v1052, %v1053
        %v1057 = vshrl.u32 %v886, 16
        %v1059 = vrot.slane %v1057, 7
        %v1060 = vshll.u32 %v886, 16
        %v1062 = vor.u32 %v1059, %v1060
        %v1064 = vshrl.u32 %v887, 16
        %v1066 = vrot.slane %v1064, 7
        %v1067 = vshll.u32 %v887, 16
        %v1069 = vor.u32 %v1066, %v1067
        %v1071 = vshrl.u32 %v888, 16
        %v1073 = vrot.slane %v1071, 7
        %v1074 = vshll.u32 %v888, 16
        %v1076 = vor.u32 %v1073, %v1074
        %v1078 = vshrl.u32 %v889, 16
        %v1080 = vrot.slane %v1078, 7
        %v1081 = vshll.u32 %v889, 16
        %v1083 = vor.u32 %v1080, %v1081
        %v1085 = vshrl.u32 %v890, 16
        %v1087 = vrot.slane %v1085, 7
        %v1088 = vshll.u32 %v890, 16
        %v1090 = vor.u32 %v1087, %v1088
        %v1092 = vshrl.u32 %v891, 16
        %v1094 = vrot.slane %v1092, 7
        %v1095 = vshll.u32 %v891, 16
        %v1097 = vor.u32 %v1094, %v1095
        %v1099 = vshrl.u32 %v892, 16
        %v1101 = vrot.slane %v1099, 7
        %v1102 = vshll.u32 %v892, 16
        %v1104 = vor.u32 %v1101, %v1102
        %v1106 = vshrl.u32 %v893, 16
        %v1108 = vrot.slane %v1106, 7
        %v1109 = vshll.u32 %v893, 16
        %v1111 = vor.u32 %v1108, %v1109
        %v1113 = vshrl.u32 %v894, 16
        %v1115 = vrot.slane %v1113, 7
        %v1116 = vshll.u32 %v894, 16
        %v1118 = vor.u32 %v1115, %v1116
        %vm1151 = vcmask 1040384
        %vm1152 = vsmask.f32 256
        %vm1153 = vmand %vm1151, %vm1152
        %v1154 = vsel %vm1153, 0, %v901
        %v1155 = vsel %vm1153, 0, %v908
        %v1156 = vsel %vm1153, 0, %v915
        %v1157 = vsel %vm1153, 0, %v922
        %v1158 = vsel %vm1153, 0, %v929
        %v1159 = vsel %vm1153, 0, %v936
        %v1160 = vsel %vm1153, 0, %v943
        %v1161 = vsel %vm1153, 0, %v950
        %v1162 = vsel %vm1153, 0, %v957
        %v1163 = vsel %vm1153, 0, %v964
        %v1164 = vsel %vm1153, 0, %v971
        %v1165 = vsel %vm1153, 0, %v978
        %v1166 = vsel %vm1153, 0, %v985
        %v1167 = vsel %vm1153, 0, %v992
        %v1168 = vsel %vm1153, 0, %v999
        %v1169 = vsel %vm1153, 0, %v1006
        %v1170 = vsel %vm1153, 0, %v1013
        %v1171 = vsel %vm1153, 0, %v1020
        %v1172 = vsel %vm1153, 0, %v1027
        %v1173 = vsel %vm1153, 0, %v1034
        %v1174 = vsel %vm1153, 0, %v1041
        %v1175 = vsel %vm1153, 0, %v1048
        %v1176 = vsel %vm1153, 0, %v1055
        %v1177 = vsel %vm1153, 0, %v1062
        %v1178 = vsel %vm1153, 0, %v1069
        %v1179 = vsel %vm1153, 0, %v1076
        %v1180 = vsel %vm1153, 0, %v1083
        %v1181 = vsel %vm1153, 0, %v1090
        %v1182 = vsel %vm1153, 0, %v1097
        %v1183 = vsel %vm1153, 0, %v1104
        %v1184 = vsel %vm1153, 0, %v1111
        %v1185 = vsel %vm1153, 0, %v1118
        %v1186 = vrot.slane %v899, 1
        %v1187 = vor.u32 %v896, %v1186
        %v1188 = vrot.slane %v906, 1
        %v1189 = vor.u32 %v903, %v1188
        %v1190 = vrot.slane %v913, 1
        %v1191 = vor.u32 %v910, %v1190
        %v1192 = vrot.slane %v920, 1
        %v1193 = vor.u32 %v917, %v1192
        %v1194 = vrot.slane %v927, 1
        %v1195 = vor.u32 %v924, %v1194
        %v1196 = vrot.slane %v934, 1
        %v1197 = vor.u32 %v931, %v1196
        %v1198 = vrot.slane %v941, 1
        %v1199 = vor.u32 %v938, %v1198
        %v1200 = vrot.slane %v948, 1
        %v1201 = vor.u32 %v945, %v1200
        %v1202 = vrot.slane %v955, 1
        %v1203 = vor.u32 %v952, %v1202
        %v1204 = vrot.slane %v962, 1
        %v1205 = vor.u32 %v959, %v1204
        %v1206 = vrot.slane %v969, 1
        %v1207 = vor.u32 %v966, %v1206
        %v1208 = vrot.slane %v976, 1
        %v1209 = vor.u32 %v973, %v1208
        %v1210 = vrot.slane %v983, 1
        %v1211 = vor.u32 %v980, %v1210
        %v1212 = vrot.slane %v990, 1
        %v1213 = vor.u32 %v987, %v1212
        %v1214 = vrot.slane %v997, 1
        %v1215 = vor.u32 %v994, %v1214
        %v1216 = vrot.slane %v1004, 1
        %v1217 = vor.u32 %v1001, %v1216
        %v1218 = vrot.slane %v1011, 1
        %v1219 = vor.u32 %v1008, %v1218
        %v1220 = vrot.slane %v1018, 1
        %v1221 = vor.u32 %v1015, %v1220
        %v1222 = vrot.slane %v1025, 1
        %v1223 = vor.u32 %v1022, %v1222
        %v1224 = vrot.slane %v1032, 1
        %v1225 = vor.u32 %v1029, %v1224
        %v1226 = vrot.slane %v1039, 1
        %v1227 = vor.u32 %v1036, %v1226
        %v1228 = vrot.slane %v1046, 1
        %v1229 = vor.u32 %v1043, %v1228
        %v1230 = vrot.slane %v1053, 1
        %v1231 = vor.u32 %v1050, %v1230
        %v1232 = vrot.slane %v1060, 1
        %v1233 = vor.u32 %v1057, %v1232
        %v1234 = vrot.slane %v1067, 1
        %v1235 = vor.u32 %v1064, %v1234
        %v1236 = vrot.slane %v1074, 1
        %v1237 = vor.u32 %v1071, %v1236
        %v1238 = vrot.slane %v1081, 1
        %v1239 = vor.u32 %v1078, %v1238
        %v1240 = vrot.slane %v1088, 1
        %v1241 = vor.u32 %v1085, %v1240
        %v1242 = vrot.slane %v1095, 1
        %v1243 = vor.u32 %v1092, %v1242
        %v1244 = vrot.slane %v1102, 1
        %v1245 = vor.u32 %v1099, %v1244
        %v1246 = vrot.slane %v1109, 1
        %v1247 = vor.u32 %v1106, %v1246
        %v1248 = vrot.slane %v1116, 1
        %v1249 = vor.u32 %v1113, %v1248
        %vm1282 = vcmask 1043456
        %vm1283 = vsmask.f32 3328
        %vm1284 = vmand %vm1282, %vm1283
        %v1285 = vsel %vm1284, %v1187, 0
        %v1286 = vsel %vm1284, %v1189, 0
        %v1287 = vsel %vm1284, %v1191, 0
        %v1288 = vsel %vm1284, %v1193, 0
        %v1289 = vsel %vm1284, %v1195, 0
        %v1290 = vsel %vm1284, %v1197, 0
        %v1291 = vsel %vm1284, %v1199, 0
        %v1292 = vsel %vm1284, %v1201, 0
        %v1293 = vsel %vm1284, %v1203, 0
        %v1294 = vsel %vm1284, %v1205, 0
        %v1295 = vsel %vm1284, %v1207, 0
        %v1296 = vsel %vm1284, %v1209, 0
        %v1297 = vsel %vm1284, %v1211, 0
        %v1298 = vsel %vm1284, %v1213, 0
        %v1299 = vsel %vm1284, %v1215, 0
        %v1300 = vsel %vm1284, %v1217, 0
        %v1301 = vsel %vm1284, %v1219, 0
        %v1302 = vsel %vm1284, %v1221, 0
        %v1303 = vsel %vm1284, %v1223, 0
        %v1304 = vsel %vm1284, %v1225, 0
        %v1305 = vsel %vm1284, %v1227, 0
        %v1306 = vsel %vm1284, %v1229, 0
        %v1307 = vsel %vm1284, %v1231, 0
        %v1308 = vsel %vm1284, %v1233, 0
        %v1309 = vsel %vm1284, %v1235, 0
        %v1310 = vsel %vm1284, %v1237, 0
        %v1311 = vsel %vm1284, %v1239, 0
        %v1312 = vsel %vm1284, %v1241, 0
        %v1313 = vsel %vm1284, %v1243, 0
        %v1314 = vsel %vm1284, %v1245, 0
        %v1315 = vsel %vm1284, %v1247, 0
        %v1316 = vsel %vm1284, %v1249, 0
        %v1413 = vunpack.c.l.b16 %v1154
        %v1414 = vunpack.c.l.b16 %v863
        %v1415 = vunpack.c.l.b16 %v1285
        %v1416 = vunpack.c.l.b16 %v1155
        %v1417 = vunpack.c.l.b16 %v864
        %v1418 = vunpack.c.l.b16 %v1286
        %v1419 = vunpack.c.l.b16 %v1156
        %v1420 = vunpack.c.l.b16 %v865
        %v1421 = vunpack.c.l.b16 %v1287
        %v1422 = vunpack.c.l.b16 %v1157
        %v1423 = vunpack.c.l.b16 %v866
        %v1424 = vunpack.c.l.b16 %v1288
        %v1425 = vunpack.c.l.b16 %v1158
        %v1426 = vunpack.c.l.b16 %v867
        %v1427 = vunpack.c.l.b16 %v1289
        %v1428 = vunpack.c.l.b16 %v1159
        %v1429 = vunpack.c.l.b16 %v868
        %v1430 = vunpack.c.l.b16 %v1290
        %v1431 = vunpack.c.l.b16 %v1160
        %v1432 = vunpack.c.l.b16 %v869
        %v1433 = vunpack.c.l.b16 %v1291
        %v1434 = vunpack.c.l.b16 %v1161
        %v1435 = vunpack.c.l.b16 %v870
        %v1436 = vunpack.c.l.b16 %v1292
        %v1437 = vunpack.c.l.b16 %v1162
        %v1438 = vunpack.c.l.b16 %v871
        %v1439 = vunpack.c.l.b16 %v1293
        %v1440 = vunpack.c.l.b16 %v1163
        %v1441 = vunpack.c.l.b16 %v872
        %v1442 = vunpack.c.l.b16 %v1294
        %v1443 = vunpack.c.l.b16 %v1164
        %v1444 = vunpack.c.l.b16 %v873
        %v1445 = vunpack.c.l.b16 %v1295
        %v1446 = vunpack.c.l.b16 %v1165
        %v1447 = vunpack.c.l.b16 %v874
        %v1448 = vunpack.c.l.b16 %v1296
        %v1449 = vunpack.c.l.b16 %v1166
        %v1450 = vunpack.c.l.b16 %v875
        %v1451 = vunpack.c.l.b16 %v1297
        %v1452 = vunpack.c.l.b16 %v1167
        %v1453 = vunpack.c.l.b16 %v876
        %v1454 = vunpack.c.l.b16 %v1298
        %v1455 = vunpack.c.l.b16 %v1168
        %v1456 = vunpack.c.l.b16 %v877
        %v1457 = vunpack.c.l.b16 %v1299
        %v1458 = vunpack.c.l.b16 %v1169
        %v1459 = vunpack.c.l.b16 %v878
        %v1460 = vunpack.c.l.b16 %v1300
        %v1461 = vunpack.c.l.b16 %v1170
        %v1462 = vunpack.c.l.b16 %v879
        %v1463 = vunpack.c.l.b16 %v1301
        %v1464 = vunpack.c.l.b16 %v1171
        %v1465 = vunpack.c.l.b16 %v880
        %v1466 = vunpack.c.l.b16 %v1302
        %v1467 = vunpack.c.l.b16 %v1172
        %v1468 = vunpack.c.l.b16 %v881
        %v1469 = vunpack.c.l.b16 %v1303
        %v1470 = vunpack.c.l.b16 %v1173
        %v1471 = vunpack.c.l.b16 %v882
        %v1472 = vunpack.c.l.b16 %v1304
        %v1473 = vunpack.c.l.b16 %v1174
        %v1474 = vunpack.c.l.b16 %v883
        %v1475 = vunpack.c.l.b16 %v1305
        %v1476 = vunpack.c.l.b16 %v1175
        %v1477 = vunpack.c.l.b16 %v884
        %v1478 = vunpack.c.l.b16 %v1306
        %v1479 = vunpack.c.l.b16 %v1176
        %v1480 = vunpack.c.l.b16 %v885
        %v1481 = vunpack.c.l.b16 %v1307
        %v1482 = vunpack.c.l.b16 %v1177
        %v1483 = vunpack.c.l.b16 %v886
        %v1484 = vunpack.c.l.b16 %v1308
        %v1485 = vunpack.c.l.b16 %v1178
        %v1486 = vunpack.c.l.b16 %v887
        %v1487 = vunpack.c.l.b16 %v1309
        %v1488 = vunpack.c.l.b16 %v1179
        %v1489 = vunpack.c.l.b16 %v888
        %v1490 = vunpack.c.l.b16 %v1310
        %v1491 = vunpack.c.l.b16 %v1180
        %v1492 = vunpack.c.l.b16 %v889
        %v1493 = vunpack.c.l.b16 %v1311
        %v1494 = vunpack.c.l.b16 %v1181
        %v1495 = vunpack.c.l.b16 %v890
        %v1496 = vunpack.c.l.b16 %v1312
        %v1497 = vunpack.c.l.b16 %v1182
        %v1498 = vunpack.c.l.b16 %v891
        %v1499 = vunpack.c.l.b16 %v1313
        %v1500 = vunpack.c.l.b16 %v1183
        %v1501 = vunpack.c.l.b16 %v892
        %v1502 = vunpack.c.l.b16 %v1314
        %v1503 = vunpack.c.l.b16 %v1184
        %v1504 = vunpack.c.l.b16 %v893
        %v1505 = vunpack.c.l.b16 %v1315
        %v1506 = vunpack.c.l.b16 %v1185
        %v1507 = vunpack.c.l.b16 %v894
        %v1508 = vunpack.c.l.b16 %v1316
        %v1509 = vpack.c.b16 %v1414, %v1413
        %v1510 = vpack.c.b16 %v1415, %v1415
        %v1511 = vpack.c.b16 %v1417, %v1416
        %v1512 = vpack.c.b16 %v1418, %v1418
        %v1513 = vpack.c.b16 %v1420, %v1419
        %v1514 = vpack.c.b16 %v1421, %v1421
        %v1515 = vpack.c.b16 %v1423, %v1422
        %v1516 = vpack.c.b16 %v1424, %v1424
        %v1517 = vpack.c.b16 %v1426, %v1425
        %v1518 = vpack.c.b16 %v1427, %v1427
        %v1519 = vpack.c.b16 %v1429, %v1428
        %v1520 = vpack.c.b16 %v1430, %v1430
        %v1521 = vpack.c.b16 %v1432, %v1431
        %v1522 = vpack.c.b16 %v1433, %v1433
        %v1523 = vpack.c.b16 %v1435, %v1434
        %v1524 = vpack.c.b16 %v1436, %v1436
        %v1525 = vpack.c.b16 %v1438, %v1437
        %v1526 = vpack.c.b16 %v1439, %v1439
        %v1527 = vpack.c.b16 %v1441, %v1440
        %v1528 = vpack.c.b16 %v1442, %v1442
        %v1529 = vpack.c.b16 %v1444, %v1443
        %v1530 = vpack.c.b16 %v1445, %v1445
        %v1531 = vpack.c.b16 %v1447, %v1446
        %v1532 = vpack.c.b16 %v1448, %v1448
        %v1533 = vpack.c.b16 %v1450, %v1449
        %v1534 = vpack.c.b16 %v1451, %v1451
        %v1535 = vpack.c.b16 %v1453, %v1452
        %v1536 = vpack.c.b16 %v1454, %v1454
        %v1537 = vpack.c.b16 %v1456, %v1455
        %v1538 = vpack.c.b16 %v1457, %v1457
        %v1539 = vpack.c.b16 %v1459, %v1458
        %v1540 = vpack.c.b16 %v1460, %v1460
        %v1541 = vpack.c.b16 %v1462, %v1461
        %v1542 = vpack.c.b16 %v1463, %v1463
        %v1543 = vpack.c.b16 %v1465, %v1464
        %v1544 = vpack.c.b16 %v1466, %v1466
        %v1545 = vpack.c.b16 %v1468, %v1467
        %v1546 = vpack.c.b16 %v1469, %v1469
        %v1547 = vpack.c.b16 %v1471, %v1470
        %v1548 = vpack.c.b16 %v1472, %v1472
        %v1549 = vpack.c.b16 %v1474, %v1473
        %v1550 = vpack.c.b16 %v1475, %v1475
        %v1551 = vpack.c.b16 %v1477, %v1476
        %v1552 = vpack.c.b16 %v1478, %v1478
        %v1553 = vpack.c.b16 %v1480, %v1479
        %v1554 = vpack.c.b16 %v1481, %v1481
        %v1555 = vpack.c.b16 %v1483, %v1482
        %v1556 = vpack.c.b16 %v1484, %v1484
        %v1557 = vpack.c.b16 %v1486, %v1485
        %v1558 = vpack.c.b16 %v1487, %v1487
        %v1559 = vpack.c.b16 %v1489, %v1488
        %v1560 = vpack.c.b16 %v1490, %v1490
        %v1561 = vpack.c.b16 %v1492, %v1491
        %v1562 = vpack.c.b16 %v1493, %v1493
        %v1563 = vpack.c.b16 %v1495, %v1494
        %v1564 = vpack.c.b16 %v1496, %v1496
        %v1565 = vpack.c.b16 %v1498, %v1497
        %v1566 = vpack.c.b16 %v1499, %v1499
        %v1567 = vpack.c.b16 %v1501, %v1500
        %v1568 = vpack.c.b16 %v1502, %v1502
        %v1569 = vpack.c.b16 %v1504, %v1503
        %v1570 = vpack.c.b16 %v1505, %v1505
        %v1571 = vpack.c.b16 %v1507, %v1506
        %v1572 = vpack.c.b16 %v1508, %v1508
        %s1637 = scalar_lea.vmem [#allocation2], 12
        %1638 = vst [vmem:[%s1637] sm:$0xff] %v1509
        %1639 = vst [vmem:[%s1637 + $0x8] sm:$0xf] %v1510
        %1640 = vst [vmem:[%s1637 + $0xc] sm:$0xff] %v1511
        %1641 = vst [vmem:[%s1637 + $0x14] sm:$0xf] %v1512
        %1642 = vst [vmem:[%s1637 + $0x18] sm:$0xff] %v1513
        %1643 = vst [vmem:[%s1637 + $0x20] sm:$0xf] %v1514
        %1644 = vst [vmem:[%s1637 + $0x24] sm:$0xff] %v1515
        %1645 = vst [vmem:[%s1637 + $0x2c] sm:$0xf] %v1516
        %1646 = vst [vmem:[%s1637 + $0x30] sm:$0xff] %v1517
        %1647 = vst [vmem:[%s1637 + $0x38] sm:$0xf] %v1518
        %1648 = vst [vmem:[%s1637 + $0x3c] sm:$0xff] %v1519
        %1649 = vst [vmem:[%s1637 + $0x44] sm:$0xf] %v1520
        %1650 = vst [vmem:[%s1637 + $0x48] sm:$0xff] %v1521
        %1651 = vst [vmem:[%s1637 + $0x50] sm:$0xf] %v1522
        %1652 = vst [vmem:[%s1637 + $0x54] sm:$0xff] %v1523
        %1653 = vst [vmem:[%s1637 + $0x5c] sm:$0xf] %v1524
        %1654 = vst [vmem:[%s1637 + $0x78] sm:$0xff] %v1525
        %1655 = vst [vmem:[%s1637 + $0x80] sm:$0xf] %v1526
        %1656 = vst [vmem:[%s1637 + $0x84] sm:$0xff] %v1527
        %1657 = vst [vmem:[%s1637 + $0x8c] sm:$0xf] %v1528
        %1658 = vst [vmem:[%s1637 + $0x90] sm:$0xff] %v1529
        %1659 = vst [vmem:[%s1637 + $0x98] sm:$0xf] %v1530
        %1660 = vst [vmem:[%s1637 + $0x9c] sm:$0xff] %v1531
        %1661 = vst [vmem:[%s1637 + $0xa4] sm:$0xf] %v1532
        %1662 = vst [vmem:[%s1637 + $0xa8] sm:$0xff] %v1533
        %1663 = vst [vmem:[%s1637 + $0xb0] sm:$0xf] %v1534
        %1664 = vst [vmem:[%s1637 + $0xb4] sm:$0xff] %v1535
        %1665 = vst [vmem:[%s1637 + $0xbc] sm:$0xf] %v1536
        %1666 = vst [vmem:[%s1637 + $0xc0] sm:$0xff] %v1537
        %1667 = vst [vmem:[%s1637 + $0xc8] sm:$0xf] %v1538
        %1668 = vst [vmem:[%s1637 + $0xcc] sm:$0xff] %v1539
        %1669 = vst [vmem:[%s1637 + $0xd4] sm:$0xf] %v1540
        %1670 = vst [vmem:[%s1637 + $0xf0] sm:$0xff] %v1541
        %1671 = vst [vmem:[%s1637 + $0xf8] sm:$0xf] %v1542
        %1672 = vst [vmem:[%s1637 + $0xfc] sm:$0xff] %v1543
        %1673 = vst [vmem:[%s1637 + $0x104] sm:$0xf] %v1544
        %1674 = vst [vmem:[%s1637 + $0x108] sm:$0xff] %v1545
        %1675 = vst [vmem:[%s1637 + $0x110] sm:$0xf] %v1546
        %1676 = vst [vmem:[%s1637 + $0x114] sm:$0xff] %v1547
        %1677 = vst [vmem:[%s1637 + $0x11c] sm:$0xf] %v1548
        %1678 = vst [vmem:[%s1637 + $0x120] sm:$0xff] %v1549
        %1679 = vst [vmem:[%s1637 + $0x128] sm:$0xf] %v1550
        %1680 = vst [vmem:[%s1637 + $0x12c] sm:$0xff] %v1551
        %1681 = vst [vmem:[%s1637 + $0x134] sm:$0xf] %v1552
        %1682 = vst [vmem:[%s1637 + $0x138] sm:$0xff] %v1553
        %1683 = vst [vmem:[%s1637 + $0x140] sm:$0xf] %v1554
        %1684 = vst [vmem:[%s1637 + $0x144] sm:$0xff] %v1555
        %1685 = vst [vmem:[%s1637 + $0x14c] sm:$0xf] %v1556
        %1686 = vst [vmem:[%s1637 + $0x168] sm:$0xff] %v1557
        %1687 = vst [vmem:[%s1637 + $0x170] sm:$0xf] %v1558
        %1688 = vst [vmem:[%s1637 + $0x174] sm:$0xff] %v1559
        %1689 = vst [vmem:[%s1637 + $0x17c] sm:$0xf] %v1560
        %1690 = vst [vmem:[%s1637 + $0x180] sm:$0xff] %v1561
        %1691 = vst [vmem:[%s1637 + $0x188] sm:$0xf] %v1562
        %1692 = vst [vmem:[%s1637 + $0x18c] sm:$0xff] %v1563
        %1693 = vst [vmem:[%s1637 + $0x194] sm:$0xf] %v1564
        %1694 = vst [vmem:[%s1637 + $0x198] sm:$0xff] %v1565
        %1695 = vst [vmem:[%s1637 + $0x1a0] sm:$0xf] %v1566
        %1696 = vst [vmem:[%s1637 + $0x1a4] sm:$0xff] %v1567
        %1697 = vst [vmem:[%s1637 + $0x1ac] sm:$0xf] %v1568
        %1698 = vst [vmem:[%s1637 + $0x1b0] sm:$0xff] %v1569
        %1699 = vst [vmem:[%s1637 + $0x1b8] sm:$0xf] %v1570
        %1700 = vst [vmem:[%s1637 + $0x1bc] sm:$0xff] %v1571
        %1701 = vst [vmem:[%s1637 + $0x1c4] sm:$0xf] %v1572
        %v1702 = vld [vmem:[#allocation2] sm:$0xff]
        %v1703 = vld [vmem:[#allocation2 + $0x8] sm:$0xf]
        %v1704 = vld [vmem:[#allocation2 + $0xc] sm:$0xff]
        %v1705 = vld [vmem:[#allocation2 + $0x14] sm:$0xf]
        %v1706 = vld [vmem:[#allocation2 + $0x18] sm:$0xff]
        %v1707 = vld [vmem:[#allocation2 + $0x20] sm:$0xf]
        %v1708 = vld [vmem:[#allocation2 + $0x24] sm:$0xff]
        %v1709 = vld [vmem:[#allocation2 + $0x2c] sm:$0xf]
        %v1710 = vld [vmem:[#allocation2 + $0x30] sm:$0xff]
        %v1711 = vld [vmem:[#allocation2 + $0x38] sm:$0xf]
        %v1712 = vld [vmem:[#allocation2 + $0x3c] sm:$0xff]
        %v1713 = vld [vmem:[#allocation2 + $0x44] sm:$0xf]
        %v1714 = vld [vmem:[#allocation2 + $0x48] sm:$0xff]
        %v1715 = vld [vmem:[#allocation2 + $0x50] sm:$0xf]
        %v1716 = vld [vmem:[#allocation2 + $0x54] sm:$0xff]
        %v1717 = vld [vmem:[#allocation2 + $0x5c] sm:$0xf]
        %v1718 = vld [vmem:[#allocation2 + $0x78] sm:$0xff]
        %v1719 = vld [vmem:[#allocation2 + $0x80] sm:$0xf]
        %v1720 = vld [vmem:[#allocation2 + $0x84] sm:$0xff]
        %v1721 = vld [vmem:[#allocation2 + $0x8c] sm:$0xf]
        %v1722 = vld [vmem:[#allocation2 + $0x90] sm:$0xff]
        %v1723 = vld [vmem:[#allocation2 + $0x98] sm:$0xf]
        %v1724 = vld [vmem:[#allocation2 + $0x9c] sm:$0xff]
        %v1725 = vld [vmem:[#allocation2 + $0xa4] sm:$0xf]
        %v1726 = vld [vmem:[#allocation2 + $0xa8] sm:$0xff]
        %v1727 = vld [vmem:[#allocation2 + $0xb0] sm:$0xf]
        %v1728 = vld [vmem:[#allocation2 + $0xb4] sm:$0xff]
        %v1729 = vld [vmem:[#allocation2 + $0xbc] sm:$0xf]
        %v1730 = vld [vmem:[#allocation2 + $0xc0] sm:$0xff]
        %v1731 = vld [vmem:[#allocation2 + $0xc8] sm:$0xf]
        %v1732 = vld [vmem:[#allocation2 + $0xcc] sm:$0xff]
        %v1733 = vld [vmem:[#allocation2 + $0xd4] sm:$0xf]
        %v1734 = vld [vmem:[#allocation2 + $0xf0] sm:$0xff]
        %v1735 = vld [vmem:[#allocation2 + $0xf8] sm:$0xf]
        %v1736 = vld [vmem:[#allocation2 + $0xfc] sm:$0xff]
        %v1737 = vld [vmem:[#allocation2 + $0x104] sm:$0xf]
        %v1738 = vld [vmem:[#allocation2 + $0x108] sm:$0xff]
        %v1739 = vld [vmem:[#allocation2 + $0x110] sm:$0xf]
        %v1740 = vld [vmem:[#allocation2 + $0x114] sm:$0xff]
        %v1741 = vld [vmem:[#allocation2 + $0x11c] sm:$0xf]
        %v1742 = vld [vmem:[#allocation2 + $0x120] sm:$0xff]
        %v1743 = vld [vmem:[#allocation2 + $0x128] sm:$0xf]
        %v1744 = vld [vmem:[#allocation2 + $0x12c] sm:$0xff]
        %v1745 = vld [vmem:[#allocation2 + $0x134] sm:$0xf]
        %v1746 = vld [vmem:[#allocation2 + $0x138] sm:$0xff]
        %v1747 = vld [vmem:[#allocation2 + $0x140] sm:$0xf]
        %v1748 = vld [vmem:[#allocation2 + $0x144] sm:$0xff]
        %v1749 = vld [vmem:[#allocation2 + $0x14c] sm:$0xf]
        %v1750 = vld [vmem:[#allocation2 + $0x168] sm:$0xff]
        %v1751 = vld [vmem:[#allocation2 + $0x170] sm:$0xf]
        %v1752 = vld [vmem:[#allocation2 + $0x174] sm:$0xff]
        %v1753 = vld [vmem:[#allocation2 + $0x17c] sm:$0xf]
        %v1754 = vld [vmem:[#allocation2 + $0x180] sm:$0xff]
        %v1755 = vld [vmem:[#allocation2 + $0x188] sm:$0xf]
        %v1756 = vld [vmem:[#allocation2 + $0x18c] sm:$0xff]
        %v1757 = vld [vmem:[#allocation2 + $0x194] sm:$0xf]
        %v1758 = vld [vmem:[#allocation2 + $0x198] sm:$0xff]
        %v1759 = vld [vmem:[#allocation2 + $0x1a0] sm:$0xf]
        %v1760 = vld [vmem:[#allocation2 + $0x1a4] sm:$0xff]
        %v1761 = vld [vmem:[#allocation2 + $0x1ac] sm:$0xf]
        %v1762 = vld [vmem:[#allocation2 + $0x1b0] sm:$0xff]
        %v1763 = vld [vmem:[#allocation2 + $0x1b8] sm:$0xf]
        %v1764 = vld [vmem:[#allocation2 + $0x1bc] sm:$0xff]
        %v1765 = vld [vmem:[#allocation2 + $0x1c4] sm:$0xf]
        %s1766 = smul.u32 %s32, 3
        %s1767 = smul.u32 %s1766, 48
        %s1768 = smul.addr %s1767, 4
        %s1769 = scalar_lea.vmem [#allocation9], %s1768
        %v1770 = vld [vmem:[%s1769] sm:$0xf]
        %v1771 = vld [vmem:[%s1769 + $0x4] sm:$0xf]
        %v1772 = vld [vmem:[%s1769 + $0x8] sm:$0xf]
        %v1773 = vld [vmem:[%s1769 + $0xc] sm:$0xf]
        %v1774 = vld [vmem:[%s1769 + $0x10] sm:$0xf]
        %v1775 = vld [vmem:[%s1769 + $0x14] sm:$0xf]
        %v1776 = vld [vmem:[%s1769 + $0x18] sm:$0xf]
        %v1777 = vld [vmem:[%s1769 + $0x1c] sm:$0xf]
        %v1778 = vld [vmem:[%s1769 + $0x20] sm:$0xf]
        %v1779 = vld [vmem:[%s1769 + $0x24] sm:$0xf]
        %v1780 = vld [vmem:[%s1769 + $0x28] sm:$0xf]
        %v1781 = vld [vmem:[%s1769 + $0x2c] sm:$0xf]
        %v1782 = vld [vmem:[%s1769 + $0x30] sm:$0xf]
        %v1783 = vld [vmem:[%s1769 + $0x34] sm:$0xf]
        %v1784 = vld [vmem:[%s1769 + $0x38] sm:$0xf]
        %v1785 = vld [vmem:[%s1769 + $0x3c] sm:$0xf]
        %v1786 = vld [vmem:[%s1769 + $0x40] sm:$0xf]
        %v1787 = vld [vmem:[%s1769 + $0x44] sm:$0xf]
        %v1788 = vld [vmem:[%s1769 + $0x48] sm:$0xf]
        %v1789 = vld [vmem:[%s1769 + $0x4c] sm:$0xf]
        %v1790 = vld [vmem:[%s1769 + $0x50] sm:$0xf]
        %v1791 = vld [vmem:[%s1769 + $0x54] sm:$0xf]
        %v1792 = vld [vmem:[%s1769 + $0x58] sm:$0xf]
        %v1793 = vld [vmem:[%s1769 + $0x5c] sm:$0xf]
        %v1794 = vld [vmem:[%s1769 + $0x60] sm:$0xf]
        %v1795 = vld [vmem:[%s1769 + $0x64] sm:$0xf]
        %v1796 = vld [vmem:[%s1769 + $0x68] sm:$0xf]
        %v1797 = vld [vmem:[%s1769 + $0x6c] sm:$0xf]
        %v1798 = vld [vmem:[%s1769 + $0x70] sm:$0xf]
        %v1799 = vld [vmem:[%s1769 + $0x74] sm:$0xf]
        %v1800 = vld [vmem:[%s1769 + $0x78] sm:$0xf]
        %v1801 = vld [vmem:[%s1769 + $0x7c] sm:$0xf]
        %v1802 = vld [vmem:[%s1769 + $0x80] sm:$0xf]
        %v1803 = vld [vmem:[%s1769 + $0x84] sm:$0xf]
        %v1804 = vld [vmem:[%s1769 + $0x88] sm:$0xf]
        %v1805 = vld [vmem:[%s1769 + $0x8c] sm:$0xf]
        %v1806 = vld [vmem:[%s1769 + $0x90] sm:$0xf]
        %v1807 = vld [vmem:[%s1769 + $0x94] sm:$0xf]
        %v1808 = vld [vmem:[%s1769 + $0x98] sm:$0xf]
        %v1809 = vld [vmem:[%s1769 + $0x9c] sm:$0xf]
        %v1810 = vld [vmem:[%s1769 + $0xa0] sm:$0xf]
        %v1811 = vld [vmem:[%s1769 + $0xa4] sm:$0xf]
        %v1812 = vld [vmem:[%s1769 + $0xa8] sm:$0xf]
        %v1813 = vld [vmem:[%s1769 + $0xac] sm:$0xf]
        %v1814 = vld [vmem:[%s1769 + $0xb0] sm:$0xf]
        %v1815 = vld [vmem:[%s1769 + $0xb4] sm:$0xf]
        %v1816 = vld [vmem:[%s1769 + $0xb8] sm:$0xf]
        %v1817 = vld [vmem:[%s1769 + $0xbc] sm:$0xf]
        %v1818 = vld [vmem:[%s1637] sm:$0xff]
        %v1819 = vld [vmem:[%s1637 + $0x8] sm:$0xf]
        %v1820 = vld [vmem:[%s1637 + $0xc] sm:$0xff]
        %v1821 = vld [vmem:[%s1637 + $0x14] sm:$0xf]
        %v1822 = vld [vmem:[%s1637 + $0x18] sm:$0xff]
        %v1823 = vld [vmem:[%s1637 + $0x20] sm:$0xf]
        %v1824 = vld [vmem:[%s1637 + $0x24] sm:$0xff]
        %v1825 = vld [vmem:[%s1637 + $0x2c] sm:$0xf]
        %v1826 = vld [vmem:[%s1637 + $0x30] sm:$0xff]
        %v1827 = vld [vmem:[%s1637 + $0x38] sm:$0xf]
        %v1828 = vld [vmem:[%s1637 + $0x3c] sm:$0xff]
        %v1829 = vld [vmem:[%s1637 + $0x44] sm:$0xf]
        %v1830 = vld [vmem:[%s1637 + $0x48] sm:$0xff]
        %v1831 = vld [vmem:[%s1637 + $0x50] sm:$0xf]
        %v1832 = vld [vmem:[%s1637 + $0x54] sm:$0xff]
        %v1833 = vld [vmem:[%s1637 + $0x5c] sm:$0xf]
        %v1834 = vld [vmem:[%s1637 + $0x78] sm:$0xff]
        %v1835 = vld [vmem:[%s1637 + $0x80] sm:$0xf]
        %v1836 = vld [vmem:[%s1637 + $0x84] sm:$0xff]
        %v1837 = vld [vmem:[%s1637 + $0x8c] sm:$0xf]
        %v1838 = vld [vmem:[%s1637 + $0x90] sm:$0xff]
        %v1839 = vld [vmem:[%s1637 + $0x98] sm:$0xf]
        %v1840 = vld [vmem:[%s1637 + $0x9c] sm:$0xff]
        %v1841 = vld [vmem:[%s1637 + $0xa4] sm:$0xf]
        %v1842 = vld [vmem:[%s1637 + $0xa8] sm:$0xff]
        %v1843 = vld [vmem:[%s1637 + $0xb0] sm:$0xf]
        %v1844 = vld [vmem:[%s1637 + $0xb4] sm:$0xff]
        %v1845 = vld [vmem:[%s1637 + $0xbc] sm:$0xf]
        %v1846 = vld [vmem:[%s1637 + $0xc0] sm:$0xff]
        %v1847 = vld [vmem:[%s1637 + $0xc8] sm:$0xf]
        %v1848 = vld [vmem:[%s1637 + $0xcc] sm:$0xff]
        %v1849 = vld [vmem:[%s1637 + $0xd4] sm:$0xf]
        %v1850 = vld [vmem:[%s1637 + $0xf0] sm:$0xff]
        %v1851 = vld [vmem:[%s1637 + $0xf8] sm:$0xf]
        %v1852 = vld [vmem:[%s1637 + $0xfc] sm:$0xff]
        %v1853 = vld [vmem:[%s1637 + $0x104] sm:$0xf]
        %v1854 = vld [vmem:[%s1637 + $0x108] sm:$0xff]
        %v1855 = vld [vmem:[%s1637 + $0x110] sm:$0xf]
        %v1856 = vld [vmem:[%s1637 + $0x114] sm:$0xff]
        %v1857 = vld [vmem:[%s1637 + $0x11c] sm:$0xf]
        %v1858 = vld [vmem:[%s1637 + $0x120] sm:$0xff]
        %v1859 = vld [vmem:[%s1637 + $0x128] sm:$0xf]
        %v1860 = vld [vmem:[%s1637 + $0x12c] sm:$0xff]
        %v1861 = vld [vmem:[%s1637 + $0x134] sm:$0xf]
        %v1862 = vld [vmem:[%s1637 + $0x138] sm:$0xff]
        %v1863 = vld [vmem:[%s1637 + $0x140] sm:$0xf]
        %v1864 = vld [vmem:[%s1637 + $0x144] sm:$0xff]
        %v1865 = vld [vmem:[%s1637 + $0x14c] sm:$0xf]
        %v1866 = vld [vmem:[%s1637 + $0x168] sm:$0xff]
        %v1867 = vld [vmem:[%s1637 + $0x170] sm:$0xf]
        %v1868 = vld [vmem:[%s1637 + $0x174] sm:$0xff]
        %v1869 = vld [vmem:[%s1637 + $0x17c] sm:$0xf]
        %v1870 = vld [vmem:[%s1637 + $0x180] sm:$0xff]
        %v1871 = vld [vmem:[%s1637 + $0x188] sm:$0xf]
        %v1872 = vld [vmem:[%s1637 + $0x18c] sm:$0xff]
        %v1873 = vld [vmem:[%s1637 + $0x194] sm:$0xf]
        %v1874 = vld [vmem:[%s1637 + $0x198] sm:$0xff]
        %v1875 = vld [vmem:[%s1637 + $0x1a0] sm:$0xf]
        %v1876 = vld [vmem:[%s1637 + $0x1a4] sm:$0xff]
        %v1877 = vld [vmem:[%s1637 + $0x1ac] sm:$0xf]
        %v1878 = vld [vmem:[%s1637 + $0x1b0] sm:$0xff]
        %v1879 = vld [vmem:[%s1637 + $0x1b8] sm:$0xf]
        %v1880 = vld [vmem:[%s1637 + $0x1bc] sm:$0xff]
        %v1881 = vld [vmem:[%s1637 + $0x1c4] sm:$0xf]
        %s1882 = sadd.s32 %s1766, 1
        %s1883 = smul.u32 %s1882, 48
        %s1884 = smul.addr %s1883, 4
        %s1885 = scalar_lea.vmem [#allocation9], %s1884
        %v1886 = vld [vmem:[%s1885] sm:$0xf]
        %v1887 = vld [vmem:[%s1885 + $0x4] sm:$0xf]
        %v1888 = vld [vmem:[%s1885 + $0x8] sm:$0xf]
        %v1889 = vld [vmem:[%s1885 + $0xc] sm:$0xf]
        %v1890 = vld [vmem:[%s1885 + $0x10] sm:$0xf]
        %v1891 = vld [vmem:[%s1885 + $0x14] sm:$0xf]
        %v1892 = vld [vmem:[%s1885 + $0x18] sm:$0xf]
        %v1893 = vld [vmem:[%s1885 + $0x1c] sm:$0xf]
        %v1894 = vld [vmem:[%s1885 + $0x20] sm:$0xf]
        %v1895 = vld [vmem:[%s1885 + $0x24] sm:$0xf]
        %v1896 = vld [vmem:[%s1885 + $0x28] sm:$0xf]
        %v1897 = vld [vmem:[%s1885 + $0x2c] sm:$0xf]
        %v1898 = vld [vmem:[%s1885 + $0x30] sm:$0xf]
        %v1899 = vld [vmem:[%s1885 + $0x34] sm:$0xf]
        %v1900 = vld [vmem:[%s1885 + $0x38] sm:$0xf]
        %v1901 = vld [vmem:[%s1885 + $0x3c] sm:$0xf]
        %v1902 = vld [vmem:[%s1885 + $0x40] sm:$0xf]
        %v1903 = vld [vmem:[%s1885 + $0x44] sm:$0xf]
        %v1904 = vld [vmem:[%s1885 + $0x48] sm:$0xf]
        %v1905 = vld [vmem:[%s1885 + $0x4c] sm:$0xf]
        %v1906 = vld [vmem:[%s1885 + $0x50] sm:$0xf]
        %v1907 = vld [vmem:[%s1885 + $0x54] sm:$0xf]
        %v1908 = vld [vmem:[%s1885 + $0x58] sm:$0xf]
        %v1909 = vld [vmem:[%s1885 + $0x5c] sm:$0xf]
        %v1910 = vld [vmem:[%s1885 + $0x60] sm:$0xf]
        %v1911 = vld [vmem:[%s1885 + $0x64] sm:$0xf]
        %v1912 = vld [vmem:[%s1885 + $0x68] sm:$0xf]
        %v1913 = vld [vmem:[%s1885 + $0x6c] sm:$0xf]
        %v1914 = vld [vmem:[%s1885 + $0x70] sm:$0xf]
        %v1915 = vld [vmem:[%s1885 + $0x74] sm:$0xf]
        %v1916 = vld [vmem:[%s1885 + $0x78] sm:$0xf]
        %v1917 = vld [vmem:[%s1885 + $0x7c] sm:$0xf]
        %v1918 = vld [vmem:[%s1885 + $0x80] sm:$0xf]
        %v1919 = vld [vmem:[%s1885 + $0x84] sm:$0xf]
        %v1920 = vld [vmem:[%s1885 + $0x88] sm:$0xf]
        %v1921 = vld [vmem:[%s1885 + $0x8c] sm:$0xf]
        %v1922 = vld [vmem:[%s1885 + $0x90] sm:$0xf]
        %v1923 = vld [vmem:[%s1885 + $0x94] sm:$0xf]
        %v1924 = vld [vmem:[%s1885 + $0x98] sm:$0xf]
        %v1925 = vld [vmem:[%s1885 + $0x9c] sm:$0xf]
        %v1926 = vld [vmem:[%s1885 + $0xa0] sm:$0xf]
        %v1927 = vld [vmem:[%s1885 + $0xa4] sm:$0xf]
        %v1928 = vld [vmem:[%s1885 + $0xa8] sm:$0xf]
        %v1929 = vld [vmem:[%s1885 + $0xac] sm:$0xf]
        %v1930 = vld [vmem:[%s1885 + $0xb0] sm:$0xf]
        %v1931 = vld [vmem:[%s1885 + $0xb4] sm:$0xf]
        %v1932 = vld [vmem:[%s1885 + $0xb8] sm:$0xf]
        %v1933 = vld [vmem:[%s1885 + $0xbc] sm:$0xf]
        %v1998 = vunpack.c.l.b16 %v1818
        %v1999 = vunpack.c.h.b16 %v1818
        %v2000 = vunpack.c.l.b16 %v1819
        %v2001 = vunpack.c.l.b16 %v1820
        %v2002 = vunpack.c.h.b16 %v1820
        %v2003 = vunpack.c.l.b16 %v1821
        %v2004 = vunpack.c.l.b16 %v1822
        %v2005 = vunpack.c.h.b16 %v1822
        %v2006 = vunpack.c.l.b16 %v1823
        %v2007 = vunpack.c.l.b16 %v1824
        %v2008 = vunpack.c.h.b16 %v1824
        %v2009 = vunpack.c.l.b16 %v1825
        %v2010 = vunpack.c.l.b16 %v1826
        %v2011 = vunpack.c.h.b16 %v1826
        %v2012 = vunpack.c.l.b16 %v1827
        %v2013 = vunpack.c.l.b16 %v1828
        %v2014 = vunpack.c.h.b16 %v1828
        %v2015 = vunpack.c.l.b16 %v1829
        %v2016 = vunpack.c.l.b16 %v1830
        %v2017 = vunpack.c.h.b16 %v1830
        %v2018 = vunpack.c.l.b16 %v1831
        %v2019 = vunpack.c.l.b16 %v1832
        %v2020 = vunpack.c.h.b16 %v1832
        %v2021 = vunpack.c.l.b16 %v1833
        %v2022 = vunpack.c.l.b16 %v1834
        %v2023 = vunpack.c.h.b16 %v1834
        %v2024 = vunpack.c.l.b16 %v1835
        %v2025 = vunpack.c.l.b16 %v1836
        %v2026 = vunpack.c.h.b16 %v1836
        %v2027 = vunpack.c.l.b16 %v1837
        %v2028 = vunpack.c.l.b16 %v1838
        %v2029 = vunpack.c.h.b16 %v1838
        %v2030 = vunpack.c.l.b16 %v1839
        %v2031 = vunpack.c.l.b16 %v1840
        %v2032 = vunpack.c.h.b16 %v1840
        %v2033 = vunpack.c.l.b16 %v1841
        %v2034 = vunpack.c.l.b16 %v1842
        %v2035 = vunpack.c.h.b16 %v1842
        %v2036 = vunpack.c.l.b16 %v1843
        %v2037 = vunpack.c.l.b16 %v1844
        %v2038 = vunpack.c.h.b16 %v1844
        %v2039 = vunpack.c.l.b16 %v1845
        %v2040 = vunpack.c.l.b16 %v1846
        %v2041 = vunpack.c.h.b16 %v1846
        %v2042 = vunpack.c.l.b16 %v1847
        %v2043 = vunpack.c.l.b16 %v1848
        %v2044 = vunpack.c.h.b16 %v1848
        %v2045 = vunpack.c.l.b16 %v1849
        %v2046 = vunpack.c.l.b16 %v1850
        %v2047 = vunpack.c.h.b16 %v1850
        %v2048 = vunpack.c.l.b16 %v1851
        %v2049 = vunpack.c.l.b16 %v1852
        %v2050 = vunpack.c.h.b16 %v1852
        %v2051 = vunpack.c.l.b16 %v1853
        %v2052 = vunpack.c.l.b16 %v1854
        %v2053 = vunpack.c.h.b16 %v1854
        %v2054 = vunpack.c.l.b16 %v1855
        %v2055 = vunpack.c.l.b16 %v1856
        %v2056 = vunpack.c.h.b16 %v1856
        %v2057 = vunpack.c.l.b16 %v1857
        %v2058 = vunpack.c.l.b16 %v1858
        %v2059 = vunpack.c.h.b16 %v1858
        %v2060 = vunpack.c.l.b16 %v1859
        %v2061 = vunpack.c.l.b16 %v1860
        %v2062 = vunpack.c.h.b16 %v1860
        %v2063 = vunpack.c.l.b16 %v1861
        %v2064 = vunpack.c.l.b16 %v1862
        %v2065 = vunpack.c.h.b16 %v1862
        %v2066 = vunpack.c.l.b16 %v1863
        %v2067 = vunpack.c.l.b16 %v1864
        %v2068 = vunpack.c.h.b16 %v1864
        %v2069 = vunpack.c.l.b16 %v1865
        %v2070 = vunpack.c.l.b16 %v1866
        %v2071 = vunpack.c.h.b16 %v1866
        %v2072 = vunpack.c.l.b16 %v1867
        %v2073 = vunpack.c.l.b16 %v1868
        %v2074 = vunpack.c.h.b16 %v1868
        %v2075 = vunpack.c.l.b16 %v1869
        %v2076 = vunpack.c.l.b16 %v1870
        %v2077 = vunpack.c.h.b16 %v1870
        %v2078 = vunpack.c.l.b16 %v1871
        %v2079 = vunpack.c.l.b16 %v1872
        %v2080 = vunpack.c.h.b16 %v1872
        %v2081 = vunpack.c.l.b16 %v1873
        %v2082 = vunpack.c.l.b16 %v1874
        %v2083 = vunpack.c.h.b16 %v1874
        %v2084 = vunpack.c.l.b16 %v1875
        %v2085 = vunpack.c.l.b16 %v1876
        %v2086 = vunpack.c.h.b16 %v1876
        %v2087 = vunpack.c.l.b16 %v1877
        %v2088 = vunpack.c.l.b16 %v1878
        %v2089 = vunpack.c.h.b16 %v1878
        %v2090 = vunpack.c.l.b16 %v1879
        %v2091 = vunpack.c.l.b16 %v1880
        %v2092 = vunpack.c.h.b16 %v1880
        %v2093 = vunpack.c.l.b16 %v1881
        %v2094 = vpack.c.b16 %v2001, %v1998
        %v2095 = vpack.c.b16 %v2002, %v1999
        %v2096 = vpack.c.b16 %v2003, %v2000
        %v2097 = vpack.c.b16 %v2007, %v2004
        %v2098 = vpack.c.b16 %v2008, %v2005
        %v2099 = vpack.c.b16 %v2009, %v2006
        %v2100 = vpack.c.b16 %v2013, %v2010
        %v2101 = vpack.c.b16 %v2014, %v2011
        %v2102 = vpack.c.b16 %v2015, %v2012
        %v2103 = vpack.c.b16 %v2019, %v2016
        %v2104 = vpack.c.b16 %v2020, %v2017
        %v2105 = vpack.c.b16 %v2021, %v2018
        %v2106 = vpack.c.b16 %v2025, %v2022
        %v2107 = vpack.c.b16 %v2026, %v2023
        %v2108 = vpack.c.b16 %v2027, %v2024
        %v2109 = vpack.c.b16 %v2031, %v2028
        %v2110 = vpack.c.b16 %v2032, %v2029
        %v2111 = vpack.c.b16 %v2033, %v2030
        %v2112 = vpack.c.b16 %v2037, %v2034
        %v2113 = vpack.c.b16 %v2038, %v2035
        %v2114 = vpack.c.b16 %v2039, %v2036
        %v2115 = vpack.c.b16 %v2043, %v2040
        %v2116 = vpack.c.b16 %v2044, %v2041
        %v2117 = vpack.c.b16 %v2045, %v2042
        %v2118 = vpack.c.b16 %v2049, %v2046
        %v2119 = vpack.c.b16 %v2050, %v2047
        %v2120 = vpack.c.b16 %v2051, %v2048
        %v2121 = vpack.c.b16 %v2055, %v2052
        %v2122 = vpack.c.b16 %v2056, %v2053
        %v2123 = vpack.c.b16 %v2057, %v2054
        %v2124 = vpack.c.b16 %v2061, %v2058
        %v2125 = vpack.c.b16 %v2062, %v2059
        %v2126 = vpack.c.b16 %v2063, %v2060
        %v2127 = vpack.c.b16 %v2067, %v2064
        %v2128 = vpack.c.b16 %v2068, %v2065
        %v2129 = vpack.c.b16 %v2069, %v2066
        %v2130 = vpack.c.b16 %v2073, %v2070
        %v2131 = vpack.c.b16 %v2074, %v2071
        %v2132 = vpack.c.b16 %v2075, %v2072
        %v2133 = vpack.c.b16 %v2079, %v2076
        %v2134 = vpack.c.b16 %v2080, %v2077
        %v2135 = vpack.c.b16 %v2081, %v2078
        %v2136 = vpack.c.b16 %v2085, %v2082
        %v2137 = vpack.c.b16 %v2086, %v2083
        %v2138 = vpack.c.b16 %v2087, %v2084
        %v2139 = vpack.c.b16 %v2091, %v2088
        %v2140 = vpack.c.b16 %v2092, %v2089
        %v2141 = vpack.c.b16 %v2093, %v2090
        %v2238 = vunpack.c.l.b16 %v1886
        %v2239 = vunpack.c.l.b16 %v1887
        %v2240 = vunpack.c.l.b16 %v1888
        %v2241 = vunpack.c.l.b16 %v1889
        %v2242 = vunpack.c.l.b16 %v1890
        %v2243 = vunpack.c.l.b16 %v1891
        %v2244 = vunpack.c.l.b16 %v1892
        %v2245 = vunpack.c.l.b16 %v1893
        %v2246 = vunpack.c.l.b16 %v1894
        %v2247 = vunpack.c.l.b16 %v1895
        %v2248 = vunpack.c.l.b16 %v1896
        %v2249 = vunpack.c.l.b16 %v1897
        %v2250 = vunpack.c.l.b16 %v1898
        %v2251 = vunpack.c.l.b16 %v1899
        %v2252 = vunpack.c.l.b16 %v1900
        %v2253 = vunpack.c.l.b16 %v1901
        %v2254 = vunpack.c.l.b16 %v1902
        %v2255 = vunpack.c.l.b16 %v1903
        %v2256 = vunpack.c.l.b16 %v1904
        %v2257 = vunpack.c.l.b16 %v1905
        %v2258 = vunpack.c.l.b16 %v1906
        %v2259 = vunpack.c.l.b16 %v1907
        %v2260 = vunpack.c.l.b16 %v1908
        %v2261 = vunpack.c.l.b16 %v1909
        %v2262 = vunpack.c.l.b16 %v1910
        %v2263 = vunpack.c.l.b16 %v1911
        %v2264 = vunpack.c.l.b16 %v1912
        %v2265 = vunpack.c.l.b16 %v1913
        %v2266 = vunpack.c.l.b16 %v1914
        %v2267 = vunpack.c.l.b16 %v1915
        %v2268 = vunpack.c.l.b16 %v1916
        %v2269 = vunpack.c.l.b16 %v1917
        %v2270 = vunpack.c.l.b16 %v1918
        %v2271 = vunpack.c.l.b16 %v1919
        %v2272 = vunpack.c.l.b16 %v1920
        %v2273 = vunpack.c.l.b16 %v1921
        %v2274 = vunpack.c.l.b16 %v1922
        %v2275 = vunpack.c.l.b16 %v1923
        %v2276 = vunpack.c.l.b16 %v1924
        %v2277 = vunpack.c.l.b16 %v1925
        %v2278 = vunpack.c.l.b16 %v1926
        %v2279 = vunpack.c.l.b16 %v1927
        %v2280 = vunpack.c.l.b16 %v1928
        %v2281 = vunpack.c.l.b16 %v1929
        %v2282 = vunpack.c.l.b16 %v1930
        %v2283 = vunpack.c.l.b16 %v1931
        %v2284 = vunpack.c.l.b16 %v1932
        %v2285 = vunpack.c.l.b16 %v1933
        %v2286 = vpack.c.b16 %v2239, %v2238
        %v2287 = vpack.c.b16 %v2241, %v2240
        %v2288 = vpack.c.b16 %v2243, %v2242
        %v2289 = vpack.c.b16 %v2245, %v2244
        %v2290 = vpack.c.b16 %v2247, %v2246
        %v2291 = vpack.c.b16 %v2249, %v2248
        %v2292 = vpack.c.b16 %v2251, %v2250
        %v2293 = vpack.c.b16 %v2253, %v2252
        %v2294 = vpack.c.b16 %v2255, %v2254
        %v2295 = vpack.c.b16 %v2257, %v2256
        %v2296 = vpack.c.b16 %v2259, %v2258
        %v2297 = vpack.c.b16 %v2261, %v2260
        %v2298 = vpack.c.b16 %v2263, %v2262
        %v2299 = vpack.c.b16 %v2265, %v2264
        %v2300 = vpack.c.b16 %v2267, %v2266
        %v2301 = vpack.c.b16 %v2269, %v2268
        %v2302 = vpack.c.b16 %v2271, %v2270
        %v2303 = vpack.c.b16 %v2273, %v2272
        %v2304 = vpack.c.b16 %v2275, %v2274
        %v2305 = vpack.c.b16 %v2277, %v2276
        %v2306 = vpack.c.b16 %v2279, %v2278
        %v2307 = vpack.c.b16 %v2281, %v2280
        %v2308 = vpack.c.b16 %v2283, %v2282
        %v2309 = vpack.c.b16 %v2285, %v2284
        %2334 = vmatprep.subr.bf16.mxu0 0
        %2335 = vmatpush1.bf16.msra.mxu0 %v2286
        %2336 = vmatprep.subr.bf16.mxu0 0
        %2337 = vmatpush1.bf16.msra.mxu0 %v2287
        %2338 = vmatprep.subr.bf16.mxu0 0
        %2339 = vmatpush1.bf16.msra.mxu0 %v2288
        %2340 = vmatprep.subr.bf16.mxu0 0
        %2341 = vmatpush1.bf16.msra.mxu0 %v2289
        %2342 = vmatprep.subr.bf16.mxu0 0
        %2343 = vmatpush1.bf16.msra.mxu0 %v2290
        %2344 = vmatprep.subr.bf16.mxu0 0
        %2345 = vmatpush1.bf16.msra.mxu0 %v2291
        %2346 = vmatprep.subr.bf16.mxu0 0
        %2347 = vmatpush1.bf16.msra.mxu0 %v2292
        %2348 = vmatprep.subr.bf16.mxu0 0
        %2349 = vmatpush1.bf16.msra.mxu0 %v2293
        %2350 = vmatprep.subr.bf16.mxu0 0
        %2351 = vmatpush1.bf16.msra.mxu0 %v2294
        %2352 = vmatprep.subr.bf16.mxu0 0
        %2353 = vmatpush1.bf16.msra.mxu0 %v2295
        %2354 = vmatprep.subr.bf16.mxu0 0
        %2355 = vmatpush1.bf16.msra.mxu0 %v2296
        %2356 = vmatprep.subr.bf16.mxu0 0
        %2357 = vmatpush1.bf16.msra.mxu0 %v2297
        %2358 = vmatprep.subr.bf16.mxu0 0
        %2359 = vmatpush1.bf16.msra.mxu0 %v2298
        %2360 = vmatprep.subr.bf16.mxu0 0
        %2361 = vmatpush1.bf16.msra.mxu0 %v2299
        %2362 = vmatprep.subr.bf16.mxu0 0
        %2363 = vmatpush1.bf16.msra.mxu0 %v2300
        %2364 = vmatprep.subr.bf16.mxu0 0
        %2365 = vmatpush1.bf16.msra.mxu0 %v2301
        %2366 = vmatprep.mubr.bf16.mxu0 %v2095
        %2367 = vmatmul.mubr.bf16.gmra.mrb[0].mxu0 %v2094
        %v2368 = vpop.f32.mrb[0].mxu0
        %v2369 = vadd.f32 0.0, %v2368
        %v2370 = vpop.f32.mrb[0].mxu0
        %v2371 = vpop.f32.mrb[0].mxu0
        %v2372 = vadd.f32 0.0, %v2371
        %v2373 = vpop.f32.mrb[0].mxu0
        %2374 = vmatprep.mubr.bf16.mxu0 %v2098
        %2375 = vmatmul.mubr.bf16.gmra.mrb[0].mxu0 %v2097
        %v2376 = vpop.f32.mrb[0].mxu0
        %v2377 = vadd.f32 0.0, %v2376
        %v2378 = vpop.f32.mrb[0].mxu0
        %v2379 = vpop.f32.mrb[0].mxu0
        %v2380 = vadd.f32 0.0, %v2379
        %v2381 = vpop.f32.mrb[0].mxu0
        %2382 = vmatprep.mubr.bf16.mxu0 %v2101
        %2383 = vmatmul.mubr.bf16.gmra.mrb[0].mxu0 %v2100
        %v2384 = vpop.f32.mrb[0].mxu0
        %v2385 = vadd.f32 0.0, %v2384
        %v2386 = vpop.f32.mrb[0].mxu0
        %v2387 = vpop.f32.mrb[0].mxu0
        %v2388 = vadd.f32 0.0, %v2387
        %v2389 = vpop.f32.mrb[0].mxu0
        %2390 = vmatprep.mubr.bf16.mxu0 %v2104
        %2391 = vmatmul.mubr.bf16.gmra.mrb[0].mxu0 %v2103
        %v2392 = vpop.f32.mrb[0].mxu0
        %v2393 = vadd.f32 0.0, %v2392
        %v2394 = vpop.f32.mrb[0].mxu0
        %v2395 = vpop.f32.mrb[0].mxu0
        %v2396 = vadd.f32 0.0, %v2395
        %v2397 = vpop.f32.mrb[0].mxu0
        %2398 = vmatprep.mubr.bf16.mxu0 %v2107
        %2399 = vmatmul.mubr.bf16.gmra.mrb[0].mxu0 %v2106
        %v2400 = vpop.f32.mrb[0].mxu0
        %v2401 = vadd.f32 0.0, %v2400
        %v2402 = vpop.f32.mrb[0].mxu0
        %v2403 = vpop.f32.mrb[0].mxu0
        %v2404 = vadd.f32 0.0, %v2403
        %v2405 = vpop.f32.mrb[0].mxu0
        %2406 = vmatprep.mubr.bf16.mxu0 %v2110
        %2407 = vmatmul.mubr.bf16.gmra.mrb[0].mxu0 %v2109
        %v2408 = vpop.f32.mrb[0].mxu0
        %v2409 = vadd.f32 0.0, %v2408
        %v2410 = vpop.f32.mrb[0].mxu0
        %v2411 = vpop.f32.mrb[0].mxu0
        %v2412 = vadd.f32 0.0, %v2411
        %v2413 = vpop.f32.mrb[0].mxu0
        %2414 = vmatprep.mubr.bf16.mxu0 %v2113
        %2415 = vmatmul.mubr.bf16.gmra.mrb[0].mxu0 %v2112
        %v2416 = vpop.f32.mrb[0].mxu0
        %v2417 = vadd.f32 0.0, %v2416
        %v2418 = vpop.f32.mrb[0].mxu0
        %v2419 = vpop.f32.mrb[0].mxu0
        %v2420 = vadd.f32 0.0, %v2419
        %v2421 = vpop.f32.mrb[0].mxu0
        %2422 = vmatprep.mubr.bf16.mxu0 %v2116
        %2423 = vmatmul.mubr.bf16.gmra.mrb[0].mxu0 %v2115
        %v2424 = vpop.f32.mrb[0].mxu0
        %v2425 = vadd.f32 0.0, %v2424
        %v2426 = vpop.f32.mrb[0].mxu0
        %v2427 = vpop.f32.mrb[0].mxu0
        %v2428 = vadd.f32 0.0, %v2427
        %v2429 = vpop.f32.mrb[0].mxu0
        %2430 = vmatprep.mubr.bf16.mxu0 %v2119
        %2431 = vmatmul.mubr.bf16.gmra.mrb[0].mxu0 %v2118
        %v2432 = vpop.f32.mrb[0].mxu0
        %v2433 = vadd.f32 0.0, %v2432
        %v2434 = vpop.f32.mrb[0].mxu0
        %v2435 = vpop.f32.mrb[0].mxu0
        %v2436 = vadd.f32 0.0, %v2435
        %v2437 = vpop.f32.mrb[0].mxu0
        %2438 = vmatprep.mubr.bf16.mxu0 %v2122
        %2439 = vmatmul.mubr.bf16.gmra.mrb[0].mxu0 %v2121
        %v2440 = vpop.f32.mrb[0].mxu0
        %v2441 = vadd.f32 0.0, %v2440
        %v2442 = vpop.f32.mrb[0].mxu0
        %v2443 = vpop.f32.mrb[0].mxu0
        %v2444 = vadd.f32 0.0, %v2443
        %v2445 = vpop.f32.mrb[0].mxu0
        %2446 = vmatprep.mubr.bf16.mxu0 %v2125
        %2447 = vmatmul.mubr.bf16.gmra.mrb[0].mxu0 %v2124
        %v2448 = vpop.f32.mrb[0].mxu0
        %v2449 = vadd.f32 0.0, %v2448
        %v2450 = vpop.f32.mrb[0].mxu0
        %v2451 = vpop.f32.mrb[0].mxu0
        %v2452 = vadd.f32 0.0, %v2451
        %v2453 = vpop.f32.mrb[0].mxu0
        %2454 = vmatprep.mubr.bf16.mxu0 %v2128
        %2455 = vmatmul.mubr.bf16.gmra.mrb[0].mxu0 %v2127
        %v2456 = vpop.f32.mrb[0].mxu0
        %v2457 = vadd.f32 0.0, %v2456
        %v2458 = vpop.f32.mrb[0].mxu0
        %v2459 = vpop.f32.mrb[0].mxu0
        %v2460 = vadd.f32 0.0, %v2459
        %v2461 = vpop.f32.mrb[0].mxu0
        %2462 = vmatprep.mubr.bf16.mxu0 %v2131
        %2463 = vmatmul.mubr.bf16.gmra.mrb[0].mxu0 %v2130
        %v2464 = vpop.f32.mrb[0].mxu0
        %v2465 = vadd.f32 0.0, %v2464
        %v2466 = vpop.f32.mrb[0].mxu0
        %v2467 = vpop.f32.mrb[0].mxu0
        %v2468 = vadd.f32 0.0, %v2467
        %v2469 = vpop.f32.mrb[0].mxu0
        %2470 = vmatprep.mubr.bf16.mxu0 %v2134
        %2471 = vmatmul.mubr.bf16.gmra.mrb[0].mxu0 %v2133
        %v2472 = vpop.f32.mrb[0].mxu0
        %v2473 = vadd.f32 0.0, %v2472
        %v2474 = vpop.f32.mrb[0].mxu0
        %v2475 = vpop.f32.mrb[0].mxu0
        %v2476 = vadd.f32 0.0, %v2475
        %v2477 = vpop.f32.mrb[0].mxu0
        %2478 = vmatprep.mubr.bf16.mxu0 %v2137
        %2479 = vmatmul.mubr.bf16.gmra.mrb[0].mxu0 %v2136
        %v2480 = vpop.f32.mrb[0].mxu0
        %v2481 = vadd.f32 0.0, %v2480
        %v2482 = vpop.f32.mrb[0].mxu0
        %v2483 = vpop.f32.mrb[0].mxu0
        %v2484 = vadd.f32 0.0, %v2483
        %v2485 = vpop.f32.mrb[0].mxu0
        %2486 = vmatprep.mubr.bf16.mxu0 %v2140
        %2487 = vmatmul.mubr.bf16.gmra.mrb[0].mxu0 %v2139
        %v2488 = vpop.f32.mrb[0].mxu0
        %v2489 = vadd.f32 0.0, %v2488
        %v2490 = vpop.f32.mrb[0].mxu0
        %v2491 = vpop.f32.mrb[0].mxu0
        %v2492 = vadd.f32 0.0, %v2491
        %v2493 = vpop.f32.mrb[0].mxu0
        %2494 = vdwg.mxu0
        %2495 = vmatprep.subr.bf16.mxu0 0
        %2496 = vmatpush1.bf16.msra.mxu0 %v2302
        %2497 = vmatprep.subr.bf16.mxu0 0
        %2498 = vmatpush1.bf16.msra.mxu0 %v2303
        %2499 = vmatprep.subr.bf16.mxu0 0
        %2500 = vmatpush1.bf16.msra.mxu0 %v2304
        %2501 = vmatprep.subr.bf16.mxu0 0
        %2502 = vmatpush1.bf16.msra.mxu0 %v2305
        %2503 = vmatprep.subr.bf16.mxu0 0
        %2504 = vmatpush1.bf16.msra.mxu0 %v2306
        %2505 = vmatprep.subr.bf16.mxu0 0
        %2506 = vmatpush1.bf16.msra.mxu0 %v2307
        %2507 = vmatprep.subr.bf16.mxu0 0
        %2508 = vmatpush1.bf16.msra.mxu0 %v2308
        %2509 = vmatprep.subr.bf16.mxu0 0
        %2510 = vmatpush1.bf16.msra.mxu0 %v2309
        %2511 = vmatprep.subr.bf16.mxu0 0
        %2512 = vmatpush1.bf16.msra.mxu0 0
        %2513 = vmatprep.subr.bf16.mxu0 0
        %2514 = vmatpush1.bf16.msra.mxu0 0
        %2515 = vmatprep.subr.bf16.mxu0 0
        %2516 = vmatpush1.bf16.msra.mxu0 0
        %2517 = vmatprep.subr.bf16.mxu0 0
        %2518 = vmatpush1.bf16.msra.mxu0 0
        %2519 = vmatprep.subr.bf16.mxu0 0
        %2520 = vmatpush1.bf16.msra.mxu0 0
        %2521 = vmatprep.subr.bf16.mxu0 0
        %2522 = vmatpush1.bf16.msra.mxu0 0
        %2523 = vmatprep.subr.bf16.mxu0 0
        %2524 = vmatpush1.bf16.msra.mxu0 0
        %2525 = vmatprep.subr.bf16.mxu0 0
        %2526 = vmatpush1.bf16.msra.mxu0 0
        %2527 = vmatprep.mubr.bf16.mxu0 0
        %2528 = vmatmul.mubr.bf16.gmra.mrb[0].mxu0 %v2096
        %v2529 = vpop.f32.mrb[0].mxu0
        %v2530 = vadd.f32 %v2369, %v2529
        %v2531 = vpop.f32.mrb[0].mxu0
        %v2532 = vpop.f32.mrb[0].mxu0
        %v2533 = vadd.f32 %v2372, %v2532
        %v2534 = vpop.f32.mrb[0].mxu0
        %2535 = vmatprep.mubr.bf16.mxu0 0
        %2536 = vmatmul.mubr.bf16.gmra.mrb[0].mxu0 %v2099
        %v2537 = vpop.f32.mrb[0].mxu0
        %v2538 = vadd.f32 %v2377, %v2537
        %v2539 = vpop.f32.mrb[0].mxu0
        %v2540 = vpop.f32.mrb[0].mxu0
        %v2541 = vadd.f32 %v2380, %v2540
        %v2542 = vpop.f32.mrb[0].mxu0
        %2543 = vmatprep.mubr.bf16.mxu0 0
        %2544 = vmatmul.mubr.bf16.gmra.mrb[0].mxu0 %v2102
        %v2545 = vpop.f32.mrb[0].mxu0
        %v2546 = vadd.f32 %v2385, %v2545
        %v2547 = vpop.f32.mrb[0].mxu0
        %v2548 = vpop.f32.mrb[0].mxu0
        %v2549 = vadd.f32 %v2388, %v2548
        %v2550 = vpop.f32.mrb[0].mxu0
        %2551 = vmatprep.mubr.bf16.mxu0 0
        %2552 = vmatmul.mubr.bf16.gmra.mrb[0].mxu0 %v2105
        %v2553 = vpop.f32.mrb[0].mxu0
        %v2554 = vadd.f32 %v2393, %v2553
        %v2555 = vpop.f32.mrb[0].mxu0
        %v2556 = vpop.f32.mrb[0].mxu0
        %v2557 = vadd.f32 %v2396, %v2556
        %v2558 = vpop.f32.mrb[0].mxu0
        %2559 = vmatprep.mubr.bf16.mxu0 0
        %2560 = vmatmul.mubr.bf16.gmra.mrb[0].mxu0 %v2108
        %v2561 = vpop.f32.mrb[0].mxu0
        %v2562 = vadd.f32 %v2401, %v2561
        %v2563 = vpop.f32.mrb[0].mxu0
        %v2564 = vpop.f32.mrb[0].mxu0
        %v2565 = vadd.f32 %v2404, %v2564
        %v2566 = vpop.f32.mrb[0].mxu0
        %2567 = vmatprep.mubr.bf16.mxu0 0
        %2568 = vmatmul.mubr.bf16.gmra.mrb[0].mxu0 %v2111
        %v2569 = vpop.f32.mrb[0].mxu0
        %v2570 = vadd.f32 %v2409, %v2569
        %v2571 = vpop.f32.mrb[0].mxu0
        %v2572 = vpop.f32.mrb[0].mxu0
        %v2573 = vadd.f32 %v2412, %v2572
        %v2574 = vpop.f32.mrb[0].mxu0
        %2575 = vmatprep.mubr.bf16.mxu0 0
        %2576 = vmatmul.mubr.bf16.gmra.mrb[0].mxu0 %v2114
        %v2577 = vpop.f32.mrb[0].mxu0
        %v2578 = vadd.f32 %v2417, %v2577
        %v2579 = vpop.f32.mrb[0].mxu0
        %v2580 = vpop.f32.mrb[0].mxu0
        %v2581 = vadd.f32 %v2420, %v2580
        %v2582 = vpop.f32.mrb[0].mxu0
        %2583 = vmatprep.mubr.bf16.mxu0 0
        %2584 = vmatmul.mubr.bf16.gmra.mrb[0].mxu0 %v2117
        %v2585 = vpop.f32.mrb[0].mxu0
        %v2586 = vadd.f32 %v2425, %v2585
        %v2587 = vpop.f32.mrb[0].mxu0
        %v2588 = vpop.f32.mrb[0].mxu0
        %v2589 = vadd.f32 %v2428, %v2588
        %v2590 = vpop.f32.mrb[0].mxu0
        %2591 = vmatprep.mubr.bf16.mxu0 0
        %2592 = vmatmul.mubr.bf16.gmra.mrb[0].mxu0 %v2120
        %v2593 = vpop.f32.mrb[0].mxu0
        %v2594 = vadd.f32 %v2433, %v2593
        %v2595 = vpop.f32.mrb[0].mxu0
        %v2596 = vpop.f32.mrb[0].mxu0
        %v2597 = vadd.f32 %v2436, %v2596
        %v2598 = vpop.f32.mrb[0].mxu0
        %2599 = vmatprep.mubr.bf16.mxu0 0
        %2600 = vmatmul.mubr.bf16.gmra.mrb[0].mxu0 %v2123
        %v2601 = vpop.f32.mrb[0].mxu0
        %v2602 = vadd.f32 %v2441, %v2601
        %v2603 = vpop.f32.mrb[0].mxu0
        %v2604 = vpop.f32.mrb[0].mxu0
        %v2605 = vadd.f32 %v2444, %v2604
        %v2606 = vpop.f32.mrb[0].mxu0
        %2607 = vmatprep.mubr.bf16.mxu0 0
        %2608 = vmatmul.mubr.bf16.gmra.mrb[0].mxu0 %v2126
        %v2609 = vpop.f32.mrb[0].mxu0
        %v2610 = vadd.f32 %v2449, %v2609
        %v2611 = vpop.f32.mrb[0].mxu0
        %v2612 = vpop.f32.mrb[0].mxu0
        %v2613 = vadd.f32 %v2452, %v2612
        %v2614 = vpop.f32.mrb[0].mxu0
        %2615 = vmatprep.mubr.bf16.mxu0 0
        %2616 = vmatmul.mubr.bf16.gmra.mrb[0].mxu0 %v2129
        %v2617 = vpop.f32.mrb[0].mxu0
        %v2618 = vadd.f32 %v2457, %v2617
        %v2619 = vpop.f32.mrb[0].mxu0
        %v2620 = vpop.f32.mrb[0].mxu0
        %v2621 = vadd.f32 %v2460, %v2620
        %v2622 = vpop.f32.mrb[0].mxu0
        %2623 = vmatprep.mubr.bf16.mxu0 0
        %2624 = vmatmul.mubr.bf16.gmra.mrb[0].mxu0 %v2132
        %v2625 = vpop.f32.mrb[0].mxu0
        %v2626 = vadd.f32 %v2465, %v2625
        %v2627 = vpop.f32.mrb[0].mxu0
        %v2628 = vpop.f32.mrb[0].mxu0
        %v2629 = vadd.f32 %v2468, %v2628
        %v2630 = vpop.f32.mrb[0].mxu0
        %2631 = vmatprep.mubr.bf16.mxu0 0
        %2632 = vmatmul.mubr.bf16.gmra.mrb[0].mxu0 %v2135
        %v2633 = vpop.f32.mrb[0].mxu0
        %v2634 = vadd.f32 %v2473, %v2633
        %v2635 = vpop.f32.mrb[0].mxu0
        %v2636 = vpop.f32.mrb[0].mxu0
        %v2637 = vadd.f32 %v2476, %v2636
        %v2638 = vpop.f32.mrb[0].mxu0
        %2639 = vmatprep.mubr.bf16.mxu0 0
        %2640 = vmatmul.mubr.bf16.gmra.mrb[0].mxu0 %v2138
        %v2641 = vpop.f32.mrb[0].mxu0
        %v2642 = vadd.f32 %v2481, %v2641
        %v2643 = vpop.f32.mrb[0].mxu0
        %v2644 = vpop.f32.mrb[0].mxu0
        %v2645 = vadd.f32 %v2484, %v2644
        %v2646 = vpop.f32.mrb[0].mxu0
        %2647 = vmatprep.mubr.bf16.mxu0 0
        %2648 = vmatmul.mubr.bf16.gmra.mrb[0].mxu0 %v2141
        %v2649 = vpop.f32.mrb[0].mxu0
        %v2650 = vadd.f32 %v2489, %v2649
        %v2651 = vpop.f32.mrb[0].mxu0
        %v2652 = vpop.f32.mrb[0].mxu0
        %v2653 = vadd.f32 %v2492, %v2652
        %v2654 = vpop.f32.mrb[0].mxu0
        %2655 = vdwg.mxu0
        %v2720 = vunpack.c.l.b16 %v1702
        %v2721 = vunpack.c.h.b16 %v1702
        %v2722 = vunpack.c.l.b16 %v1703
        %v2723 = vunpack.c.l.b16 %v1704
        %v2724 = vunpack.c.h.b16 %v1704
        %v2725 = vunpack.c.l.b16 %v1705
        %v2726 = vunpack.c.l.b16 %v1706
        %v2727 = vunpack.c.h.b16 %v1706
        %v2728 = vunpack.c.l.b16 %v1707
        %v2729 = vunpack.c.l.b16 %v1708
        %v2730 = vunpack.c.h.b16 %v1708
        %v2731 = vunpack.c.l.b16 %v1709
        %v2732 = vunpack.c.l.b16 %v1710
        %v2733 = vunpack.c.h.b16 %v1710
        %v2734 = vunpack.c.l.b16 %v1711
        %v2735 = vunpack.c.l.b16 %v1712
        %v2736 = vunpack.c.h.b16 %v1712
        %v2737 = vunpack.c.l.b16 %v1713
        %v2738 = vunpack.c.l.b16 %v1714
        %v2739 = vunpack.c.h.b16 %v1714
        %v2740 = vunpack.c.l.b16 %v1715
        %v2741 = vunpack.c.l.b16 %v1716
        %v2742 = vunpack.c.h.b16 %v1716
        %v2743 = vunpack.c.l.b16 %v1717
        %v2744 = vunpack.c.l.b16 %v1718
        %v2745 = vunpack.c.h.b16 %v1718
        %v2746 = vunpack.c.l.b16 %v1719
        %v2747 = vunpack.c.l.b16 %v1720
        %v2748 = vunpack.c.h.b16 %v1720
        %v2749 = vunpack.c.l.b16 %v1721
        %v2750 = vunpack.c.l.b16 %v1722
        %v2751 = vunpack.c.h.b16 %v1722
        %v2752 = vunpack.c.l.b16 %v1723
        %v2753 = vunpack.c.l.b16 %v1724
        %v2754 = vunpack.c.h.b16 %v1724
        %v2755 = vunpack.c.l.b16 %v1725
        %v2756 = vunpack.c.l.b16 %v1726
        %v2757 = vunpack.c.h.b16 %v1726
        %v2758 = vunpack.c.l.b16 %v1727
        %v2759 = vunpack.c.l.b16 %v1728
        %v2760 = vunpack.c.h.b16 %v1728
        %v2761 = vunpack.c.l.b16 %v1729
        %v2762 = vunpack.c.l.b16 %v1730
        %v2763 = vunpack.c.h.b16 %v1730
        %v2764 = vunpack.c.l.b16 %v1731
        %v2765 = vunpack.c.l.b16 %v1732
        %v2766 = vunpack.c.h.b16 %v1732
        %v2767 = vunpack.c.l.b16 %v1733
        %v2768 = vunpack.c.l.b16 %v1734
        %v2769 = vunpack.c.h.b16 %v1734
        %v2770 = vunpack.c.l.b16 %v1735
        %v2771 = vunpack.c.l.b16 %v1736
        %v2772 = vunpack.c.h.b16 %v1736
        %v2773 = vunpack.c.l.b16 %v1737
        %v2774 = vunpack.c.l.b16 %v1738
        %v2775 = vunpack.c.h.b16 %v1738
        %v2776 = vunpack.c.l.b16 %v1739
        %v2777 = vunpack.c.l.b16 %v1740
        %v2778 = vunpack.c.h.b16 %v1740
        %v2779 = vunpack.c.l.b16 %v1741
        %v2780 = vunpack.c.l.b16 %v1742
        %v2781 = vunpack.c.h.b16 %v1742
        %v2782 = vunpack.c.l.b16 %v1743
        %v2783 = vunpack.c.l.b16 %v1744
        %v2784 = vunpack.c.h.b16 %v1744
        %v2785 = vunpack.c.l.b16 %v1745
        %v2786 = vunpack.c.l.b16 %v1746
        %v2787 = vunpack.c.h.b16 %v1746
        %v2788 = vunpack.c.l.b16 %v1747
        %v2789 = vunpack.c.l.b16 %v1748
        %v2790 = vunpack.c.h.b16 %v1748
        %v2791 = vunpack.c.l.b16 %v1749
        %v2792 = vunpack.c.l.b16 %v1750
        %v2793 = vunpack.c.h.b16 %v1750
        %v2794 = vunpack.c.l.b16 %v1751
        %v2795 = vunpack.c.l.b16 %v1752
        %v2796 = vunpack.c.h.b16 %v1752
        %v2797 = vunpack.c.l.b16 %v1753
        %v2798 = vunpack.c.l.b16 %v1754
        %v2799 = vunpack.c.h.b16 %v1754
        %v2800 = vunpack.c.l.b16 %v1755
        %v2801 = vunpack.c.l.b16 %v1756
        %v2802 = vunpack.c.h.b16 %v1756
        %v2803 = vunpack.c.l.b16 %v1757
        %v2804 = vunpack.c.l.b16 %v1758
        %v2805 = vunpack.c.h.b16 %v1758
        %v2806 = vunpack.c.l.b16 %v1759
        %v2807 = vunpack.c.l.b16 %v1760
        %v2808 = vunpack.c.h.b16 %v1760
        %v2809 = vunpack.c.l.b16 %v1761
        %v2810 = vunpack.c.l.b16 %v1762
        %v2811 = vunpack.c.h.b16 %v1762
        %v2812 = vunpack.c.l.b16 %v1763
        %v2813 = vunpack.c.l.b16 %v1764
        %v2814 = vunpack.c.h.b16 %v1764
        %v2815 = vunpack.c.l.b16 %v1765
        %v2816 = vpack.c.b16 %v2723, %v2720
        %v2817 = vpack.c.b16 %v2724, %v2721
        %v2818 = vpack.c.b16 %v2725, %v2722
        %v2819 = vpack.c.b16 %v2729, %v2726
        %v2820 = vpack.c.b16 %v2730, %v2727
        %v2821 = vpack.c.b16 %v2731, %v2728
        %v2822 = vpack.c.b16 %v2735, %v2732
        %v2823 = vpack.c.b16 %v2736, %v2733
        %v2824 = vpack.c.b16 %v2737, %v2734
        %v2825 = vpack.c.b16 %v2741, %v2738
        %v2826 = vpack.c.b16 %v2742, %v2739
        %v2827 = vpack.c.b16 %v2743, %v2740
        %v2828 = vpack.c.b16 %v2747, %v2744
        %v2829 = vpack.c.b16 %v2748, %v2745
        %v2830 = vpack.c.b16 %v2749, %v2746
        %v2831 = vpack.c.b16 %v2753, %v2750
        %v2832 = vpack.c.b16 %v2754, %v2751
        %v2833 = vpack.c.b16 %v2755, %v2752
        %v2834 = vpack.c.b16 %v2759, %v2756
        %v2835 = vpack.c.b16 %v2760, %v2757
        %v2836 = vpack.c.b16 %v2761, %v2758
        %v2837 = vpack.c.b16 %v2765, %v2762
        %v2838 = vpack.c.b16 %v2766, %v2763
        %v2839 = vpack.c.b16 %v2767, %v2764
        %v2840 = vpack.c.b16 %v2771, %v2768
        %v2841 = vpack.c.b16 %v2772, %v2769
        %v2842 = vpack.c.b16 %v2773, %v2770
        %v2843 = vpack.c.b16 %v2777, %v2774
        %v2844 = vpack.c.b16 %v2778, %v2775
        %v2845 = vpack.c.b16 %v2779, %v2776
        %v2846 = vpack.c.b16 %v2783, %v2780
        %v2847 = vpack.c.b16 %v2784, %v2781
        %v2848 = vpack.c.b16 %v2785, %v2782
        %v2849 = vpack.c.b16 %v2789, %v2786
        %v2850 = vpack.c.b16 %v2790, %v2787
        %v2851 = vpack.c.b16 %v2791, %v2788
        %v2852 = vpack.c.b16 %v2795, %v2792
        %v2853 = vpack.c.b16 %v2796, %v2793
        %v2854 = vpack.c.b16 %v2797, %v2794
        %v2855 = vpack.c.b16 %v2801, %v2798
        %v2856 = vpack.c.b16 %v2802, %v2799
        %v2857 = vpack.c.b16 %v2803, %v2800
        %v2858 = vpack.c.b16 %v2807, %v2804
        %v2859 = vpack.c.b16 %v2808, %v2805
        %v2860 = vpack.c.b16 %v2809, %v2806
        %v2861 = vpack.c.b16 %v2813, %v2810
        %v2862 = vpack.c.b16 %v2814, %v2811
        %v2863 = vpack.c.b16 %v2815, %v2812
        %v2960 = vunpack.c.l.b16 %v1770
        %v2961 = vunpack.c.l.b16 %v1771
        %v2962 = vunpack.c.l.b16 %v1772
        %v2963 = vunpack.c.l.b16 %v1773
        %v2964 = vunpack.c.l.b16 %v1774
        %v2965 = vunpack.c.l.b16 %v1775
        %v2966 = vunpack.c.l.b16 %v1776
        %v2967 = vunpack.c.l.b16 %v1777
        %v2968 = vunpack.c.l.b16 %v1778
        %v2969 = vunpack.c.l.b16 %v1779
        %v2970 = vunpack.c.l.b16 %v1780
        %v2971 = vunpack.c.l.b16 %v1781
        %v2972 = vunpack.c.l.b16 %v1782
        %v2973 = vunpack.c.l.b16 %v1783
        %v2974 = vunpack.c.l.b16 %v1784
        %v2975 = vunpack.c.l.b16 %v1785
        %v2976 = vunpack.c.l.b16 %v1786
        %v2977 = vunpack.c.l.b16 %v1787
        %v2978 = vunpack.c.l.b16 %v1788
        %v2979 = vunpack.c.l.b16 %v1789
        %v2980 = vunpack.c.l.b16 %v1790
        %v2981 = vunpack.c.l.b16 %v1791
        %v2982 = vunpack.c.l.b16 %v1792
        %v2983 = vunpack.c.l.b16 %v1793
        %v2984 = vunpack.c.l.b16 %v1794
        %v2985 = vunpack.c.l.b16 %v1795
        %v2986 = vunpack.c.l.b16 %v1796
        %v2987 = vunpack.c.l.b16 %v1797
        %v2988 = vunpack.c.l.b16 %v1798
        %v2989 = vunpack.c.l.b16 %v1799
        %v2990 = vunpack.c.l.b16 %v1800
        %v2991 = vunpack.c.l.b16 %v1801
        %v2992 = vunpack.c.l.b16 %v1802
        %v2993 = vunpack.c.l.b16 %v1803
        %v2994 = vunpack.c.l.b16 %v1804
        %v2995 = vunpack.c.l.b16 %v1805
        %v2996 = vunpack.c.l.b16 %v1806
        %v2997 = vunpack.c.l.b16 %v1807
        %v2998 = vunpack.c.l.b16 %v1808
        %v2999 = vunpack.c.l.b16 %v1809
        %v3000 = vunpack.c.l.b16 %v1810
        %v3001 = vunpack.c.l.b16 %v1811
        %v3002 = vunpack.c.l.b16 %v1812
        %v3003 = vunpack.c.l.b16 %v1813
        %v3004 = vunpack.c.l.b16 %v1814
        %v3005 = vunpack.c.l.b16 %v1815
        %v3006 = vunpack.c.l.b16 %v1816
        %v3007 = vunpack.c.l.b16 %v1817
        %v3008 = vpack.c.b16 %v2961, %v2960
        %v3009 = vpack.c.b16 %v2963, %v2962
        %v3010 = vpack.c.b16 %v2965, %v2964
        %v3011 = vpack.c.b16 %v2967, %v2966
        %v3012 = vpack.c.b16 %v2969, %v2968
        %v3013 = vpack.c.b16 %v2971, %v2970
        %v3014 = vpack.c.b16 %v2973, %v2972
        %v3015 = vpack.c.b16 %v2975, %v2974
        %v3016 = vpack.c.b16 %v2977, %v2976
        %v3017 = vpack.c.b16 %v2979, %v2978
        %v3018 = vpack.c.b16 %v2981, %v2980
        %v3019 = vpack.c.b16 %v2983, %v2982
        %v3020 = vpack.c.b16 %v2985, %v2984
        %v3021 = vpack.c.b16 %v2987, %v2986
        %v3022 = vpack.c.b16 %v2989, %v2988
        %v3023 = vpack.c.b16 %v2991, %v2990
        %v3024 = vpack.c.b16 %v2993, %v2992
        %v3025 = vpack.c.b16 %v2995, %v2994
        %v3026 = vpack.c.b16 %v2997, %v2996
        %v3027 = vpack.c.b16 %v2999, %v2998
        %v3028 = vpack.c.b16 %v3001, %v3000
        %v3029 = vpack.c.b16 %v3003, %v3002
        %v3030 = vpack.c.b16 %v3005, %v3004
        %v3031 = vpack.c.b16 %v3007, %v3006
        %3056 = vmatprep.subr.bf16.mxu0 0
        %3057 = vmatpush1.bf16.msra.mxu0 %v3008
        %3058 = vmatprep.subr.bf16.mxu0 0
        %3059 = vmatpush1.bf16.msra.mxu0 %v3009
        %3060 = vmatprep.subr.bf16.mxu0 0
        %3061 = vmatpush1.bf16.msra.mxu0 %v3010
        %3062 = vmatprep.subr.bf16.mxu0 0
        %3063 = vmatpush1.bf16.msra.mxu0 %v3011
        %3064 = vmatprep.subr.bf16.mxu0 0
        %3065 = vmatpush1.bf16.msra.mxu0 %v3012
        %3066 = vmatprep.subr.bf16.mxu0 0
        %3067 = vmatpush1.bf16.msra.mxu0 %v3013
        %3068 = vmatprep.subr.bf16.mxu0 0
        %3069 = vmatpush1.bf16.msra.mxu0 %v3014
        %3070 = vmatprep.subr.bf16.mxu0 0
        %3071 = vmatpush1.bf16.msra.mxu0 %v3015
        %3072 = vmatprep.subr.bf16.mxu0 0
        %3073 = vmatpush1.bf16.msra.mxu0 %v3016
        %3074 = vmatprep.subr.bf16.mxu0 0
        %3075 = vmatpush1.bf16.msra.mxu0 %v3017
        %3076 = vmatprep.subr.bf16.mxu0 0
        %3077 = vmatpush1.bf16.msra.mxu0 %v3018
        %3078 = vmatprep.subr.bf16.mxu0 0
        %3079 = vmatpush1.bf16.msra.mxu0 %v3019
        %3080 = vmatprep.subr.bf16.mxu0 0
        %3081 = vmatpush1.bf16.msra.mxu0 %v3020
        %3082 = vmatprep.subr.bf16.mxu0 0
        %3083 = vmatpush1.bf16.msra.mxu0 %v3021
        %3084 = vmatprep.subr.bf16.mxu0 0
        %3085 = vmatpush1.bf16.msra.mxu0 %v3022
        %3086 = vmatprep.subr.bf16.mxu0 0
        %3087 = vmatpush1.bf16.msra.mxu0 %v3023
        %3088 = vmatprep.mubr.bf16.mxu0 %v2817
        %3089 = vmatmul.mubr.bf16.gmra.mrb[0].mxu0 %v2816
        %v3090 = vpop.f32.mrb[0].mxu0
        %v3091 = vadd.f32 %v2530, %v3090
        %v3092 = vpop.f32.mrb[0].mxu0
        %v3093 = vpop.f32.mrb[0].mxu0
        %v3094 = vadd.f32 %v2533, %v3093
        %v3095 = vpop.f32.mrb[0].mxu0
        %3096 = vmatprep.mubr.bf16.mxu0 %v2820
        %3097 = vmatmul.mubr.bf16.gmra.mrb[0].mxu0 %v2819
        %v3098 = vpop.f32.mrb[0].mxu0
        %v3099 = vadd.f32 %v2538, %v3098
        %v3100 = vpop.f32.mrb[0].mxu0
        %v3101 = vpop.f32.mrb[0].mxu0
        %v3102 = vadd.f32 %v2541, %v3101
        %v3103 = vpop.f32.mrb[0].mxu0
        %3104 = vmatprep.mubr.bf16.mxu0 %v2823
        %3105 = vmatmul.mubr.bf16.gmra.mrb[0].mxu0 %v2822
        %v3106 = vpop.f32.mrb[0].mxu0
        %v3107 = vadd.f32 %v2546, %v3106
        %v3108 = vpop.f32.mrb[0].mxu0
        %v3109 = vpop.f32.mrb[0].mxu0
        %v3110 = vadd.f32 %v2549, %v3109
        %v3111 = vpop.f32.mrb[0].mxu0
        %3112 = vmatprep.mubr.bf16.mxu0 %v2826
        %3113 = vmatmul.mubr.bf16.gmra.mrb[0].mxu0 %v2825
        %v3114 = vpop.f32.mrb[0].mxu0
        %v3115 = vadd.f32 %v2554, %v3114
        %v3116 = vpop.f32.mrb[0].mxu0
        %v3117 = vpop.f32.mrb[0].mxu0
        %v3118 = vadd.f32 %v2557, %v3117
        %v3119 = vpop.f32.mrb[0].mxu0
        %3120 = vmatprep.mubr.bf16.mxu0 %v2829
        %3121 = vmatmul.mubr.bf16.gmra.mrb[0].mxu0 %v2828
        %v3122 = vpop.f32.mrb[0].mxu0
        %v3123 = vadd.f32 %v2562, %v3122
        %v3124 = vpop.f32.mrb[0].mxu0
        %v3125 = vpop.f32.mrb[0].mxu0
        %v3126 = vadd.f32 %v2565, %v3125
        %v3127 = vpop.f32.mrb[0].mxu0
        %3128 = vmatprep.mubr.bf16.mxu0 %v2832
        %3129 = vmatmul.mubr.bf16.gmra.mrb[0].mxu0 %v2831
        %v3130 = vpop.f32.mrb[0].mxu0
        %v3131 = vadd.f32 %v2570, %v3130
        %v3132 = vpop.f32.mrb[0].mxu0
        %v3133 = vpop.f32.mrb[0].mxu0
        %v3134 = vadd.f32 %v2573, %v3133
        %v3135 = vpop.f32.mrb[0].mxu0
        %3136 = vmatprep.mubr.bf16.mxu0 %v2835
        %3137 = vmatmul.mubr.bf16.gmra.mrb[0].mxu0 %v2834
        %v3138 = vpop.f32.mrb[0].mxu0
        %v3139 = vadd.f32 %v2578, %v3138
        %v3140 = vpop.f32.mrb[0].mxu0
        %v3141 = vpop.f32.mrb[0].mxu0
        %v3142 = vadd.f32 %v2581, %v3141
        %v3143 = vpop.f32.mrb[0].mxu0
        %3144 = vmatprep.mubr.bf16.mxu0 %v2838
        %3145 = vmatmul.mubr.bf16.gmra.mrb[0].mxu0 %v2837
        %v3146 = vpop.f32.mrb[0].mxu0
        %v3147 = vadd.f32 %v2586, %v3146
        %v3148 = vpop.f32.mrb[0].mxu0
        %v3149 = vpop.f32.mrb[0].mxu0
        %v3150 = vadd.f32 %v2589, %v3149
        %v3151 = vpop.f32.mrb[0].mxu0
        %3152 = vmatprep.mubr.bf16.mxu0 %v2841
        %3153 = vmatmul.mubr.bf16.gmra.mrb[0].mxu0 %v2840
        %v3154 = vpop.f32.mrb[0].mxu0
        %v3155 = vadd.f32 %v2594, %v3154
        %v3156 = vpop.f32.mrb[0].mxu0
        %v3157 = vpop.f32.mrb[0].mxu0
        %v3158 = vadd.f32 %v2597, %v3157
        %v3159 = vpop.f32.mrb[0].mxu0
        %3160 = vmatprep.mubr.bf16.mxu0 %v2844
        %3161 = vmatmul.mubr.bf16.gmra.mrb[0].mxu0 %v2843
        %v3162 = vpop.f32.mrb[0].mxu0
        %v3163 = vadd.f32 %v2602, %v3162
        %v3164 = vpop.f32.mrb[0].mxu0
        %v3165 = vpop.f32.mrb[0].mxu0
        %v3166 = vadd.f32 %v2605, %v3165
        %v3167 = vpop.f32.mrb[0].mxu0
        %3168 = vmatprep.mubr.bf16.mxu0 %v2847
        %3169 = vmatmul.mubr.bf16.gmra.mrb[0].mxu0 %v2846
        %v3170 = vpop.f32.mrb[0].mxu0
        %v3171 = vadd.f32 %v2610, %v3170
        %v3172 = vpop.f32.mrb[0].mxu0
        %v3173 = vpop.f32.mrb[0].mxu0
        %v3174 = vadd.f32 %v2613, %v3173
        %v3175 = vpop.f32.mrb[0].mxu0
        %3176 = vmatprep.mubr.bf16.mxu0 %v2850
        %3177 = vmatmul.mubr.bf16.gmra.mrb[0].mxu0 %v2849
        %v3178 = vpop.f32.mrb[0].mxu0
        %v3179 = vadd.f32 %v2618, %v3178
        %v3180 = vpop.f32.mrb[0].mxu0
        %v3181 = vpop.f32.mrb[0].mxu0
        %v3182 = vadd.f32 %v2621, %v3181
        %v3183 = vpop.f32.mrb[0].mxu0
        %3184 = vmatprep.mubr.bf16.mxu0 %v2853
        %3185 = vmatmul.mubr.bf16.gmra.mrb[0].mxu0 %v2852
        %v3186 = vpop.f32.mrb[0].mxu0
        %v3187 = vadd.f32 %v2626, %v3186
        %v3188 = vpop.f32.mrb[0].mxu0
        %v3189 = vpop.f32.mrb[0].mxu0
        %v3190 = vadd.f32 %v2629, %v3189
        %v3191 = vpop.f32.mrb[0].mxu0
        %3192 = vmatprep.mubr.bf16.mxu0 %v2856
        %3193 = vmatmul.mubr.bf16.gmra.mrb[0].mxu0 %v2855
        %v3194 = vpop.f32.mrb[0].mxu0
        %v3195 = vadd.f32 %v2634, %v3194
        %v3196 = vpop.f32.mrb[0].mxu0
        %v3197 = vpop.f32.mrb[0].mxu0
        %v3198 = vadd.f32 %v2637, %v3197
        %v3199 = vpop.f32.mrb[0].mxu0
        %3200 = vmatprep.mubr.bf16.mxu0 %v2859
        %3201 = vmatmul.mubr.bf16.gmra.mrb[0].mxu0 %v2858
        %v3202 = vpop.f32.mrb[0].mxu0
        %v3203 = vadd.f32 %v2642, %v3202
        %v3204 = vpop.f32.mrb[0].mxu0
        %v3205 = vpop.f32.mrb[0].mxu0
        %v3206 = vadd.f32 %v2645, %v3205
        %v3207 = vpop.f32.mrb[0].mxu0
        %3208 = vmatprep.mubr.bf16.mxu0 %v2862
        %3209 = vmatmul.mubr.bf16.gmra.mrb[0].mxu0 %v2861
        %v3210 = vpop.f32.mrb[0].mxu0
        %v3211 = vadd.f32 %v2650, %v3210
        %v3212 = vpop.f32.mrb[0].mxu0
        %v3213 = vpop.f32.mrb[0].mxu0
        %v3214 = vadd.f32 %v2653, %v3213
        %v3215 = vpop.f32.mrb[0].mxu0
        %3216 = vdwg.mxu0
        %3217 = vmatprep.subr.bf16.mxu0 0
        %3218 = vmatpush1.bf16.msra.mxu0 %v3024
        %3219 = vmatprep.subr.bf16.mxu0 0
        %3220 = vmatpush1.bf16.msra.mxu0 %v3025
        %3221 = vmatprep.subr.bf16.mxu0 0
        %3222 = vmatpush1.bf16.msra.mxu0 %v3026
        %3223 = vmatprep.subr.bf16.mxu0 0
        %3224 = vmatpush1.bf16.msra.mxu0 %v3027
        %3225 = vmatprep.subr.bf16.mxu0 0
        %3226 = vmatpush1.bf16.msra.mxu0 %v3028
        %3227 = vmatprep.subr.bf16.mxu0 0
        %3228 = vmatpush1.bf16.msra.mxu0 %v3029
        %3229 = vmatprep.subr.bf16.mxu0 0
        %3230 = vmatpush1.bf16.msra.mxu0 %v3030
        %3231 = vmatprep.subr.bf16.mxu0 0
        %3232 = vmatpush1.bf16.msra.mxu0 %v3031
        %3233 = vmatprep.subr.bf16.mxu0 0
        %3234 = vmatpush1.bf16.msra.mxu0 0
        %3235 = vmatprep.subr.bf16.mxu0 0
        %3236 = vmatpush1.bf16.msra.mxu0 0
        %3237 = vmatprep.subr.bf16.mxu0 0
        %3238 = vmatpush1.bf16.msra.mxu0 0
        %3239 = vmatprep.subr.bf16.mxu0 0
        %3240 = vmatpush1.bf16.msra.mxu0 0
        %3241 = vmatprep.subr.bf16.mxu0 0
        %3242 = vmatpush1.bf16.msra.mxu0 0
        %3243 = vmatprep.subr.bf16.mxu0 0
        %3244 = vmatpush1.bf16.msra.mxu0 0
        %3245 = vmatprep.subr.bf16.mxu0 0
        %3246 = vmatpush1.bf16.msra.mxu0 0
        %3247 = vmatprep.subr.bf16.mxu0 0
        %3248 = vmatpush1.bf16.msra.mxu0 0
        %3249 = vmatprep.mubr.bf16.mxu0 0
        %3250 = vmatmul.mubr.bf16.gmra.mrb[0].mxu0 %v2818
        %v3251 = vpop.f32.mrb[0].mxu0
        %v3252 = vadd.f32 %v3091, %v3251
        %v3253 = vpop.f32.mrb[0].mxu0
        %v3254 = vpop.f32.mrb[0].mxu0
        %v3255 = vadd.f32 %v3094, %v3254
        %v3256 = vpop.f32.mrb[0].mxu0
        %3257 = vmatprep.mubr.bf16.mxu0 0
        %3258 = vmatmul.mubr.bf16.gmra.mrb[0].mxu0 %v2821
        %v3259 = vpop.f32.mrb[0].mxu0
        %v3260 = vadd.f32 %v3099, %v3259
        %v3261 = vpop.f32.mrb[0].mxu0
        %v3262 = vpop.f32.mrb[0].mxu0
        %v3263 = vadd.f32 %v3102, %v3262
        %v3264 = vpop.f32.mrb[0].mxu0
        %3265 = vmatprep.mubr.bf16.mxu0 0
        %3266 = vmatmul.mubr.bf16.gmra.mrb[0].mxu0 %v2824
        %v3267 = vpop.f32.mrb[0].mxu0
        %v3268 = vadd.f32 %v3107, %v3267
        %v3269 = vpop.f32.mrb[0].mxu0
        %v3270 = vpop.f32.mrb[0].mxu0
        %v3271 = vadd.f32 %v3110, %v3270
        %v3272 = vpop.f32.mrb[0].mxu0
        %3273 = vmatprep.mubr.bf16.mxu0 0
        %3274 = vmatmul.mubr.bf16.gmra.mrb[0].mxu0 %v2827
        %v3275 = vpop.f32.mrb[0].mxu0
        %v3276 = vadd.f32 %v3115, %v3275
        %v3277 = vpop.f32.mrb[0].mxu0
        %v3278 = vpop.f32.mrb[0].mxu0
        %v3279 = vadd.f32 %v3118, %v3278
        %v3280 = vpop.f32.mrb[0].mxu0
        %3281 = vmatprep.mubr.bf16.mxu0 0
        %3282 = vmatmul.mubr.bf16.gmra.mrb[0].mxu0 %v2830
        %v3283 = vpop.f32.mrb[0].mxu0
        %v3284 = vadd.f32 %v3123, %v3283
        %v3285 = vpop.f32.mrb[0].mxu0
        %v3286 = vpop.f32.mrb[0].mxu0
        %v3287 = vadd.f32 %v3126, %v3286
        %v3288 = vpop.f32.mrb[0].mxu0
        %3289 = vmatprep.mubr.bf16.mxu0 0
        %3290 = vmatmul.mubr.bf16.gmra.mrb[0].mxu0 %v2833
        %v3291 = vpop.f32.mrb[0].mxu0
        %v3292 = vadd.f32 %v3131, %v3291
        %v3293 = vpop.f32.mrb[0].mxu0
        %v3294 = vpop.f32.mrb[0].mxu0
        %v3295 = vadd.f32 %v3134, %v3294
        %v3296 = vpop.f32.mrb[0].mxu0
        %3297 = vmatprep.mubr.bf16.mxu0 0
        %3298 = vmatmul.mubr.bf16.gmra.mrb[0].mxu0 %v2836
        %v3299 = vpop.f32.mrb[0].mxu0
        %v3300 = vadd.f32 %v3139, %v3299
        %v3301 = vpop.f32.mrb[0].mxu0
        %v3302 = vpop.f32.mrb[0].mxu0
        %v3303 = vadd.f32 %v3142, %v3302
        %v3304 = vpop.f32.mrb[0].mxu0
        %3305 = vmatprep.mubr.bf16.mxu0 0
        %3306 = vmatmul.mubr.bf16.gmra.mrb[0].mxu0 %v2839
        %v3307 = vpop.f32.mrb[0].mxu0
        %v3308 = vadd.f32 %v3147, %v3307
        %v3309 = vpop.f32.mrb[0].mxu0
        %v3310 = vpop.f32.mrb[0].mxu0
        %v3311 = vadd.f32 %v3150, %v3310
        %v3312 = vpop.f32.mrb[0].mxu0
        %3313 = vmatprep.mubr.bf16.mxu0 0
        %3314 = vmatmul.mubr.bf16.gmra.mrb[0].mxu0 %v2842
        %v3315 = vpop.f32.mrb[0].mxu0
        %v3316 = vadd.f32 %v3155, %v3315
        %v3317 = vpop.f32.mrb[0].mxu0
        %v3318 = vpop.f32.mrb[0].mxu0
        %v3319 = vadd.f32 %v3158, %v3318
        %v3320 = vpop.f32.mrb[0].mxu0
        %3321 = vmatprep.mubr.bf16.mxu0 0
        %3322 = vmatmul.mubr.bf16.gmra.mrb[0].mxu0 %v2845
        %v3323 = vpop.f32.mrb[0].mxu0
        %v3324 = vadd.f32 %v3163, %v3323
        %v3325 = vpop.f32.mrb[0].mxu0
        %v3326 = vpop.f32.mrb[0].mxu0
        %v3327 = vadd.f32 %v3166, %v3326
        %v3328 = vpop.f32.mrb[0].mxu0
        %3329 = vmatprep.mubr.bf16.mxu0 0
        %3330 = vmatmul.mubr.bf16.gmra.mrb[0].mxu0 %v2848
        %v3331 = vpop.f32.mrb[0].mxu0
        %v3332 = vadd.f32 %v3171, %v3331
        %v3333 = vpop.f32.mrb[0].mxu0
        %v3334 = vpop.f32.mrb[0].mxu0
        %v3335 = vadd.f32 %v3174, %v3334
        %v3336 = vpop.f32.mrb[0].mxu0
        %3337 = vmatprep.mubr.bf16.mxu0 0
        %3338 = vmatmul.mubr.bf16.gmra.mrb[0].mxu0 %v2851
        %v3339 = vpop.f32.mrb[0].mxu0
        %v3340 = vadd.f32 %v3179, %v3339
        %v3341 = vpop.f32.mrb[0].mxu0
        %v3342 = vpop.f32.mrb[0].mxu0
        %v3343 = vadd.f32 %v3182, %v3342
        %v3344 = vpop.f32.mrb[0].mxu0
        %3345 = vmatprep.mubr.bf16.mxu0 0
        %3346 = vmatmul.mubr.bf16.gmra.mrb[0].mxu0 %v2854
        %v3347 = vpop.f32.mrb[0].mxu0
        %v3348 = vadd.f32 %v3187, %v3347
        %v3349 = vpop.f32.mrb[0].mxu0
        %v3350 = vpop.f32.mrb[0].mxu0
        %v3351 = vadd.f32 %v3190, %v3350
        %v3352 = vpop.f32.mrb[0].mxu0
        %3353 = vmatprep.mubr.bf16.mxu0 0
        %3354 = vmatmul.mubr.bf16.gmra.mrb[0].mxu0 %v2857
        %v3355 = vpop.f32.mrb[0].mxu0
        %v3356 = vadd.f32 %v3195, %v3355
        %v3357 = vpop.f32.mrb[0].mxu0
        %v3358 = vpop.f32.mrb[0].mxu0
        %v3359 = vadd.f32 %v3198, %v3358
        %v3360 = vpop.f32.mrb[0].mxu0
        %3361 = vmatprep.mubr.bf16.mxu0 0
        %3362 = vmatmul.mubr.bf16.gmra.mrb[0].mxu0 %v2860
        %v3363 = vpop.f32.mrb[0].mxu0
        %v3364 = vadd.f32 %v3203, %v3363
        %v3365 = vpop.f32.mrb[0].mxu0
        %v3366 = vpop.f32.mrb[0].mxu0
        %v3367 = vadd.f32 %v3206, %v3366
        %v3368 = vpop.f32.mrb[0].mxu0
        %3369 = vmatprep.mubr.bf16.mxu0 0
        %3370 = vmatmul.mubr.bf16.gmra.mrb[0].mxu0 %v2863
        %v3371 = vpop.f32.mrb[0].mxu0
        %v3372 = vadd.f32 %v3211, %v3371
        %v3373 = vpop.f32.mrb[0].mxu0
        %v3374 = vpop.f32.mrb[0].mxu0
        %v3375 = vadd.f32 %v3214, %v3374
        %v3376 = vpop.f32.mrb[0].mxu0
        %3377 = vdwg.mxu0
        %s3378 = scalar_lea.vmem [#allocation2], 24
        %v3379 = vld [vmem:[%s3378] sm:$0xff]
        %v3380 = vld [vmem:[%s3378 + $0x8] sm:$0xf]
        %v3381 = vld [vmem:[%s3378 + $0xc] sm:$0xff]
        %v3382 = vld [vmem:[%s3378 + $0x14] sm:$0xf]
        %v3383 = vld [vmem:[%s3378 + $0x18] sm:$0xff]
        %v3384 = vld [vmem:[%s3378 + $0x20] sm:$0xf]
        %v3385 = vld [vmem:[%s3378 + $0x24] sm:$0xff]
        %v3386 = vld [vmem:[%s3378 + $0x2c] sm:$0xf]
        %v3387 = vld [vmem:[%s3378 + $0x30] sm:$0xff]
        %v3388 = vld [vmem:[%s3378 + $0x38] sm:$0xf]
        %v3389 = vld [vmem:[%s3378 + $0x3c] sm:$0xff]
        %v3390 = vld [vmem:[%s3378 + $0x44] sm:$0xf]
        %v3391 = vld [vmem:[%s3378 + $0x48] sm:$0xff]
        %v3392 = vld [vmem:[%s3378 + $0x50] sm:$0xf]
        %v3393 = vld [vmem:[%s3378 + $0x54] sm:$0xff]
        %v3394 = vld [vmem:[%s3378 + $0x5c] sm:$0xf]
        %v3395 = vld [vmem:[%s3378 + $0x78] sm:$0xff]
        %v3396 = vld [vmem:[%s3378 + $0x80] sm:$0xf]
        %v3397 = vld [vmem:[%s3378 + $0x84] sm:$0xff]
        %v3398 = vld [vmem:[%s3378 + $0x8c] sm:$0xf]
        %v3399 = vld [vmem:[%s3378 + $0x90] sm:$0xff]
        %v3400 = vld [vmem:[%s3378 + $0x98] sm:$0xf]
        %v3401 = vld [vmem:[%s3378 + $0x9c] sm:$0xff]
        %v3402 = vld [vmem:[%s3378 + $0xa4] sm:$0xf]
        %v3403 = vld [vmem:[%s3378 + $0xa8] sm:$0xff]
        %v3404 = vld [vmem:[%s3378 + $0xb0] sm:$0xf]
        %v3405 = vld [vmem:[%s3378 + $0xb4] sm:$0xff]
        %v3406 = vld [vmem:[%s3378 + $0xbc] sm:$0xf]
        %v3407 = vld [vmem:[%s3378 + $0xc0] sm:$0xff]
        %v3408 = vld [vmem:[%s3378 + $0xc8] sm:$0xf]
        %v3409 = vld [vmem:[%s3378 + $0xcc] sm:$0xff]
        %v3410 = vld [vmem:[%s3378 + $0xd4] sm:$0xf]
        %v3411 = vld [vmem:[%s3378 + $0xf0] sm:$0xff]
        %v3412 = vld [vmem:[%s3378 + $0xf8] sm:$0xf]
        %v3413 = vld [vmem:[%s3378 + $0xfc] sm:$0xff]
        %v3414 = vld [vmem:[%s3378 + $0x104] sm:$0xf]
        %v3415 = vld [vmem:[%s3378 + $0x108] sm:$0xff]
        %v3416 = vld [vmem:[%s3378 + $0x110] sm:$0xf]
        %v3417 = vld [vmem:[%s3378 + $0x114] sm:$0xff]
        %v3418 = vld [vmem:[%s3378 + $0x11c] sm:$0xf]
        %v3419 = vld [vmem:[%s3378 + $0x120] sm:$0xff]
        %v3420 = vld [vmem:[%s3378 + $0x128] sm:$0xf]
        %v3421 = vld [vmem:[%s3378 + $0x12c] sm:$0xff]
        %v3422 = vld [vmem:[%s3378 + $0x134] sm:$0xf]
        %v3423 = vld [vmem:[%s3378 + $0x138] sm:$0xff]
        %v3424 = vld [vmem:[%s3378 + $0x140] sm:$0xf]
        %v3425 = vld [vmem:[%s3378 + $0x144] sm:$0xff]
        %v3426 = vld [vmem:[%s3378 + $0x14c] sm:$0xf]
        %v3427 = vld [vmem:[%s3378 + $0x168] sm:$0xff]
        %v3428 = vld [vmem:[%s3378 + $0x170] sm:$0xf]
        %v3429 = vld [vmem:[%s3378 + $0x174] sm:$0xff]
        %v3430 = vld [vmem:[%s3378 + $0x17c] sm:$0xf]
        %v3431 = vld [vmem:[%s3378 + $0x180] sm:$0xff]
        %v3432 = vld [vmem:[%s3378 + $0x188] sm:$0xf]
        %v3433 = vld [vmem:[%s3378 + $0x18c] sm:$0xff]
        %v3434 = vld [vmem:[%s3378 + $0x194] sm:$0xf]
        %v3435 = vld [vmem:[%s3378 + $0x198] sm:$0xff]
        %v3436 = vld [vmem:[%s3378 + $0x1a0] sm:$0xf]
        %v3437 = vld [vmem:[%s3378 + $0x1a4] sm:$0xff]
        %v3438 = vld [vmem:[%s3378 + $0x1ac] sm:$0xf]
        %v3439 = vld [vmem:[%s3378 + $0x1b0] sm:$0xff]
        %v3440 = vld [vmem:[%s3378 + $0x1b8] sm:$0xf]
        %v3441 = vld [vmem:[%s3378 + $0x1bc] sm:$0xff]
        %v3442 = vld [vmem:[%s3378 + $0x1c4] sm:$0xf]
        %s3443 = sadd.s32 %s1766, 2
        %s3444 = smul.u32 %s3443, 48
        %s3445 = smul.addr %s3444, 4
        %s3446 = scalar_lea.vmem [#allocation9], %s3445
        %v3447 = vld [vmem:[%s3446] sm:$0xf]
        %v3448 = vld [vmem:[%s3446 + $0x4] sm:$0xf]
        %v3449 = vld [vmem:[%s3446 + $0x8] sm:$0xf]
        %v3450 = vld [vmem:[%s3446 + $0xc] sm:$0xf]
        %v3451 = vld [vmem:[%s3446 + $0x10] sm:$0xf]
        %v3452 = vld [vmem:[%s3446 + $0x14] sm:$0xf]
        %v3453 = vld [vmem:[%s3446 + $0x18] sm:$0xf]
        %v3454 = vld [vmem:[%s3446 + $0x1c] sm:$0xf]
        %v3455 = vld [vmem:[%s3446 + $0x20] sm:$0xf]
        %v3456 = vld [vmem:[%s3446 + $0x24] sm:$0xf]
        %v3457 = vld [vmem:[%s3446 + $0x28] sm:$0xf]
        %v3458 = vld [vmem:[%s3446 + $0x2c] sm:$0xf]
        %v3459 = vld [vmem:[%s3446 + $0x30] sm:$0xf]
        %v3460 = vld [vmem:[%s3446 + $0x34] sm:$0xf]
        %v3461 = vld [vmem:[%s3446 + $0x38] sm:$0xf]
        %v3462 = vld [vmem:[%s3446 + $0x3c] sm:$0xf]
        %v3463 = vld [vmem:[%s3446 + $0x40] sm:$0xf]
        %v3464 = vld [vmem:[%s3446 + $0x44] sm:$0xf]
        %v3465 = vld [vmem:[%s3446 + $0x48] sm:$0xf]
        %v3466 = vld [vmem:[%s3446 + $0x4c] sm:$0xf]
        %v3467 = vld [vmem:[%s3446 + $0x50] sm:$0xf]
        %v3468 = vld [vmem:[%s3446 + $0x54] sm:$0xf]
        %v3469 = vld [vmem:[%s3446 + $0x58] sm:$0xf]
        %v3470 = vld [vmem:[%s3446 + $0x5c] sm:$0xf]
        %v3471 = vld [vmem:[%s3446 + $0x60] sm:$0xf]
        %v3472 = vld [vmem:[%s3446 + $0x64] sm:$0xf]
        %v3473 = vld [vmem:[%s3446 + $0x68] sm:$0xf]
        %v3474 = vld [vmem:[%s3446 + $0x6c] sm:$0xf]
        %v3475 = vld [vmem:[%s3446 + $0x70] sm:$0xf]
        %v3476 = vld [vmem:[%s3446 + $0x74] sm:$0xf]
        %v3477 = vld [vmem:[%s3446 + $0x78] sm:$0xf]
        %v3478 = vld [vmem:[%s3446 + $0x7c] sm:$0xf]
        %v3479 = vld [vmem:[%s3446 + $0x80] sm:$0xf]
        %v3480 = vld [vmem:[%s3446 + $0x84] sm:$0xf]
        %v3481 = vld [vmem:[%s3446 + $0x88] sm:$0xf]
        %v3482 = vld [vmem:[%s3446 + $0x8c] sm:$0xf]
        %v3483 = vld [vmem:[%s3446 + $0x90] sm:$0xf]
        %v3484 = vld [vmem:[%s3446 + $0x94] sm:$0xf]
        %v3485 = vld [vmem:[%s3446 + $0x98] sm:$0xf]
        %v3486 = vld [vmem:[%s3446 + $0x9c] sm:$0xf]
        %v3487 = vld [vmem:[%s3446 + $0xa0] sm:$0xf]
        %v3488 = vld [vmem:[%s3446 + $0xa4] sm:$0xf]
        %v3489 = vld [vmem:[%s3446 + $0xa8] sm:$0xf]
        %v3490 = vld [vmem:[%s3446 + $0xac] sm:$0xf]
        %v3491 = vld [vmem:[%s3446 + $0xb0] sm:$0xf]
        %v3492 = vld [vmem:[%s3446 + $0xb4] sm:$0xf]
        %v3493 = vld [vmem:[%s3446 + $0xb8] sm:$0xf]
        %v3494 = vld [vmem:[%s3446 + $0xbc] sm:$0xf]
        %v3559 = vunpack.c.l.b16 %v3379
        %v3560 = vunpack.c.h.b16 %v3379
        %v3561 = vunpack.c.l.b16 %v3380
        %v3562 = vunpack.c.l.b16 %v3381
        %v3563 = vunpack.c.h.b16 %v3381
        %v3564 = vunpack.c.l.b16 %v3382
        %v3565 = vunpack.c.l.b16 %v3383
        %v3566 = vunpack.c.h.b16 %v3383
        %v3567 = vunpack.c.l.b16 %v3384
        %v3568 = vunpack.c.l.b16 %v3385
        %v3569 = vunpack.c.h.b16 %v3385
        %v3570 = vunpack.c.l.b16 %v3386
        %v3571 = vunpack.c.l.b16 %v3387
        %v3572 = vunpack.c.h.b16 %v3387
        %v3573 = vunpack.c.l.b16 %v3388
        %v3574 = vunpack.c.l.b16 %v3389
        %v3575 = vunpack.c.h.b16 %v3389
        %v3576 = vunpack.c.l.b16 %v3390
        %v3577 = vunpack.c.l.b16 %v3391
        %v3578 = vunpack.c.h.b16 %v3391
        %v3579 = vunpack.c.l.b16 %v3392
        %v3580 = vunpack.c.l.b16 %v3393
        %v3581 = vunpack.c.h.b16 %v3393
        %v3582 = vunpack.c.l.b16 %v3394
        %v3583 = vunpack.c.l.b16 %v3395
        %v3584 = vunpack.c.h.b16 %v3395
        %v3585 = vunpack.c.l.b16 %v3396
        %v3586 = vunpack.c.l.b16 %v3397
        %v3587 = vunpack.c.h.b16 %v3397
        %v3588 = vunpack.c.l.b16 %v3398
        %v3589 = vunpack.c.l.b16 %v3399
        %v3590 = vunpack.c.h.b16 %v3399
        %v3591 = vunpack.c.l.b16 %v3400
        %v3592 = vunpack.c.l.b16 %v3401
        %v3593 = vunpack.c.h.b16 %v3401
        %v3594 = vunpack.c.l.b16 %v3402
        %v3595 = vunpack.c.l.b16 %v3403
        %v3596 = vunpack.c.h.b16 %v3403
        %v3597 = vunpack.c.l.b16 %v3404
        %v3598 = vunpack.c.l.b16 %v3405
        %v3599 = vunpack.c.h.b16 %v3405
        %v3600 = vunpack.c.l.b16 %v3406
        %v3601 = vunpack.c.l.b16 %v3407
        %v3602 = vunpack.c.h.b16 %v3407
        %v3603 = vunpack.c.l.b16 %v3408
        %v3604 = vunpack.c.l.b16 %v3409
        %v3605 = vunpack.c.h.b16 %v3409
        %v3606 = vunpack.c.l.b16 %v3410
        %v3607 = vunpack.c.l.b16 %v3411
        %v3608 = vunpack.c.h.b16 %v3411
        %v3609 = vunpack.c.l.b16 %v3412
        %v3610 = vunpack.c.l.b16 %v3413
        %v3611 = vunpack.c.h.b16 %v3413
        %v3612 = vunpack.c.l.b16 %v3414
        %v3613 = vunpack.c.l.b16 %v3415
        %v3614 = vunpack.c.h.b16 %v3415
        %v3615 = vunpack.c.l.b16 %v3416
        %v3616 = vunpack.c.l.b16 %v3417
        %v3617 = vunpack.c.h.b16 %v3417
        %v3618 = vunpack.c.l.b16 %v3418
        %v3619 = vunpack.c.l.b16 %v3419
        %v3620 = vunpack.c.h.b16 %v3419
        %v3621 = vunpack.c.l.b16 %v3420
        %v3622 = vunpack.c.l.b16 %v3421
        %v3623 = vunpack.c.h.b16 %v3421
        %v3624 = vunpack.c.l.b16 %v3422
        %v3625 = vunpack.c.l.b16 %v3423
        %v3626 = vunpack.c.h.b16 %v3423
        %v3627 = vunpack.c.l.b16 %v3424
        %v3628 = vunpack.c.l.b16 %v3425
        %v3629 = vunpack.c.h.b16 %v3425
        %v3630 = vunpack.c.l.b16 %v3426
        %v3631 = vunpack.c.l.b16 %v3427
        %v3632 = vunpack.c.h.b16 %v3427
        %v3633 = vunpack.c.l.b16 %v3428
        %v3634 = vunpack.c.l.b16 %v3429
        %v3635 = vunpack.c.h.b16 %v3429
        %v3636 = vunpack.c.l.b16 %v3430
        %v3637 = vunpack.c.l.b16 %v3431
        %v3638 = vunpack.c.h.b16 %v3431
        %v3639 = vunpack.c.l.b16 %v3432
        %v3640 = vunpack.c.l.b16 %v3433
        %v3641 = vunpack.c.h.b16 %v3433
        %v3642 = vunpack.c.l.b16 %v3434
        %v3643 = vunpack.c.l.b16 %v3435
        %v3644 = vunpack.c.h.b16 %v3435
        %v3645 = vunpack.c.l.b16 %v3436
        %v3646 = vunpack.c.l.b16 %v3437
        %v3647 = vunpack.c.h.b16 %v3437
        %v3648 = vunpack.c.l.b16 %v3438
        %v3649 = vunpack.c.l.b16 %v3439
        %v3650 = vunpack.c.h.b16 %v3439
        %v3651 = vunpack.c.l.b16 %v3440
        %v3652 = vunpack.c.l.b16 %v3441
        %v3653 = vunpack.c.h.b16 %v3441
        %v3654 = vunpack.c.l.b16 %v3442
        %v3655 = vpack.c.b16 %v3562, %v3559
        %v3656 = vpack.c.b16 %v3563, %v3560
        %v3657 = vpack.c.b16 %v3564, %v3561
        %v3658 = vpack.c.b16 %v3568, %v3565
        %v3659 = vpack.c.b16 %v3569, %v3566
        %v3660 = vpack.c.b16 %v3570, %v3567
        %v3661 = vpack.c.b16 %v3574, %v3571
        %v3662 = vpack.c.b16 %v3575, %v3572
        %v3663 = vpack.c.b16 %v3576, %v3573
        %v3664 = vpack.c.b16 %v3580, %v3577
        %v3665 = vpack.c.b16 %v3581, %v3578
        %v3666 = vpack.c.b16 %v3582, %v3579
        %v3667 = vpack.c.b16 %v3586, %v3583
        %v3668 = vpack.c.b16 %v3587, %v3584
        %v3669 = vpack.c.b16 %v3588, %v3585
        %v3670 = vpack.c.b16 %v3592, %v3589
        %v3671 = vpack.c.b16 %v3593, %v3590
        %v3672 = vpack.c.b16 %v3594, %v3591
        %v3673 = vpack.c.b16 %v3598, %v3595
        %v3674 = vpack.c.b16 %v3599, %v3596
        %v3675 = vpack.c.b16 %v3600, %v3597
        %v3676 = vpack.c.b16 %v3604, %v3601
        %v3677 = vpack.c.b16 %v3605, %v3602
        %v3678 = vpack.c.b16 %v3606, %v3603
        %v3679 = vpack.c.b16 %v3610, %v3607
        %v3680 = vpack.c.b16 %v3611, %v3608
        %v3681 = vpack.c.b16 %v3612, %v3609
        %v3682 = vpack.c.b16 %v3616, %v3613
        %v3683 = vpack.c.b16 %v3617, %v3614
        %v3684 = vpack.c.b16 %v3618, %v3615
        %v3685 = vpack.c.b16 %v3622, %v3619
        %v3686 = vpack.c.b16 %v3623, %v3620
        %v3687 = vpack.c.b16 %v3624, %v3621
        %v3688 = vpack.c.b16 %v3628, %v3625
        %v3689 = vpack.c.b16 %v3629, %v3626
        %v3690 = vpack.c.b16 %v3630, %v3627
        %v3691 = vpack.c.b16 %v3634, %v3631
        %v3692 = vpack.c.b16 %v3635, %v3632
        %v3693 = vpack.c.b16 %v3636, %v3633
        %v3694 = vpack.c.b16 %v3640, %v3637
        %v3695 = vpack.c.b16 %v3641, %v3638
        %v3696 = vpack.c.b16 %v3642, %v3639
        %v3697 = vpack.c.b16 %v3646, %v3643
        %v3698 = vpack.c.b16 %v3647, %v3644
        %v3699 = vpack.c.b16 %v3648, %v3645
        %v3700 = vpack.c.b16 %v3652, %v3649
        %v3701 = vpack.c.b16 %v3653, %v3650
        %v3702 = vpack.c.b16 %v3654, %v3651
        %v3799 = vunpack.c.l.b16 %v3447
        %v3800 = vunpack.c.l.b16 %v3448
        %v3801 = vunpack.c.l.b16 %v3449
        %v3802 = vunpack.c.l.b16 %v3450
        %v3803 = vunpack.c.l.b16 %v3451
        %v3804 = vunpack.c.l.b16 %v3452
        %v3805 = vunpack.c.l.b16 %v3453
        %v3806 = vunpack.c.l.b16 %v3454
        %v3807 = vunpack.c.l.b16 %v3455
        %v3808 = vunpack.c.l.b16 %v3456
        %v3809 = vunpack.c.l.b16 %v3457
        %v3810 = vunpack.c.l.b16 %v3458
        %v3811 = vunpack.c.l.b16 %v3459
        %v3812 = vunpack.c.l.b16 %v3460
        %v3813 = vunpack.c.l.b16 %v3461
        %v3814 = vunpack.c.l.b16 %v3462
        %v3815 = vunpack.c.l.b16 %v3463
        %v3816 = vunpack.c.l.b16 %v3464
        %v3817 = vunpack.c.l.b16 %v3465
        %v3818 = vunpack.c.l.b16 %v3466
        %v3819 = vunpack.c.l.b16 %v3467
        %v3820 = vunpack.c.l.b16 %v3468
        %v3821 = vunpack.c.l.b16 %v3469
        %v3822 = vunpack.c.l.b16 %v3470
        %v3823 = vunpack.c.l.b16 %v3471
        %v3824 = vunpack.c.l.b16 %v3472
        %v3825 = vunpack.c.l.b16 %v3473
        %v3826 = vunpack.c.l.b16 %v3474
        %v3827 = vunpack.c.l.b16 %v3475
        %v3828 = vunpack.c.l.b16 %v3476
        %v3829 = vunpack.c.l.b16 %v3477
        %v3830 = vunpack.c.l.b16 %v3478
        %v3831 = vunpack.c.l.b16 %v3479
        %v3832 = vunpack.c.l.b16 %v3480
        %v3833 = vunpack.c.l.b16 %v3481
        %v3834 = vunpack.c.l.b16 %v3482
        %v3835 = vunpack.c.l.b16 %v3483
        %v3836 = vunpack.c.l.b16 %v3484
        %v3837 = vunpack.c.l.b16 %v3485
        %v3838 = vunpack.c.l.b16 %v3486
        %v3839 = vunpack.c.l.b16 %v3487
        %v3840 = vunpack.c.l.b16 %v3488
        %v3841 = vunpack.c.l.b16 %v3489
        %v3842 = vunpack.c.l.b16 %v3490
        %v3843 = vunpack.c.l.b16 %v3491
        %v3844 = vunpack.c.l.b16 %v3492
        %v3845 = vunpack.c.l.b16 %v3493
        %v3846 = vunpack.c.l.b16 %v3494
        %v3847 = vpack.c.b16 %v3800, %v3799
        %v3848 = vpack.c.b16 %v3802, %v3801
        %v3849 = vpack.c.b16 %v3804, %v3803
        %v3850 = vpack.c.b16 %v3806, %v3805
        %v3851 = vpack.c.b16 %v3808, %v3807
        %v3852 = vpack.c.b16 %v3810, %v3809
        %v3853 = vpack.c.b16 %v3812, %v3811
        %v3854 = vpack.c.b16 %v3814, %v3813
        %v3855 = vpack.c.b16 %v3816, %v3815
        %v3856 = vpack.c.b16 %v3818, %v3817
        %v3857 = vpack.c.b16 %v3820, %v3819
        %v3858 = vpack.c.b16 %v3822, %v3821
        %v3859 = vpack.c.b16 %v3824, %v3823
        %v3860 = vpack.c.b16 %v3826, %v3825
        %v3861 = vpack.c.b16 %v3828, %v3827
        %v3862 = vpack.c.b16 %v3830, %v3829
        %v3863 = vpack.c.b16 %v3832, %v3831
        %v3864 = vpack.c.b16 %v3834, %v3833
        %v3865 = vpack.c.b16 %v3836, %v3835
        %v3866 = vpack.c.b16 %v3838, %v3837
        %v3867 = vpack.c.b16 %v3840, %v3839
        %v3868 = vpack.c.b16 %v3842, %v3841
        %v3869 = vpack.c.b16 %v3844, %v3843
        %v3870 = vpack.c.b16 %v3846, %v3845
        %3895 = vmatprep.subr.bf16.mxu0 0
        %3896 = vmatpush1.bf16.msra.mxu0 %v3847
        %3897 = vmatprep.subr.bf16.mxu0 0
        %3898 = vmatpush1.bf16.msra.mxu0 %v3848
        %3899 = vmatprep.subr.bf16.mxu0 0
        %3900 = vmatpush1.bf16.msra.mxu0 %v3849
        %3901 = vmatprep.subr.bf16.mxu0 0
        %3902 = vmatpush1.bf16.msra.mxu0 %v3850
        %3903 = vmatprep.subr.bf16.mxu0 0
        %3904 = vmatpush1.bf16.msra.mxu0 %v3851
        %3905 = vmatprep.subr.bf16.mxu0 0
        %3906 = vmatpush1.bf16.msra.mxu0 %v3852
        %3907 = vmatprep.subr.bf16.mxu0 0
        %3908 = vmatpush1.bf16.msra.mxu0 %v3853
        %3909 = vmatprep.subr.bf16.mxu0 0
        %3910 = vmatpush1.bf16.msra.mxu0 %v3854
        %3911 = vmatprep.subr.bf16.mxu0 0
        %3912 = vmatpush1.bf16.msra.mxu0 %v3855
        %3913 = vmatprep.subr.bf16.mxu0 0
        %3914 = vmatpush1.bf16.msra.mxu0 %v3856
        %3915 = vmatprep.subr.bf16.mxu0 0
        %3916 = vmatpush1.bf16.msra.mxu0 %v3857
        %3917 = vmatprep.subr.bf16.mxu0 0
        %3918 = vmatpush1.bf16.msra.mxu0 %v3858
        %3919 = vmatprep.subr.bf16.mxu0 0
        %3920 = vmatpush1.bf16.msra.mxu0 %v3859
        %3921 = vmatprep.subr.bf16.mxu0 0
        %3922 = vmatpush1.bf16.msra.mxu0 %v3860
        %3923 = vmatprep.subr.bf16.mxu0 0
        %3924 = vmatpush1.bf16.msra.mxu0 %v3861
        %3925 = vmatprep.subr.bf16.mxu0 0
        %3926 = vmatpush1.bf16.msra.mxu0 %v3862
        %3927 = vmatprep.mubr.bf16.mxu0 %v3656
        %3928 = vmatmul.mubr.bf16.gmra.mrb[0].mxu0 %v3655
        %v3929 = vpop.f32.mrb[0].mxu0
        %v3930 = vadd.f32 0.0, %v3929
        %v3931 = vpop.f32.mrb[0].mxu0
        %v3932 = vpop.f32.mrb[0].mxu0
        %v3933 = vadd.f32 0.0, %v3932
        %v3934 = vpop.f32.mrb[0].mxu0
        %3935 = vmatprep.mubr.bf16.mxu0 %v3659
        %3936 = vmatmul.mubr.bf16.gmra.mrb[0].mxu0 %v3658
        %v3937 = vpop.f32.mrb[0].mxu0
        %v3938 = vadd.f32 0.0, %v3937
        %v3939 = vpop.f32.mrb[0].mxu0
        %v3940 = vpop.f32.mrb[0].mxu0
        %v3941 = vadd.f32 0.0, %v3940
        %v3942 = vpop.f32.mrb[0].mxu0
        %3943 = vmatprep.mubr.bf16.mxu0 %v3662
        %3944 = vmatmul.mubr.bf16.gmra.mrb[0].mxu0 %v3661
        %v3945 = vpop.f32.mrb[0].mxu0
        %v3946 = vadd.f32 0.0, %v3945
        %v3947 = vpop.f32.mrb[0].mxu0
        %v3948 = vpop.f32.mrb[0].mxu0
        %v3949 = vadd.f32 0.0, %v3948
        %v3950 = vpop.f32.mrb[0].mxu0
        %3951 = vmatprep.mubr.bf16.mxu0 %v3665
        %3952 = vmatmul.mubr.bf16.gmra.mrb[0].mxu0 %v3664
        %v3953 = vpop.f32.mrb[0].mxu0
        %v3954 = vadd.f32 0.0, %v3953
        %v3955 = vpop.f32.mrb[0].mxu0
        %v3956 = vpop.f32.mrb[0].mxu0
        %v3957 = vadd.f32 0.0, %v3956
        %v3958 = vpop.f32.mrb[0].mxu0
        %3959 = vmatprep.mubr.bf16.mxu0 %v3668
        %3960 = vmatmul.mubr.bf16.gmra.mrb[0].mxu0 %v3667
        %v3961 = vpop.f32.mrb[0].mxu0
        %v3962 = vadd.f32 0.0, %v3961
        %v3963 = vpop.f32.mrb[0].mxu0
        %v3964 = vpop.f32.mrb[0].mxu0
        %v3965 = vadd.f32 0.0, %v3964
        %v3966 = vpop.f32.mrb[0].mxu0
        %3967 = vmatprep.mubr.bf16.mxu0 %v3671
        %3968 = vmatmul.mubr.bf16.gmra.mrb[0].mxu0 %v3670
        %v3969 = vpop.f32.mrb[0].mxu0
        %v3970 = vadd.f32 0.0, %v3969
        %v3971 = vpop.f32.mrb[0].mxu0
        %v3972 = vpop.f32.mrb[0].mxu0
        %v3973 = vadd.f32 0.0, %v3972
        %v3974 = vpop.f32.mrb[0].mxu0
        %3975 = vmatprep.mubr.bf16.mxu0 %v3674
        %3976 = vmatmul.mubr.bf16.gmra.mrb[0].mxu0 %v3673
        %v3977 = vpop.f32.mrb[0].mxu0
        %v3978 = vadd.f32 0.0, %v3977
        %v3979 = vpop.f32.mrb[0].mxu0
        %v3980 = vpop.f32.mrb[0].mxu0
        %v3981 = vadd.f32 0.0, %v3980
        %v3982 = vpop.f32.mrb[0].mxu0
        %3983 = vmatprep.mubr.bf16.mxu0 %v3677
        %3984 = vmatmul.mubr.bf16.gmra.mrb[0].mxu0 %v3676
        %v3985 = vpop.f32.mrb[0].mxu0
        %v3986 = vadd.f32 0.0, %v3985
        %v3987 = vpop.f32.mrb[0].mxu0
        %v3988 = vpop.f32.mrb[0].mxu0
        %v3989 = vadd.f32 0.0, %v3988
        %v3990 = vpop.f32.mrb[0].mxu0
        %3991 = vmatprep.mubr.bf16.mxu0 %v3680
        %3992 = vmatmul.mubr.bf16.gmra.mrb[0].mxu0 %v3679
        %v3993 = vpop.f32.mrb[0].mxu0
        %v3994 = vadd.f32 0.0, %v3993
        %v3995 = vpop.f32.mrb[0].mxu0
        %v3996 = vpop.f32.mrb[0].mxu0
        %v3997 = vadd.f32 0.0, %v3996
        %v3998 = vpop.f32.mrb[0].mxu0
        %3999 = vmatprep.mubr.bf16.mxu0 %v3683
        %4000 = vmatmul.mubr.bf16.gmra.mrb[0].mxu0 %v3682
        %v4001 = vpop.f32.mrb[0].mxu0
        %v4002 = vadd.f32 0.0, %v4001
        %v4003 = vpop.f32.mrb[0].mxu0
        %v4004 = vpop.f32.mrb[0].mxu0
        %v4005 = vadd.f32 0.0, %v4004
        %v4006 = vpop.f32.mrb[0].mxu0
        %4007 = vmatprep.mubr.bf16.mxu0 %v3686
        %4008 = vmatmul.mubr.bf16.gmra.mrb[0].mxu0 %v3685
        %v4009 = vpop.f32.mrb[0].mxu0
        %v4010 = vadd.f32 0.0, %v4009
        %v4011 = vpop.f32.mrb[0].mxu0
        %v4012 = vpop.f32.mrb[0].mxu0
        %v4013 = vadd.f32 0.0, %v4012
        %v4014 = vpop.f32.mrb[0].mxu0
        %4015 = vmatprep.mubr.bf16.mxu0 %v3689
        %4016 = vmatmul.mubr.bf16.gmra.mrb[0].mxu0 %v3688
        %v4017 = vpop.f32.mrb[0].mxu0
        %v4018 = vadd.f32 0.0, %v4017
        %v4019 = vpop.f32.mrb[0].mxu0
        %v4020 = vpop.f32.mrb[0].mxu0
        %v4021 = vadd.f32 0.0, %v4020
        %v4022 = vpop.f32.mrb[0].mxu0
        %4023 = vmatprep.mubr.bf16.mxu0 %v3692
        %4024 = vmatmul.mubr.bf16.gmra.mrb[0].mxu0 %v3691
        %v4025 = vpop.f32.mrb[0].mxu0
        %v4026 = vadd.f32 0.0, %v4025
        %v4027 = vpop.f32.mrb[0].mxu0
        %v4028 = vpop.f32.mrb[0].mxu0
        %v4029 = vadd.f32 0.0, %v4028
        %v4030 = vpop.f32.mrb[0].mxu0
        %4031 = vmatprep.mubr.bf16.mxu0 %v3695
        %4032 = vmatmul.mubr.bf16.gmra.mrb[0].mxu0 %v3694
        %v4033 = vpop.f32.mrb[0].mxu0
        %v4034 = vadd.f32 0.0, %v4033
        %v4035 = vpop.f32.mrb[0].mxu0
        %v4036 = vpop.f32.mrb[0].mxu0
        %v4037 = vadd.f32 0.0, %v4036
        %v4038 = vpop.f32.mrb[0].mxu0
        %4039 = vmatprep.mubr.bf16.mxu0 %v3698
        %4040 = vmatmul.mubr.bf16.gmra.mrb[0].mxu0 %v3697
        %v4041 = vpop.f32.mrb[0].mxu0
        %v4042 = vadd.f32 0.0, %v4041
        %v4043 = vpop.f32.mrb[0].mxu0
        %v4044 = vpop.f32.mrb[0].mxu0
        %v4045 = vadd.f32 0.0, %v4044
        %v4046 = vpop.f32.mrb[0].mxu0
        %4047 = vmatprep.mubr.bf16.mxu0 %v3701
        %4048 = vmatmul.mubr.bf16.gmra.mrb[0].mxu0 %v3700
        %v4049 = vpop.f32.mrb[0].mxu0
        %v4050 = vadd.f32 0.0, %v4049
        %v4051 = vpop.f32.mrb[0].mxu0
        %v4052 = vpop.f32.mrb[0].mxu0
        %v4053 = vadd.f32 0.0, %v4052
        %v4054 = vpop.f32.mrb[0].mxu0
        %4055 = vdwg.mxu0
        %4056 = vmatprep.subr.bf16.mxu0 0
        %4057 = vmatpush1.bf16.msra.mxu0 %v3863
        %4058 = vmatprep.subr.bf16.mxu0 0
        %4059 = vmatpush1.bf16.msra.mxu0 %v3864
        %4060 = vmatprep.subr.bf16.mxu0 0
        %4061 = vmatpush1.bf16.msra.mxu0 %v3865
        %4062 = vmatprep.subr.bf16.mxu0 0
        %4063 = vmatpush1.bf16.msra.mxu0 %v3866
        %4064 = vmatprep.subr.bf16.mxu0 0
        %4065 = vmatpush1.bf16.msra.mxu0 %v3867
        %4066 = vmatprep.subr.bf16.mxu0 0
        %4067 = vmatpush1.bf16.msra.mxu0 %v3868
        %4068 = vmatprep.subr.bf16.mxu0 0
        %4069 = vmatpush1.bf16.msra.mxu0 %v3869
        %4070 = vmatprep.subr.bf16.mxu0 0
        %4071 = vmatpush1.bf16.msra.mxu0 %v3870
        %4072 = vmatprep.subr.bf16.mxu0 0
        %4073 = vmatpush1.bf16.msra.mxu0 0
        %4074 = vmatprep.subr.bf16.mxu0 0
        %4075 = vmatpush1.bf16.msra.mxu0 0
        %4076 = vmatprep.subr.bf16.mxu0 0
        %4077 = vmatpush1.bf16.msra.mxu0 0
        %4078 = vmatprep.subr.bf16.mxu0 0
        %4079 = vmatpush1.bf16.msra.mxu0 0
        %4080 = vmatprep.subr.bf16.mxu0 0
        %4081 = vmatpush1.bf16.msra.mxu0 0
        %4082 = vmatprep.subr.bf16.mxu0 0
        %4083 = vmatpush1.bf16.msra.mxu0 0
        %4084 = vmatprep.subr.bf16.mxu0 0
        %4085 = vmatpush1.bf16.msra.mxu0 0
        %4086 = vmatprep.subr.bf16.mxu0 0
        %4087 = vmatpush1.bf16.msra.mxu0 0
        %4088 = vmatprep.mubr.bf16.mxu0 0
        %4089 = vmatmul.mubr.bf16.gmra.mrb[0].mxu0 %v3657
        %v4090 = vpop.f32.mrb[0].mxu0
        %v4091 = vadd.f32 %v3930, %v4090
        %v4092 = vpop.f32.mrb[0].mxu0
        %v4093 = vpop.f32.mrb[0].mxu0
        %v4094 = vadd.f32 %v3933, %v4093
        %v4095 = vpop.f32.mrb[0].mxu0
        %4096 = vmatprep.mubr.bf16.mxu0 0
        %4097 = vmatmul.mubr.bf16.gmra.mrb[0].mxu0 %v3660
        %v4098 = vpop.f32.mrb[0].mxu0
        %v4099 = vadd.f32 %v3938, %v4098
        %v4100 = vpop.f32.mrb[0].mxu0
        %v4101 = vpop.f32.mrb[0].mxu0
        %v4102 = vadd.f32 %v3941, %v4101
        %v4103 = vpop.f32.mrb[0].mxu0
        %4104 = vmatprep.mubr.bf16.mxu0 0
        %4105 = vmatmul.mubr.bf16.gmra.mrb[0].mxu0 %v3663
        %v4106 = vpop.f32.mrb[0].mxu0
        %v4107 = vadd.f32 %v3946, %v4106
        %v4108 = vpop.f32.mrb[0].mxu0
        %v4109 = vpop.f32.mrb[0].mxu0
        %v4110 = vadd.f32 %v3949, %v4109
        %v4111 = vpop.f32.mrb[0].mxu0
        %4112 = vmatprep.mubr.bf16.mxu0 0
        %4113 = vmatmul.mubr.bf16.gmra.mrb[0].mxu0 %v3666
        %v4114 = vpop.f32.mrb[0].mxu0
        %v4115 = vadd.f32 %v3954, %v4114
        %v4116 = vpop.f32.mrb[0].mxu0
        %v4117 = vpop.f32.mrb[0].mxu0
        %v4118 = vadd.f32 %v3957, %v4117
        %v4119 = vpop.f32.mrb[0].mxu0
        %4120 = vmatprep.mubr.bf16.mxu0 0
        %4121 = vmatmul.mubr.bf16.gmra.mrb[0].mxu0 %v3669
        %v4122 = vpop.f32.mrb[0].mxu0
        %v4123 = vadd.f32 %v3962, %v4122
        %v4124 = vpop.f32.mrb[0].mxu0
        %v4125 = vpop.f32.mrb[0].mxu0
        %v4126 = vadd.f32 %v3965, %v4125
        %v4127 = vpop.f32.mrb[0].mxu0
        %4128 = vmatprep.mubr.bf16.mxu0 0
        %4129 = vmatmul.mubr.bf16.gmra.mrb[0].mxu0 %v3672
        %v4130 = vpop.f32.mrb[0].mxu0
        %v4131 = vadd.f32 %v3970, %v4130
        %v4132 = vpop.f32.mrb[0].mxu0
        %v4133 = vpop.f32.mrb[0].mxu0
        %v4134 = vadd.f32 %v3973, %v4133
        %v4135 = vpop.f32.mrb[0].mxu0
        %4136 = vmatprep.mubr.bf16.mxu0 0
        %4137 = vmatmul.mubr.bf16.gmra.mrb[0].mxu0 %v3675
        %v4138 = vpop.f32.mrb[0].mxu0
        %v4139 = vadd.f32 %v3978, %v4138
        %v4140 = vpop.f32.mrb[0].mxu0
        %v4141 = vpop.f32.mrb[0].mxu0
        %v4142 = vadd.f32 %v3981, %v4141
        %v4143 = vpop.f32.mrb[0].mxu0
        %4144 = vmatprep.mubr.bf16.mxu0 0
        %4145 = vmatmul.mubr.bf16.gmra.mrb[0].mxu0 %v3678
        %v4146 = vpop.f32.mrb[0].mxu0
        %v4147 = vadd.f32 %v3986, %v4146
        %v4148 = vpop.f32.mrb[0].mxu0
        %v4149 = vpop.f32.mrb[0].mxu0
        %v4150 = vadd.f32 %v3989, %v4149
        %v4151 = vpop.f32.mrb[0].mxu0
        %4152 = vmatprep.mubr.bf16.mxu0 0
        %4153 = vmatmul.mubr.bf16.gmra.mrb[0].mxu0 %v3681
        %v4154 = vpop.f32.mrb[0].mxu0
        %v4155 = vadd.f32 %v3994, %v4154
        %v4156 = vpop.f32.mrb[0].mxu0
        %v4157 = vpop.f32.mrb[0].mxu0
        %v4158 = vadd.f32 %v3997, %v4157
        %v4159 = vpop.f32.mrb[0].mxu0
        %4160 = vmatprep.mubr.bf16.mxu0 0
        %4161 = vmatmul.mubr.bf16.gmra.mrb[0].mxu0 %v3684
        %v4162 = vpop.f32.mrb[0].mxu0
        %v4163 = vadd.f32 %v4002, %v4162
        %v4164 = vpop.f32.mrb[0].mxu0
        %v4165 = vpop.f32.mrb[0].mxu0
        %v4166 = vadd.f32 %v4005, %v4165
        %v4167 = vpop.f32.mrb[0].mxu0
        %4168 = vmatprep.mubr.bf16.mxu0 0
        %4169 = vmatmul.mubr.bf16.gmra.mrb[0].mxu0 %v3687
        %v4170 = vpop.f32.mrb[0].mxu0
        %v4171 = vadd.f32 %v4010, %v4170
        %v4172 = vpop.f32.mrb[0].mxu0
        %v4173 = vpop.f32.mrb[0].mxu0
        %v4174 = vadd.f32 %v4013, %v4173
        %v4175 = vpop.f32.mrb[0].mxu0
        %4176 = vmatprep.mubr.bf16.mxu0 0
        %4177 = vmatmul.mubr.bf16.gmra.mrb[0].mxu0 %v3690
        %v4178 = vpop.f32.mrb[0].mxu0
        %v4179 = vadd.f32 %v4018, %v4178
        %v4180 = vpop.f32.mrb[0].mxu0
        %v4181 = vpop.f32.mrb[0].mxu0
        %v4182 = vadd.f32 %v4021, %v4181
        %v4183 = vpop.f32.mrb[0].mxu0
        %4184 = vmatprep.mubr.bf16.mxu0 0
        %4185 = vmatmul.mubr.bf16.gmra.mrb[0].mxu0 %v3693
        %v4186 = vpop.f32.mrb[0].mxu0
        %v4187 = vadd.f32 %v4026, %v4186
        %v4188 = vpop.f32.mrb[0].mxu0
        %v4189 = vpop.f32.mrb[0].mxu0
        %v4190 = vadd.f32 %v4029, %v4189
        %v4191 = vpop.f32.mrb[0].mxu0
        %4192 = vmatprep.mubr.bf16.mxu0 0
        %4193 = vmatmul.mubr.bf16.gmra.mrb[0].mxu0 %v3696
        %v4194 = vpop.f32.mrb[0].mxu0
        %v4195 = vadd.f32 %v4034, %v4194
        %v4196 = vpop.f32.mrb[0].mxu0
        %v4197 = vpop.f32.mrb[0].mxu0
        %v4198 = vadd.f32 %v4037, %v4197
        %v4199 = vpop.f32.mrb[0].mxu0
        %4200 = vmatprep.mubr.bf16.mxu0 0
        %4201 = vmatmul.mubr.bf16.gmra.mrb[0].mxu0 %v3699
        %v4202 = vpop.f32.mrb[0].mxu0
        %v4203 = vadd.f32 %v4042, %v4202
        %v4204 = vpop.f32.mrb[0].mxu0
        %v4205 = vpop.f32.mrb[0].mxu0
        %v4206 = vadd.f32 %v4045, %v4205
        %v4207 = vpop.f32.mrb[0].mxu0
        %4208 = vmatprep.mubr.bf16.mxu0 0
        %4209 = vmatmul.mubr.bf16.gmra.mrb[0].mxu0 %v3702
        %v4210 = vpop.f32.mrb[0].mxu0
        %v4211 = vadd.f32 %v4050, %v4210
        %v4212 = vpop.f32.mrb[0].mxu0
        %v4213 = vpop.f32.mrb[0].mxu0
        %v4214 = vadd.f32 %v4053, %v4213
        %v4215 = vpop.f32.mrb[0].mxu0
        %4216 = vdwg.mxu0
        %v4217 = vadd.f32 %v3252, %v4091
        %v4218 = vadd.f32 %v3255, %v4094
        %v4219 = vadd.f32 %v3260, %v4099
        %v4220 = vadd.f32 %v3263, %v4102
        %v4221 = vadd.f32 %v3268, %v4107
        %v4222 = vadd.f32 %v3271, %v4110
        %v4223 = vadd.f32 %v3276, %v4115
        %v4224 = vadd.f32 %v3279, %v4118
        %v4225 = vadd.f32 %v3284, %v4123
        %v4226 = vadd.f32 %v3287, %v4126
        %v4227 = vadd.f32 %v3292, %v4131
        %v4228 = vadd.f32 %v3295, %v4134
        %v4229 = vadd.f32 %v3300, %v4139
        %v4230 = vadd.f32 %v3303, %v4142
        %v4231 = vadd.f32 %v3308, %v4147
        %v4232 = vadd.f32 %v3311, %v4150
        %v4233 = vadd.f32 %v3316, %v4155
        %v4234 = vadd.f32 %v3319, %v4158
        %v4235 = vadd.f32 %v3324, %v4163
        %v4236 = vadd.f32 %v3327, %v4166
        %v4237 = vadd.f32 %v3332, %v4171
        %v4238 = vadd.f32 %v3335, %v4174
        %v4239 = vadd.f32 %v3340, %v4179
        %v4240 = vadd.f32 %v3343, %v4182
        %v4241 = vadd.f32 %v3348, %v4187
        %v4242 = vadd.f32 %v3351, %v4190
        %v4243 = vadd.f32 %v3356, %v4195
        %v4244 = vadd.f32 %v3359, %v4198
        %v4245 = vadd.f32 %v3364, %v4203
        %v4246 = vadd.f32 %v3367, %v4206
        %v4247 = vadd.f32 %v3372, %v4211
        %v4248 = vadd.f32 %v3375, %v4214
        %s4249 = scalar_lea.vmem [#allocation11], %s32
        %v4250 = vld [vmem:[%s4249] sm:$0x1]
        %v4252 = vlaneseq
        %v4253 = vshrl.u32 %v4252, 7
        %v4254 = vsub.s32 0, %v4253
        %v4255 = vrot.slane %v4250, %v4254
        %v4257 = vmul.f32 %v4217, %v4255
        %v4258 = vmul.f32 %v4218, %v4255
        %v4259 = vmul.f32 %v4219, %v4255
        %v4260 = vmul.f32 %v4220, %v4255
        %v4261 = vmul.f32 %v4221, %v4255
        %v4262 = vmul.f32 %v4222, %v4255
        %v4263 = vmul.f32 %v4223, %v4255
        %v4264 = vmul.f32 %v4224, %v4255
        %v4265 = vmul.f32 %v4225, %v4255
        %v4266 = vmul.f32 %v4226, %v4255
        %v4267 = vmul.f32 %v4227, %v4255
        %v4268 = vmul.f32 %v4228, %v4255
        %v4269 = vmul.f32 %v4229, %v4255
        %v4270 = vmul.f32 %v4230, %v4255
        %v4271 = vmul.f32 %v4231, %v4255
        %v4272 = vmul.f32 %v4232, %v4255
        %v4273 = vmul.f32 %v4233, %v4255
        %v4274 = vmul.f32 %v4234, %v4255
        %v4275 = vmul.f32 %v4235, %v4255
        %v4276 = vmul.f32 %v4236, %v4255
        %v4277 = vmul.f32 %v4237, %v4255
        %v4278 = vmul.f32 %v4238, %v4255
        %v4279 = vmul.f32 %v4239, %v4255
        %v4280 = vmul.f32 %v4240, %v4255
        %v4281 = vmul.f32 %v4241, %v4255
        %v4282 = vmul.f32 %v4242, %v4255
        %v4283 = vmul.f32 %v4243, %v4255
        %v4284 = vmul.f32 %v4244, %v4255
        %v4285 = vmul.f32 %v4245, %v4255
        %v4286 = vmul.f32 %v4246, %v4255
        %v4287 = vmul.f32 %v4247, %v4255
        %v4288 = vmul.f32 %v4248, %v4255
        %s4289 = scalar_lea.vmem [#allocation12], %s32
        %v4290 = vld [vmem:[%s4289] sm:$0x1]
        %v4292 = vlaneseq
        %v4293 = vshrl.u32 %v4292, 7
        %v4294 = vsub.s32 0, %v4293
        %v4295 = vrot.slane %v4290, %v4294
        %v4297 = vadd.f32 %v4257, %v4295
        %v4298 = vadd.f32 %v4258, %v4295
        %v4299 = vadd.f32 %v4259, %v4295
        %v4300 = vadd.f32 %v4260, %v4295
        %v4301 = vadd.f32 %v4261, %v4295
        %v4302 = vadd.f32 %v4262, %v4295
        %v4303 = vadd.f32 %v4263, %v4295
        %v4304 = vadd.f32 %v4264, %v4295
        %v4305 = vadd.f32 %v4265, %v4295
        %v4306 = vadd.f32 %v4266, %v4295
        %v4307 = vadd.f32 %v4267, %v4295
        %v4308 = vadd.f32 %v4268, %v4295
        %v4309 = vadd.f32 %v4269, %v4295
        %v4310 = vadd.f32 %v4270, %v4295
        %v4311 = vadd.f32 %v4271, %v4295
        %v4312 = vadd.f32 %v4272, %v4295
        %v4313 = vadd.f32 %v4273, %v4295
        %v4314 = vadd.f32 %v4274, %v4295
        %v4315 = vadd.f32 %v4275, %v4295
        %v4316 = vadd.f32 %v4276, %v4295
        %v4317 = vadd.f32 %v4277, %v4295
        %v4318 = vadd.f32 %v4278, %v4295
        %v4319 = vadd.f32 %v4279, %v4295
        %v4320 = vadd.f32 %v4280, %v4295
        %v4321 = vadd.f32 %v4281, %v4295
        %v4322 = vadd.f32 %v4282, %v4295
        %v4323 = vadd.f32 %v4283, %v4295
        %v4324 = vadd.f32 %v4284, %v4295
        %v4325 = vadd.f32 %v4285, %v4295
        %v4326 = vadd.f32 %v4286, %v4295
        %v4327 = vadd.f32 %v4287, %v4295
        %v4328 = vadd.f32 %v4288, %v4295
        %v4329 = vld [vmem:[%s388] sm:$0x1]
        %v4330 = vld [vmem:[%s388 + $0x2] sm:$0x1]
        %v4331 = vld [vmem:[%s388 + $0x4] sm:$0x1]
        %v4332 = vld [vmem:[%s388 + $0x6] sm:$0x1]
        %v4333 = vlaneseq
        %v4334 = vshrl.u32 %v4333, 7
        %v4335 = vsub.s32 0, %v4334
        %v4336 = vrot.slane %v4329, %v4335
        %v4337 = vlaneseq
        %v4338 = vshrl.u32 %v4337, 7
        %v4339 = vsub.s32 0, %v4338
        %v4340 = vrot.slane %v4330, %v4339
        %v4341 = vlaneseq
        %v4342 = vshrl.u32 %v4341, 7
        %v4343 = vsub.s32 0, %v4342
        %v4344 = vrot.slane %v4331, %v4343
        %v4345 = vlaneseq
        %v4346 = vshrl.u32 %v4345, 7
        %v4347 = vsub.s32 0, %v4346
        %v4348 = vrot.slane %v4332, %v4347
        %v4349 = vmul.f32 %v4336, %v4297
        %v4350 = vmul.f32 %v4336, %v4298
        %v4351 = vmul.f32 %v4336, %v4299
        %v4352 = vmul.f32 %v4336, %v4300
        %v4353 = vmul.f32 %v4336, %v4301
        %v4354 = vmul.f32 %v4336, %v4302
        %v4355 = vmul.f32 %v4336, %v4303
        %v4356 = vmul.f32 %v4336, %v4304
        %v4357 = vmul.f32 %v4340, %v4305
        %v4358 = vmul.f32 %v4340, %v4306
        %v4359 = vmul.f32 %v4340, %v4307
        %v4360 = vmul.f32 %v4340, %v4308
        %v4361 = vmul.f32 %v4340, %v4309
        %v4362 = vmul.f32 %v4340, %v4310
        %v4363 = vmul.f32 %v4340, %v4311
        %v4364 = vmul.f32 %v4340, %v4312
        %v4365 = vmul.f32 %v4344, %v4313
        %v4366 = vmul.f32 %v4344, %v4314
        %v4367 = vmul.f32 %v4344, %v4315
        %v4368 = vmul.f32 %v4344, %v4316
        %v4369 = vmul.f32 %v4344, %v4317
        %v4370 = vmul.f32 %v4344, %v4318
        %v4371 = vmul.f32 %v4344, %v4319
        %v4372 = vmul.f32 %v4344, %v4320
        %v4373 = vmul.f32 %v4348, %v4321
        %v4374 = vmul.f32 %v4348, %v4322
        %v4375 = vmul.f32 %v4348, %v4323
        %v4376 = vmul.f32 %v4348, %v4324
        %v4377 = vmul.f32 %v4348, %v4325
        %v4378 = vmul.f32 %v4348, %v4326
        %v4379 = vmul.f32 %v4348, %v4327
        %v4380 = vmul.f32 %v4348, %v4328
        %v4381 = vld [vmem:[%s388 + $0x1] sm:$0x1]
        %v4382 = vld [vmem:[%s388 + $0x3] sm:$0x1]
        %v4383 = vld [vmem:[%s388 + $0x5] sm:$0x1]
        %v4384 = vld [vmem:[%s388 + $0x7] sm:$0x1]
        %v4385 = vlaneseq
        %v4386 = vshrl.u32 %v4385, 7
        %v4387 = vsub.s32 0, %v4386
        %v4388 = vrot.slane %v4381, %v4387
        %v4389 = vlaneseq
        %v4390 = vshrl.u32 %v4389, 7
        %v4391 = vsub.s32 0, %v4390
        %v4392 = vrot.slane %v4382, %v4391
        %v4393 = vlaneseq
        %v4394 = vshrl.u32 %v4393, 7
        %v4395 = vsub.s32 0, %v4394
        %v4396 = vrot.slane %v4383, %v4395
        %v4397 = vlaneseq
        %v4398 = vshrl.u32 %v4397, 7
        %v4399 = vsub.s32 0, %v4398
        %v4400 = vrot.slane %v4384, %v4399
        %v4401 = vadd.f32 %v4349, %v4388
        %v4402 = vadd.f32 %v4350, %v4388
        %v4403 = vadd.f32 %v4351, %v4388
        %v4404 = vadd.f32 %v4352, %v4388
        %v4405 = vadd.f32 %v4353, %v4388
        %v4406 = vadd.f32 %v4354, %v4388
        %v4407 = vadd.f32 %v4355, %v4388
        %v4408 = vadd.f32 %v4356, %v4388
        %v4409 = vadd.f32 %v4357, %v4392
        %v4410 = vadd.f32 %v4358, %v4392
        %v4411 = vadd.f32 %v4359, %v4392
        %v4412 = vadd.f32 %v4360, %v4392
        %v4413 = vadd.f32 %v4361, %v4392
        %v4414 = vadd.f32 %v4362, %v4392
        %v4415 = vadd.f32 %v4363, %v4392
        %v4416 = vadd.f32 %v4364, %v4392
        %v4417 = vadd.f32 %v4365, %v4396
        %v4418 = vadd.f32 %v4366, %v4396
        %v4419 = vadd.f32 %v4367, %v4396
        %v4420 = vadd.f32 %v4368, %v4396
        %v4421 = vadd.f32 %v4369, %v4396
        %v4422 = vadd.f32 %v4370, %v4396
        %v4423 = vadd.f32 %v4371, %v4396
        %v4424 = vadd.f32 %v4372, %v4396
        %v4425 = vadd.f32 %v4373, %v4400
        %v4426 = vadd.f32 %v4374, %v4400
        %v4427 = vadd.f32 %v4375, %v4400
        %v4428 = vadd.f32 %v4376, %v4400
        %v4429 = vadd.f32 %v4377, %v4400
        %v4430 = vadd.f32 %v4378, %v4400
        %v4431 = vadd.f32 %v4379, %v4400
        %v4432 = vadd.f32 %v4380, %v4400
        %v4433 = vmax.f32 %v4401, 0.0
        %v4434 = vmax.f32 %v4402, 0.0
        %v4435 = vmax.f32 %v4403, 0.0
        %v4436 = vmax.f32 %v4404, 0.0
        %v4437 = vmax.f32 %v4405, 0.0
        %v4438 = vmax.f32 %v4406, 0.0
        %v4439 = vmax.f32 %v4407, 0.0
        %v4440 = vmax.f32 %v4408, 0.0
        %v4441 = vmax.f32 %v4409, 0.0
        %v4442 = vmax.f32 %v4410, 0.0
        %v4443 = vmax.f32 %v4411, 0.0
        %v4444 = vmax.f32 %v4412, 0.0
        %v4445 = vmax.f32 %v4413, 0.0
        %v4446 = vmax.f32 %v4414, 0.0
        %v4447 = vmax.f32 %v4415, 0.0
        %v4448 = vmax.f32 %v4416, 0.0
        %v4449 = vmax.f32 %v4417, 0.0
        %v4450 = vmax.f32 %v4418, 0.0
        %v4451 = vmax.f32 %v4419, 0.0
        %v4452 = vmax.f32 %v4420, 0.0
        %v4453 = vmax.f32 %v4421, 0.0
        %v4454 = vmax.f32 %v4422, 0.0
        %v4455 = vmax.f32 %v4423, 0.0
        %v4456 = vmax.f32 %v4424, 0.0
        %v4457 = vmax.f32 %v4425, 0.0
        %v4458 = vmax.f32 %v4426, 0.0
        %v4459 = vmax.f32 %v4427, 0.0
        %v4460 = vmax.f32 %v4428, 0.0
        %v4461 = vmax.f32 %v4429, 0.0
        %v4462 = vmax.f32 %v4430, 0.0
        %v4463 = vmax.f32 %v4431, 0.0
        %v4464 = vmax.f32 %v4432, 0.0
        %v4465 = vadd.f32 %v4433, %v831
        %v4466 = vadd.f32 %v4434, %v832
        %v4467 = vadd.f32 %v4435, %v833
        %v4468 = vadd.f32 %v4436, %v834
        %v4469 = vadd.f32 %v4437, %v835
        %v4470 = vadd.f32 %v4438, %v836
        %v4471 = vadd.f32 %v4439, %v837
        %v4472 = vadd.f32 %v4440, %v838
        %v4473 = vadd.f32 %v4441, %v839
        %v4474 = vadd.f32 %v4442, %v840
        %v4475 = vadd.f32 %v4443, %v841
        %v4476 = vadd.f32 %v4444, %v842
        %v4477 = vadd.f32 %v4445, %v843
        %v4478 = vadd.f32 %v4446, %v844
        %v4479 = vadd.f32 %v4447, %v845
        %v4480 = vadd.f32 %v4448, %v846
        %v4481 = vadd.f32 %v4449, %v847
        %v4482 = vadd.f32 %v4450, %v848
        %v4483 = vadd.f32 %v4451, %v849
        %v4484 = vadd.f32 %v4452, %v850
        %v4485 = vadd.f32 %v4453, %v851
        %v4486 = vadd.f32 %v4454, %v852
        %v4487 = vadd.f32 %v4455, %v853
        %v4488 = vadd.f32 %v4456, %v854
        %v4489 = vadd.f32 %v4457, %v855
        %v4490 = vadd.f32 %v4458, %v856
        %v4491 = vadd.f32 %v4459, %v857
        %v4492 = vadd.f32 %v4460, %v858
        %v4493 = vadd.f32 %v4461, %v859
        %v4494 = vadd.f32 %v4462, %v860
        %v4495 = vadd.f32 %v4463, %v861
        %v4496 = vadd.f32 %v4464, %v862
        %4497 = vst [vmem:[%s423] sm:$0xff] %v4465
        %4498 = vst [vmem:[%s423 + $0x8] sm:$0xff] %v4466
        %4499 = vst [vmem:[%s423 + $0x10] sm:$0xff] %v4467
        %4500 = vst [vmem:[%s423 + $0x18] sm:$0xff] %v4468
        %4501 = vst [vmem:[%s423 + $0x20] sm:$0xff] %v4469
        %4502 = vst [vmem:[%s423 + $0x28] sm:$0xff] %v4470
        %4503 = vst [vmem:[%s423 + $0x30] sm:$0xff] %v4471
        %4504 = vst [vmem:[%s423 + $0x38] sm:$0xff] %v4472
        %4505 = vst [vmem:[%s423 + $0x40] sm:$0xff] %v4473
        %4506 = vst [vmem:[%s423 + $0x48] sm:$0xff] %v4474
        %4507 = vst [vmem:[%s423 + $0x50] sm:$0xff] %v4475
        %4508 = vst [vmem:[%s423 + $0x58] sm:$0xff] %v4476
        %4509 = vst [vmem:[%s423 + $0x60] sm:$0xff] %v4477
        %4510 = vst [vmem:[%s423 + $0x68] sm:$0xff] %v4478
        %4511 = vst [vmem:[%s423 + $0x70] sm:$0xff] %v4479
        %4512 = vst [vmem:[%s423 + $0x78] sm:$0xff] %v4480
        %4513 = vst [vmem:[%s423 + $0x80] sm:$0xff] %v4481
        %4514 = vst [vmem:[%s423 + $0x88] sm:$0xff] %v4482
        %4515 = vst [vmem:[%s423 + $0x90] sm:$0xff] %v4483
        %4516 = vst [vmem:[%s423 + $0x98] sm:$0xff] %v4484
        %4517 = vst [vmem:[%s423 + $0xa0] sm:$0xff] %v4485
        %4518 = vst [vmem:[%s423 + $0xa8] sm:$0xff] %v4486
        %4519 = vst [vmem:[%s423 + $0xb0] sm:$0xff] %v4487
        %4520 = vst [vmem:[%s423 + $0xb8] sm:$0xff] %v4488
        %4521 = vst [vmem:[%s423 + $0xc0] sm:$0xff] %v4489
        %4522 = vst [vmem:[%s423 + $0xc8] sm:$0xff] %v4490
        %4523 = vst [vmem:[%s423 + $0xd0] sm:$0xff] %v4491
        %4524 = vst [vmem:[%s423 + $0xd8] sm:$0xff] %v4492
        %4525 = vst [vmem:[%s423 + $0xe0] sm:$0xff] %v4493
        %4526 = vst [vmem:[%s423 + $0xe8] sm:$0xff] %v4494
        %4527 = vst [vmem:[%s423 + $0xf0] sm:$0xff] %v4495
        %4528 = vst [vmem:[%s423 + $0xf8] sm:$0xff] %v4496
        %s4529 = sand.u32 %s206, 1
        %s4530 = scalar_lea.sflag [#allocation5], %s4529
        %s4531 = sand.u32 %s206, 1
        %s4532 = smul.addr %s4531, 256
        %s4533 = scalar_lea.vmem [#allocation15], %s4532
        // Predicated region
        $region81: #{tpu_custom_call.1} parent=47 // pred_check
          %p4534 = pneg %p216
        $region82: #{tpu_custom_call.1} parent=47 // pred_check_branch
          %4536 = sbr.rel (%p4534) target = $region84
        $region83: #{tpu_custom_call.1} parent=47 // pred_region
          %s4537 = smul.u32 4, %s31
          %s4539 = ssub.s32 4096, 4096
          %4540 = vsyncadd %s4530, %s4539
          %s4541 = smul.addr %s4537, 8
          %s4542 = smul.addr %s4541, 128
          %s4543 = scalar_lea.hbm %s7, %s4542
          %s4544 = sshll.u32 %s4533, 4
          %s4545 = int_to_ptr.vmem [resolvable:$true] %s4544
          %4550 = dma.vmem_to_hbm [thread:$0]  %s4545, 4096, %s4543, %s4530, 128, 128, 8
        $region84: #{tpu_custom_call.1} parent=47 // pred_fallthru
          _
      $region48: #{tpu_custom_call.1} parent=5 // pred_fallthru
        _
      %p4551 = scmp.le.s32.totalorder 2, %s22
      // Predicated region
      $region85: #{tpu_custom_call.1} parent=5 // pred_check
        %p4552 = pneg %p4551
      $region86: #{tpu_custom_call.1} parent=5 // pred_check_branch
        %4554 = sbr.rel (%p4552) target = $region88
      $region87: #{tpu_custom_call.1} parent=5 // pred_region
        %s4555 = ssub.s32 %s22, 2
        // Predicated region
        $region89: #{tpu_custom_call.1} parent=87 // pred_check
          %p4556 = pneg %p222
        $region90: #{tpu_custom_call.1} parent=87 // pred_check_branch
          %4558 = sbr.rel (%p4556) target = $region92
        $region91: #{tpu_custom_call.1} parent=87 // pred_region
          %s4559 = sand.u32 %s207, 1
          %s4560 = scalar_lea.sflag [#allocation5], %s4559
          %s4561 = sand.u32 %s207, 1
          %s4562 = smul.addr %s4561, 256
          %s4563 = scalar_lea.vmem [#allocation15], %s4562
          %4564 = dma.done %s4560, 4096
        $region92: #{tpu_custom_call.1} parent=87 // pred_fallthru
          _
      $region88: #{tpu_custom_call.1} parent=5 // pred_fallthru
        _
    $region6: #{tpu_custom_call.1} parent=1 // loop_footer
      %s26 = sadd.s32 1, %s22
    $region7: #{tpu_custom_call.1} parent=1 // loop_footer_branch
      %21 = sbr.rel target = $region3
    $region8: #{tpu_custom_call.1} parent=1 // loop_exit
      _
    %4565 = vsyncpa [#allocation4], 1
    %s4566 = scalar_lea.sflag [#allocation4], 1
    %4567 = vsyncpa %s4566, 1
    %4568 = vsyncpa [#allocation7], 1
    %4569 = vsyncpa [#allocation10], 1
    %4570 = vsyncpa [#allocation13], 1
    %4571 = vsyncpa [#allocation5], 1
    %s4572 = scalar_lea.sflag [#allocation5], 1
    %4573 = vsyncpa %s4572, 1

</llo_original>
